<compile_context>
chip_gen: v6e
topology: v6e:2x2x1
jax: 0.10.0
libtpu: 0.0.40
codegen_flags: <defaults>
</compile_context>

<pallas_src>
import jax
import jax.numpy as jnp
from jax.experimental import pallas as pl
from jax.experimental.pallas import tpu as pltpu

INPUT_SIZE = 100   # fixed by the module: nn.GRU(100, hidden_size)
HIDDEN_SIZE = 32
OUTPUT_SIZE = 64
LANE = 128         # vreg lane width; every gate/feature block is padded to this

_PREC = jax.lax.Precision.HIGHEST  # exact-f32 MXU path (parity with reference)


def _decoder_kernel(x_ref, h0_ref, w_ref, b_ref, wo_ref, bo_ref,
                    out_ref, h_ref):
    """GRU cell step + output Linear, one grid step = one decode step.

    x_ref:  (1, 1, 128)  padded input row for this step (streamed per step)
    h0_ref: (1, 128)     padded initial hidden state (resident)
    w_ref:  (256, 512)   fused gate weights: rows 0:128 multiply x_pad,
                         rows 128:256 multiply h_pad; column blocks of 128
                         lanes are [r_sum | z_sum | i_n | h_n]
    b_ref:  (1, 512)     fused gate biases  [b_r_sum | b_z_sum | b_in | b_hn]
    wo_ref: (128, 128)   padded output Linear weights (rows 0:H, cols 0:O)
    bo_ref: (1, 128)     padded output Linear bias
    out_ref:(1, 1, 128)  padded per-step output (streamed per step)
    h_ref:  (1, 128)     hidden-state carry / final hidden (resident)
    """
    t = pl.program_id(0)

    @pl.when(t == 0)
    def _():
        h_ref[...] = h0_ref[...]

    x = x_ref[0]            # (1, 128)
    h = h_ref[...]          # (1, 128)
    xh = jnp.concatenate([x, h], axis=-1)   # (1, 256) — single fused operand

    # Single MXU pass for all gate pre-activations.
    g = jnp.dot(xh, w_ref[...], precision=_PREC,
                preferred_element_type=jnp.float32) + b_ref[...]

    # All slices are 128-lane (vreg) aligned -> zero-cost views.
    g_r = g[:, 0 * LANE:1 * LANE]
    g_z = g[:, 1 * LANE:2 * LANE]
    g_in = g[:, 2 * LANE:3 * LANE]
    g_hn = g[:, 3 * LANE:4 * LANE]

    r = jax.nn.sigmoid(g_r)
    z = jax.nn.sigmoid(g_z)
    n = jnp.tanh(g_in + r * g_hn)           # PyTorch: tanh(i_n + r*(h_n + b_hn))
    h_new = (1.0 - z) * n + z * h

    h_ref[...] = h_new
    out_ref[0] = (jnp.dot(h_new, wo_ref[...], precision=_PREC,
                          preferred_element_type=jnp.float32)
                  + bo_ref[...])


def prepare_fused_params(params):
    """Build the 128-lane-aligned fused operands from nn.GRU/nn.Linear params.

    params hold the transposed PyTorch tensors:
      w_ih (100, 3H), w_hh (H, 3H), b_ih (1, 3H), b_hh (1, 3H)  [gate order r,z,n]
      w_out (H, O), b_out (1, O)
    """
    H = params["w_hh"].shape[0]
    O = params["w_out"].shape[1]
    assert INPUT_SIZE <= LANE and H <= LANE and O <= LANE

    w_ih, w_hh = params["w_ih"], params["w_hh"]
    b_ih, b_hh = params["b_ih"], params["b_hh"]

    W = jnp.zeros((2 * LANE, 4 * LANE), jnp.float32)
    # r gate (input + hidden contributions sum directly) -> lanes 0:128
    W = W.at[0:INPUT_SIZE, 0:H].set(w_ih[:, 0:H])
    W = W.at[LANE:LANE + H, 0:H].set(w_hh[:, 0:H])
    # z gate -> lanes 128:256
    W = W.at[0:INPUT_SIZE, LANE:LANE + H].set(w_ih[:, H:2 * H])
    W = W.at[LANE:LANE + H, LANE:LANE + H].set(w_hh[:, H:2 * H])
    # i_n (input only) -> lanes 256:384
    W = W.at[0:INPUT_SIZE, 2 * LANE:2 * LANE + H].set(w_ih[:, 2 * H:3 * H])
    # h_n (hidden only, gets multiplied by r) -> lanes 384:512
    W = W.at[LANE:LANE + H, 3 * LANE:3 * LANE + H].set(w_hh[:, 2 * H:3 * H])

    b = jnp.zeros((1, 4 * LANE), jnp.float32)
    b = b.at[:, 0:H].set(b_ih[:, 0:H] + b_hh[:, 0:H])                    # b_r sum
    b = b.at[:, LANE:LANE + H].set(b_ih[:, H:2 * H] + b_hh[:, H:2 * H])  # b_z sum
    b = b.at[:, 2 * LANE:2 * LANE + H].set(b_ih[:, 2 * H:3 * H])         # b_in
    b = b.at[:, 3 * LANE:3 * LANE + H].set(b_hh[:, 2 * H:3 * H])         # b_hn

    Wo = jnp.zeros((LANE, LANE), jnp.float32).at[0:H, 0:O].set(params["w_out"])
    bo = jnp.zeros((1, LANE), jnp.float32).at[:, 0:O].set(params["b_out"])

    return {"w_fused": W, "b_fused": b, "w_out": Wo, "b_out": bo,
            "hidden_size": H, "output_size": O}


def _decode_call(x_seq_pad, h0_pad, fused):
    """T decode steps in one pallas_call; weights stay resident in VMEM."""
    T = x_seq_pad.shape[0]
    grid_spec = pltpu.PrefetchScalarGridSpec(
        num_scalar_prefetch=0,
        grid=(T,),
        in_specs=[
            pl.BlockSpec((1, 1, LANE), lambda t: (t, 0, 0)),      # x: streamed
            pl.BlockSpec((1, LANE), lambda t: (0, 0)),            # h0: resident
            pl.BlockSpec((2 * LANE, 4 * LANE), lambda t: (0, 0)),  # W_fused
            pl.BlockSpec((1, 4 * LANE), lambda t: (0, 0)),         # b_fused
            pl.BlockSpec((LANE, LANE), lambda t: (0, 0)),          # W_out
            pl.BlockSpec((1, LANE), lambda t: (0, 0)),             # b_out
        ],
        out_specs=(
            pl.BlockSpec((1, 1, LANE), lambda t: (t, 0, 0)),      # out: streamed
            pl.BlockSpec((1, LANE), lambda t: (0, 0)),            # hidden carry
        ),
    )
    out_pad, h_pad = pl.pallas_call(
        _decoder_kernel,
        grid_spec=grid_spec,
        out_shape=(
            jax.ShapeDtypeStruct((T, 1, LANE), jnp.float32),
            jax.ShapeDtypeStruct((1, LANE), jnp.float32),
        ),
        compiler_params=pltpu.CompilerParams(
            dimension_semantics=("arbitrary",)),  # sequential hidden carry
    )(x_seq_pad, h0_pad, fused["w_fused"], fused["b_fused"],
      fused["w_out"], fused["b_out"])
    return out_pad, h_pad


def decoder_rnn_decode(inputs, hidden, params, fused=None):
    """Run T GRU+Linear decode steps (inputs: (T, 100)) in one kernel launch."""
    if fused is None:
        fused = prepare_fused_params(params)
    H, O = fused["hidden_size"], fused["output_size"]
    inputs = inputs.reshape(-1, INPUT_SIZE).astype(jnp.float32)
    T = inputs.shape[0]

    x_pad = jnp.zeros((T, 1, LANE), jnp.float32).at[:, 0, :INPUT_SIZE].set(inputs)
    h_pad = jnp.zeros((1, LANE), jnp.float32).at[:, :H].set(
        hidden.reshape(1, H).astype(jnp.float32))

    out_pad, h_pad_new = _decode_call(x_pad, h_pad, fused)
    outs = out_pad[:, 0, :O]                      # (T, O)
    h_new = h_pad_new[:, :H].reshape(1, 1, H)     # (1, 1, H)
    return outs, h_new


def decoder_rnn_forward(inp, hidden, params, fused=None):
    """JAX equivalent of DecoderRNN.forward(input, hidden) — one step."""
    if fused is None:
        fused = prepare_fused_params(params)
    outs, h_new = decoder_rnn_decode(inp.reshape(1, INPUT_SIZE), hidden,
                                     params, fused=fused)
    return outs.reshape(1, fused["output_size"]), h_new


def init_params(key, hidden_size=HIDDEN_SIZE, output_size=OUTPUT_SIZE):
    """Deterministic synthetic parameters with the nn.GRU / nn.Linear shapes.

    PyTorch stores weight_ih_l0 as (3H, 100) and weight_hh_l0 as (3H, H) in
    gate order (r, z, n); we keep that order but store the transposes so the
    math is x @ W.
    """
    ks = jax.random.split(key, 6)
    H, O = hidden_size, output_size
    scale = 0.1
    return {
        "w_ih": scale * jax.random.normal(ks[0], (INPUT_SIZE, 3 * H), jnp.float32),
        "w_hh": scale * jax.random.normal(ks[1], (H, 3 * H), jnp.float32),
        "b_ih": scale * jax.random.normal(ks[2], (1, 3 * H), jnp.float32),
        "b_hh": scale * jax.random.normal(ks[3], (1, 3 * H), jnp.float32),
        "w_out": scale * jax.random.normal(ks[4], (H, O), jnp.float32),
        "b_out": scale * jax.random.normal(ks[5], (1, O), jnp.float32),
    }


def _reference_forward(inp, hidden, params):
    """Pure-JAX reference of one GRU step + Linear (PyTorch gate formula)."""
    H = params["w_hh"].shape[0]
    x = inp.reshape(1, INPUT_SIZE).astype(jnp.float32)
    h = hidden.reshape(1, H).astype(jnp.float32)
    gi = jnp.dot(x, params["w_ih"], precision=_PREC) + params["b_ih"]
    gh = jnp.dot(h, params["w_hh"], precision=_PREC) + params["b_hh"]
    i_r, i_z, i_n = gi[:, :H], gi[:, H:2 * H], gi[:, 2 * H:]
    h_r, h_z, h_n = gh[:, :H], gh[:, H:2 * H], gh[:, 2 * H:]
    r = jax.nn.sigmoid(i_r + h_r)
    z = jax.nn.sigmoid(i_z + h_z)
    n = jnp.tanh(i_n + r * h_n)
    h_new = (1.0 - z) * n + z * h
    out = jnp.dot(h_new, params["w_out"], precision=_PREC) + params["b_out"]
    return out, h_new.reshape(1, 1, H)


if __name__ == "__main__":
    key = jax.random.PRNGKey(0)
    k_param, k_in, k_hid, k_seq = jax.random.split(key, 4)

    params = init_params(k_param)
    fused = prepare_fused_params(params)

    # --- Single step: exact module semantics -------------------------------
    inp = jax.random.normal(k_in, (INPUT_SIZE,), jnp.float32)
    hidden = jax.random.normal(k_hid, (1, 1, HIDDEN_SIZE), jnp.float32)

    out, h_new = decoder_rnn_forward(inp, hidden, params, fused=fused)
    out, h_new = jax.block_until_ready((out, h_new))

    ref_out, ref_h = _reference_forward(inp, hidden, params)
    assert out.shape == (1, OUTPUT_SIZE)
    assert h_new.shape == (1, 1, HIDDEN_SIZE)
    assert jnp.allclose(out, ref_out, atol=1e-4, rtol=1e-4)
    assert jnp.allclose(h_new, ref_h, atol=1e-4, rtol=1e-4)

    # --- Multi-step decode: T steps amortized in one pallas_call ------------
    T = 8
    inputs = jax.random.normal(k_seq, (T, INPUT_SIZE), jnp.float32)
    outs, h_T = decoder_rnn_decode(inputs, hidden, params, fused=fused)
    outs, h_T = jax.block_until_ready((outs, h_T))

    h_ref = hidden
    ref_outs = []
    for t in range(T):
        o, h_ref = _reference_forward(inputs[t], h_ref, params)
        ref_outs.append(o[0])
    ref_outs = jnp.stack(ref_outs)

    assert outs.shape == (T, OUTPUT_SIZE)
    assert h_T.shape == (1, 1, HIDDEN_SIZE)
    assert jnp.allclose(outs, ref_outs, atol=1e-4, rtol=1e-4)
    assert jnp.allclose(h_T, h_ref, atol=1e-4, rtol=1e-4)

    print("KERNEL_OK")
</pallas_src>

<mosaic_0001>
module attributes {stable_mosaic.version = 11 : i64} {
  func.func @_decoder_kernel(%arg0: i32, %arg1: memref<1x1x128xf32, #tpu.memory_space<vmem>>, %arg2: memref<1x128xf32, #tpu.memory_space<vmem>>, %arg3: memref<256x512xf32, #tpu.memory_space<vmem>>, %arg4: memref<1x512xf32, #tpu.memory_space<vmem>>, %arg5: memref<128x128xf32, #tpu.memory_space<vmem>>, %arg6: memref<1x128xf32, #tpu.memory_space<vmem>>, %arg7: memref<1x1x128xf32, #tpu.memory_space<vmem>>, %arg8: memref<1x128xf32, #tpu.memory_space<vmem>>) attributes {dimension_semantics = [#tpu.dimension_semantics<arbitrary>], iteration_bounds = array<i64: 1>, scalar_prefetch = 0 : i64, scratch_operands = 0 : i64, tpu.core_type = #tpu.core_type<tc>, window_params = [{transform_indices = @transform_0, window_bounds = array<i64: 1, 1, 128>}, {pipeline_mode = #tpu.pipeline_mode<synchronous>, transform_indices = @transform_1, window_bounds = array<i64: 1, 128>}, {pipeline_mode = #tpu.pipeline_mode<synchronous>, transform_indices = @transform_2, window_bounds = array<i64: 256, 512>}, {pipeline_mode = #tpu.pipeline_mode<synchronous>, transform_indices = @transform_3, window_bounds = array<i64: 1, 512>}, {pipeline_mode = #tpu.pipeline_mode<synchronous>, transform_indices = @transform_4, window_bounds = array<i64: 128, 128>}, {pipeline_mode = #tpu.pipeline_mode<synchronous>, transform_indices = @transform_5, window_bounds = array<i64: 1, 128>}, {transform_indices = @transform_6, window_bounds = array<i64: 1, 1, 128>}, {pipeline_mode = #tpu.pipeline_mode<synchronous>, transform_indices = @transform_7, window_bounds = array<i64: 1, 128>}]} {
    %c0_i32 = arith.constant 0 : i32
    %0 = arith.cmpi eq, %arg0, %c0_i32 : i32
    %1 = arith.extui %0 : i1 to i32
    %c0_i32_0 = arith.constant 0 : i32
    %2 = arith.cmpi ne, %1, %c0_i32_0 : i32
    scf.if %2 {
      %c0_22 = arith.constant 0 : index
      %c0_23 = arith.constant 0 : index
      %41 = vector.load %arg2[%c0_22, %c0_23] : memref<1x128xf32, #tpu.memory_space<vmem>>, vector<1x128xf32>
      %c0_24 = arith.constant 0 : index
      %c0_25 = arith.constant 0 : index
      %42 = vector.load %arg8[%c0_24, %c0_25] : memref<1x128xf32, #tpu.memory_space<vmem>>, vector<1x128xf32>
      tpu.vector_store %arg8[%c0_24, %c0_25], %41 {strides = array<i32>} : memref<1x128xf32, #tpu.memory_space<vmem>>, vector<1x128xf32>,
    } else {
    }
    %c0 = arith.constant 0 : index
    %c0_1 = arith.constant 0 : index
    %c0_2 = arith.constant 0 : index
    %3 = vector.load %arg1[%c0, %c0_1, %c0_2] : memref<1x1x128xf32, #tpu.memory_space<vmem>>, vector<1x1x128xf32>
    %4 = vector.shape_cast %3 : vector<1x1x128xf32> to vector<1x128xf32>
    %c0_3 = arith.constant 0 : index
    %c0_4 = arith.constant 0 : index
    %5 = vector.load %arg8[%c0_3, %c0_4] : memref<1x128xf32, #tpu.memory_space<vmem>>, vector<1x128xf32>
    %6 = tpu.concatenate %4, %5 in 1 : vector<1x128xf32>, vector<1x128xf32> -> vector<1x256xf32>
    %c0_5 = arith.constant 0 : index
    %c0_6 = arith.constant 0 : index
    %7 = vector.load %arg3[%c0_5, %c0_6] : memref<256x512xf32, #tpu.memory_space<vmem>>, vector<256x512xf32>
    %cst = arith.constant dense<0.000000e+00> : vector<1x512xf32>
    %8 = tpu.matmul %6, %7, %cst {dimension_numbers = #tpu.dot_dimension_numbers<[1], [0], [0], [1], [0, 0, 1, 1], [], []>, precision = #tpu.contract_precision<fp32>} : vector<1x256xf32>, vector<256x512xf32>, vector<1x512xf32> -> vector<1x512xf32>
    %c0_7 = arith.constant 0 : index
    %c0_8 = arith.constant 0 : index
    %9 = vector.load %arg4[%c0_7, %c0_8] : memref<1x512xf32, #tpu.memory_space<vmem>>, vector<1x512xf32>
    %10 = arith.addf %8, %9 : vector<1x512xf32>
    %11 = vector.extract_strided_slice %10 {offsets = [0, 0], sizes = [1, 128], strides = [1, 1]} : vector<1x512xf32> to vector<1x128xf32>
    %12 = vector.extract_strided_slice %10 {offsets = [0, 128], sizes = [1, 128], strides = [1, 1]} : vector<1x512xf32> to vector<1x128xf32>
    %13 = vector.extract_strided_slice %10 {offsets = [0, 256], sizes = [1, 128], strides = [1, 1]} : vector<1x512xf32> to vector<1x128xf32>
    %14 = vector.extract_strided_slice %10 {offsets = [0, 384], sizes = [1, 128], strides = [1, 1]} : vector<1x512xf32> to vector<1x128xf32>
    %15 = arith.negf %11 : vector<1x128xf32>
    %16 = math.exp %15 : vector<1x128xf32>
    %cst_9 = arith.constant 1.000000e+00 : f32
    %17 = vector.broadcast %cst_9 : f32 to vector<1x128xf32>
    %18 = arith.addf %17, %16 : vector<1x128xf32>
    %19 = arith.divf %17, %18 : vector<1x128xf32>
    %20 = arith.negf %12 : vector<1x128xf32>
    %21 = math.exp %20 : vector<1x128xf32>
    %cst_10 = arith.constant 1.000000e+00 : f32
    %22 = vector.broadcast %cst_10 : f32 to vector<1x128xf32>
    %23 = arith.addf %22, %21 : vector<1x128xf32>
    %24 = arith.divf %22, %23 : vector<1x128xf32>
    %25 = arith.mulf %19, %14 : vector<1x128xf32>
    %26 = arith.addf %13, %25 : vector<1x128xf32>
    %27 = math.tanh %26 : vector<1x128xf32>
    %cst_11 = arith.constant 1.000000e+00 : f32
    %28 = vector.broadcast %cst_11 : f32 to vector<1x128xf32>
    %29 = arith.subf %28, %24 : vector<1x128xf32>
    %30 = arith.mulf %29, %27 : vector<1x128xf32>
    %31 = arith.mulf %24, %5 : vector<1x128xf32>
    %32 = arith.addf %30, %31 : vector<1x128xf32>
    %c0_12 = arith.constant 0 : index
    %c0_13 = arith.constant 0 : index
    %33 = vector.load %arg8[%c0_12, %c0_13] : memref<1x128xf32, #tpu.memory_space<vmem>>, vector<1x128xf32>
    tpu.vector_store %arg8[%c0_12, %c0_13], %32 {strides = array<i32>} : memref<1x128xf32, #tpu.memory_space<vmem>>, vector<1x128xf32>,
    %c0_14 = arith.constant 0 : index
    %c0_15 = arith.constant 0 : index
    %34 = vector.load %arg5[%c0_14, %c0_15] : memref<128x128xf32, #tpu.memory_space<vmem>>, vector<128x128xf32>
    %cst_16 = arith.constant dense<0.000000e+00> : vector<1x128xf32>
    %35 = tpu.matmul %32, %34, %cst_16 {dimension_numbers = #tpu.dot_dimension_numbers<[1], [0], [0], [1], [0, 0, 1, 1], [], []>, precision = #tpu.contract_precision<fp32>} : vector<1x128xf32>, vector<128x128xf32>, vector<1x128xf32> -> vector<1x128xf32>
    %c0_17 = arith.constant 0 : index
    %c0_18 = arith.constant 0 : index
    %36 = vector.load %arg6[%c0_17, %c0_18] : memref<1x128xf32, #tpu.memory_space<vmem>>, vector<1x128xf32>
    %37 = arith.addf %35, %36 : vector<1x128xf32>
    %c0_19 = arith.constant 0 : index
    %c0_20 = arith.constant 0 : index
    %c0_21 = arith.constant 0 : index
    %38 = vector.load %arg7[%c0_19, %c0_20, %c0_21] : memref<1x1x128xf32, #tpu.memory_space<vmem>>, vector<1x1x128xf32>
    %39 = vector.shape_cast %38 : vector<1x1x128xf32> to vector<1x128xf32>
    %40 = vector.shape_cast %37 : vector<1x128xf32> to vector<1x1x128xf32>
    tpu.vector_store %arg7[%c0_19, %c0_20, %c0_21], %40 {strides = array<i32>} : memref<1x1x128xf32, #tpu.memory_space<vmem>>, vector<1x1x128xf32>,
    return
  }
  func.func @transform_0(%arg0: i32) -> (i32, i32, i32) {
    %c0_i32 = arith.constant 0 : i32
    %c0_i32_0 = arith.constant 0 : i32
    %c0_i32_1 = arith.constant 0 : i32
    return %arg0, %c0_i32, %c0_i32_0 : i32, i32, i32
  }
  func.func @transform_1(%arg0: i32) -> (i32, i32) {
    %c0_i32 = arith.constant 0 : i32
    %c0_i32_0 = arith.constant 0 : i32
    %c0_i32_1 = arith.constant 0 : i32
    return %c0_i32, %c0_i32_0 : i32, i32
  }
  func.func @transform_2(%arg0: i32) -> (i32, i32) {
    %c0_i32 = arith.constant 0 : i32
    %c0_i32_0 = arith.constant 0 : i32
    %c0_i32_1 = arith.constant 0 : i32
    return %c0_i32, %c0_i32_0 : i32, i32
  }
  func.func @transform_3(%arg0: i32) -> (i32, i32) {
    %c0_i32 = arith.constant 0 : i32
    %c0_i32_0 = arith.constant 0 : i32
    %c0_i32_1 = arith.constant 0 : i32
    return %c0_i32, %c0_i32_0 : i32, i32
  }
  func.func @transform_4(%arg0: i32) -> (i32, i32) {
    %c0_i32 = arith.constant 0 : i32
    %c0_i32_0 = arith.constant 0 : i32
    %c0_i32_1 = arith.constant 0 : i32
    return %c0_i32, %c0_i32_0 : i32, i32
  }
  func.func @transform_5(%arg0: i32) -> (i32, i32) {
    %c0_i32 = arith.constant 0 : i32
    %c0_i32_0 = arith.constant 0 : i32
    %c0_i32_1 = arith.constant 0 : i32
    return %c0_i32, %c0_i32_0 : i32, i32
  }
  func.func @transform_6(%arg0: i32) -> (i32, i32, i32) {
    %c0_i32 = arith.constant 0 : i32
    %c0_i32_0 = arith.constant 0 : i32
    %c0_i32_1 = arith.constant 0 : i32
    return %arg0, %c0_i32, %c0_i32_0 : i32, i32, i32
  }
  func.func @transform_7(%arg0: i32) -> (i32, i32) {
    %c0_i32 = arith.constant 0 : i32
    %c0_i32_0 = arith.constant 0 : i32
    %c0_i32_1 = arith.constant 0 : i32
    return %c0_i32, %c0_i32_0 : i32, i32
  }
}

</mosaic_0001>

<llo_original>
// kernel: tpu_custom_call.1
$region0: #{tpu_custom_call.1}
  #allocation0 [shape = 'u32[]', space=smem, size = 0x4, offset = 0x4, fixed_abs, tag = 'smem constant byte address 0x4 - core index']
  #allocation1 [shape = 'u32[144,128]{1,0:T(1,128)}', space=vmem, size = 0x12000, scoped, tag = 'internal scratch']
  %s0 = inlined_call_operand.hbm [shape: f32[1,1,128], index: 0, kind: input, shape index: {}]
  %s1 = inlined_call_operand.vmem [shape: f32[1,128], index: 1, kind: input, shape index: {}]
  %s2 = inlined_call_operand.hbm [shape: f32[256,512], index: 2, kind: input, shape index: {}]
  %s3 = inlined_call_operand.vmem [shape: f32[1,512], index: 3, kind: input, shape index: {}]
  %s4 = inlined_call_operand.hbm [shape: f32[128,128], index: 4, kind: input, shape index: {}]
  %s5 = inlined_call_operand.vmem [shape: f32[1,128], index: 5, kind: input, shape index: {}]
  %s6 = inlined_call_operand.hbm [shape: f32[1,1,128], index: 6, kind: output, shape index: {0}]
  %s7 = inlined_call_operand.hbm [shape: f32[1,128], index: 7, kind: output, shape index: {1}]
  %8 = xla_tuple %s6, %s7
  %s9 = sld [smem:[#allocation0]]
  $region58: #{tpu_custom_call.1} parent=0
    _
  %s11 = ssub.s32 1, %s9
  %s12 = scalar_select 0, %s11, %s9
  $region1: #{tpu_custom_call.1} parent=0
    #allocation2 [shape = 'u8[512]{0}', space=vmem, size = 0x400, scoped, tag = 'input window, operand 0, single buffered']
    #allocation3 [shape = 's32[1]{0}', space=sflag, size = 0x4, scoped, tag = 'scoped memory for tpu_custom_call.1']
    #allocation4 [shape = 's32[1]{0}', space=sflag, size = 0x4, scoped, tag = 'scoped memory for tpu_custom_call.1']
    #allocation5 [shape = 'u8[524288]{0}', space=vmem, size = 0x80000, scoped, tag = 'input window, operand 2, single buffered']
    #allocation6 [shape = 's32[1]{0}', space=sflag, size = 0x4, scoped, tag = 'scoped memory for tpu_custom_call.1']
    #allocation7 [shape = 'u8[65536]{0}', space=vmem, size = 0x10000, scoped, tag = 'input window, operand 4, single buffered']
    #allocation8 [shape = 'u8[512]{0}', space=vmem, size = 0x400, scoped, tag = 'output window, operand 0, single buffered']
    #allocation9 [shape = 'u8[512]{0}', space=vmem, size = 0x400, scoped, tag = 'output window, operand 1, single buffered']
    #allocation10 [shape = 's32[1]{0}', space=sflag, size = 0x4, scoped, tag = 'scoped memory for tpu_custom_call.1']
    %13 = vsyncpa [#allocation3], 0
    %14 = vsyncpa [#allocation6], 0
    %15 = vsyncpa [#allocation4], 0
    %16 = vsyncpa [#allocation10], 0
    // Predicated region
    $region2: #{tpu_custom_call.1} parent=1 // pred_check
      _
    $region3: #{tpu_custom_call.1} parent=1 // pred_check_branch
      %18 = sbr.rel (0) target = $region5
    $region4: #{tpu_custom_call.1} parent=1 // pred_region
      %s20 = ssub.s32 16, 16
      %21 = vsyncadd [#allocation3], %s20
      %s23 = sshll.u32 [#allocation2], 4
      %s24 = int_to_ptr.vmem [resolvable:$true] %s23
      %26 = dma.hbm_to_vmem [thread:$0]  %s0, 16, %s24, [#allocation3]
    $region5: #{tpu_custom_call.1} parent=1 // pred_fallthru
      _
    // Predicated region
    $region6: #{tpu_custom_call.1} parent=1 // pred_check
      _
    $region7: #{tpu_custom_call.1} parent=1 // pred_check_branch
      %28 = sbr.rel (0) target = $region9
    $region8: #{tpu_custom_call.1} parent=1 // pred_region
      _
    $region9: #{tpu_custom_call.1} parent=1 // pred_fallthru
      _
    // Predicated region
    $region10: #{tpu_custom_call.1} parent=1 // pred_check
      _
    $region11: #{tpu_custom_call.1} parent=1 // pred_check_branch
      %30 = sbr.rel (0) target = $region13
    $region12: #{tpu_custom_call.1} parent=1 // pred_region
      %s32 = ssub.s32 16384, 16384
      %33 = vsyncadd [#allocation6], %s32
      %s34 = sshll.u32 [#allocation5], 4
      %s35 = int_to_ptr.vmem [resolvable:$true] %s34
      %40 = dma.hbm_to_vmem [thread:$0]  %s2, 16384, %s35, [#allocation6], 512, 512, 32
    $region13: #{tpu_custom_call.1} parent=1 // pred_fallthru
      _
    // Predicated region
    $region14: #{tpu_custom_call.1} parent=1 // pred_check
      _
    $region15: #{tpu_custom_call.1} parent=1 // pred_check_branch
      %42 = sbr.rel (0) target = $region17
    $region16: #{tpu_custom_call.1} parent=1 // pred_region
      _
    $region17: #{tpu_custom_call.1} parent=1 // pred_fallthru
      _
    // Predicated region
    $region18: #{tpu_custom_call.1} parent=1 // pred_check
      _
    $region19: #{tpu_custom_call.1} parent=1 // pred_check_branch
      %44 = sbr.rel (0) target = $region21
    $region20: #{tpu_custom_call.1} parent=1 // pred_region
      %s46 = ssub.s32 2048, 2048
      %47 = vsyncadd [#allocation6], %s46
      %s48 = sshll.u32 [#allocation7], 4
      %s49 = int_to_ptr.vmem [resolvable:$true] %s48
      %54 = dma.hbm_to_vmem [thread:$0]  %s4, 2048, %s49, [#allocation6], 128, 128, 8
    $region21: #{tpu_custom_call.1} parent=1 // pred_fallthru
      _
    // Predicated region
    $region22: #{tpu_custom_call.1} parent=1 // pred_check
      _
    $region23: #{tpu_custom_call.1} parent=1 // pred_check_branch
      %56 = sbr.rel (0) target = $region25
    $region24: #{tpu_custom_call.1} parent=1 // pred_region
      _
    $region25: #{tpu_custom_call.1} parent=1 // pred_fallthru
      _
    // Predicated region
    $region26: #{tpu_custom_call.1} parent=1 // pred_check
      _
    $region27: #{tpu_custom_call.1} parent=1 // pred_check_branch
      %58 = sbr.rel (0) target = $region29
    $region28: #{tpu_custom_call.1} parent=1 // pred_region
      %59 = dma.done [#allocation3], 16
    $region29: #{tpu_custom_call.1} parent=1 // pred_fallthru
      _
    // Predicated region
    $region30: #{tpu_custom_call.1} parent=1 // pred_check
      _
    $region31: #{tpu_custom_call.1} parent=1 // pred_check_branch
      %61 = sbr.rel (0) target = $region33
    $region32: #{tpu_custom_call.1} parent=1 // pred_region
      %62 = dma.done [#allocation6], 16384
    $region33: #{tpu_custom_call.1} parent=1 // pred_fallthru
      _
    // Predicated region
    $region34: #{tpu_custom_call.1} parent=1 // pred_check
      _
    $region35: #{tpu_custom_call.1} parent=1 // pred_check_branch
      %64 = sbr.rel (0) target = $region37
    $region36: #{tpu_custom_call.1} parent=1 // pred_region
      %65 = dma.done [#allocation6], 2048
    $region37: #{tpu_custom_call.1} parent=1 // pred_fallthru
      _
    %p66 = scmp.eq.s32.totalorder 0, 0
    // Predicated region
    $region38: #{tpu_custom_call.1} parent=1 // pred_check
      %p67 = pneg %p66
    $region39: #{tpu_custom_call.1} parent=1 // pred_check_branch
      %69 = sbr.rel (%p67) target = $region41
    $region40: #{tpu_custom_call.1} parent=1 // pred_region
      %v70 = vld [vmem:[%s1] sm:$0x1]
      %71 = vst [vmem:[#allocation9] sm:$0x1] %v70
    $region41: #{tpu_custom_call.1} parent=1 // pred_fallthru
      _
    %v72 = vld [vmem:[#allocation2] sm:$0x1]
    %v73 = vld [vmem:[#allocation9] sm:$0x1]
    %v74 = vld [vmem:[#allocation5] sm:$0xff]
    %v75 = vld [vmem:[#allocation5 + $0x8] sm:$0xff]
    %v76 = vld [vmem:[#allocation5 + $0x10] sm:$0xff]
    %v77 = vld [vmem:[#allocation5 + $0x18] sm:$0xff]
    %v78 = vld [vmem:[#allocation5 + $0x20] sm:$0xff]
    %v79 = vld [vmem:[#allocation5 + $0x28] sm:$0xff]
    %v80 = vld [vmem:[#allocation5 + $0x30] sm:$0xff]
    %v81 = vld [vmem:[#allocation5 + $0x38] sm:$0xff]
    %v82 = vld [vmem:[#allocation5 + $0x40] sm:$0xff]
    %v83 = vld [vmem:[#allocation5 + $0x48] sm:$0xff]
    %v84 = vld [vmem:[#allocation5 + $0x50] sm:$0xff]
    %v85 = vld [vmem:[#allocation5 + $0x58] sm:$0xff]
    %v86 = vld [vmem:[#allocation5 + $0x60] sm:$0xff]
    %v87 = vld [vmem:[#allocation5 + $0x68] sm:$0xff]
    %v88 = vld [vmem:[#allocation5 + $0x70] sm:$0xff]
    %v89 = vld [vmem:[#allocation5 + $0x78] sm:$0xff]
    %v90 = vld [vmem:[#allocation5 + $0x80] sm:$0xff]
    %v91 = vld [vmem:[#allocation5 + $0x88] sm:$0xff]
    %v92 = vld [vmem:[#allocation5 + $0x90] sm:$0xff]
    %v93 = vld [vmem:[#allocation5 + $0x98] sm:$0xff]
    %v94 = vld [vmem:[#allocation5 + $0xa0] sm:$0xff]
    %v95 = vld [vmem:[#allocation5 + $0xa8] sm:$0xff]
    %v96 = vld [vmem:[#allocation5 + $0xb0] sm:$0xff]
    %v97 = vld [vmem:[#allocation5 + $0xb8] sm:$0xff]
    %v98 = vld [vmem:[#allocation5 + $0xc0] sm:$0xff]
    %v99 = vld [vmem:[#allocation5 + $0xc8] sm:$0xff]
    %v100 = vld [vmem:[#allocation5 + $0xd0] sm:$0xff]
    %v101 = vld [vmem:[#allocation5 + $0xd8] sm:$0xff]
    %v102 = vld [vmem:[#allocation5 + $0xe0] sm:$0xff]
    %v103 = vld [vmem:[#allocation5 + $0xe8] sm:$0xff]
    %v104 = vld [vmem:[#allocation5 + $0xf0] sm:$0xff]
    %v105 = vld [vmem:[#allocation5 + $0xf8] sm:$0xff]
    %v106 = vld [vmem:[#allocation5 + $0x100] sm:$0xff]
    %v107 = vld [vmem:[#allocation5 + $0x108] sm:$0xff]
    %v108 = vld [vmem:[#allocation5 + $0x110] sm:$0xff]
    %v109 = vld [vmem:[#allocation5 + $0x118] sm:$0xff]
    %v110 = vld [vmem:[#allocation5 + $0x120] sm:$0xff]
    %v111 = vld [vmem:[#allocation5 + $0x128] sm:$0xff]
    %v112 = vld [vmem:[#allocation5 + $0x130] sm:$0xff]
    %v113 = vld [vmem:[#allocation5 + $0x138] sm:$0xff]
    %v114 = vld [vmem:[#allocation5 + $0x140] sm:$0xff]
    %v115 = vld [vmem:[#allocation5 + $0x148] sm:$0xff]
    %v116 = vld [vmem:[#allocation5 + $0x150] sm:$0xff]
    %v117 = vld [vmem:[#allocation5 + $0x158] sm:$0xff]
    %v118 = vld [vmem:[#allocation5 + $0x160] sm:$0xff]
    %v119 = vld [vmem:[#allocation5 + $0x168] sm:$0xff]
    %v120 = vld [vmem:[#allocation5 + $0x170] sm:$0xff]
    %v121 = vld [vmem:[#allocation5 + $0x178] sm:$0xff]
    %v122 = vld [vmem:[#allocation5 + $0x180] sm:$0xff]
    %v123 = vld [vmem:[#allocation5 + $0x188] sm:$0xff]
    %v124 = vld [vmem:[#allocation5 + $0x190] sm:$0xff]
    %v125 = vld [vmem:[#allocation5 + $0x198] sm:$0xff]
    %v126 = vld [vmem:[#allocation5 + $0x1a0] sm:$0xff]
    %v127 = vld [vmem:[#allocation5 + $0x1a8] sm:$0xff]
    %v128 = vld [vmem:[#allocation5 + $0x1b0] sm:$0xff]
    %v129 = vld [vmem:[#allocation5 + $0x1b8] sm:$0xff]
    %v130 = vld [vmem:[#allocation5 + $0x1c0] sm:$0xff]
    %v131 = vld [vmem:[#allocation5 + $0x1c8] sm:$0xff]
    %v132 = vld [vmem:[#allocation5 + $0x1d0] sm:$0xff]
    %v133 = vld [vmem:[#allocation5 + $0x1d8] sm:$0xff]
    %v134 = vld [vmem:[#allocation5 + $0x1e0] sm:$0xff]
    %v135 = vld [vmem:[#allocation5 + $0x1e8] sm:$0xff]
    %v136 = vld [vmem:[#allocation5 + $0x1f0] sm:$0xff]
    %v137 = vld [vmem:[#allocation5 + $0x1f8] sm:$0xff]
    %v138 = vld [vmem:[#allocation5 + $0x200] sm:$0xff]
    %v139 = vld [vmem:[#allocation5 + $0x208] sm:$0xff]
    %v140 = vld [vmem:[#allocation5 + $0x210] sm:$0xff]
    %v141 = vld [vmem:[#allocation5 + $0x218] sm:$0xff]
    %v142 = vld [vmem:[#allocation5 + $0x220] sm:$0xff]
    %v143 = vld [vmem:[#allocation5 + $0x228] sm:$0xff]
    %v144 = vld [vmem:[#allocation5 + $0x230] sm:$0xff]
    %v145 = vld [vmem:[#allocation5 + $0x238] sm:$0xff]
    %v146 = vld [vmem:[#allocation5 + $0x240] sm:$0xff]
    %v147 = vld [vmem:[#allocation5 + $0x248] sm:$0xff]
    %v148 = vld [vmem:[#allocation5 + $0x250] sm:$0xff]
    %v149 = vld [vmem:[#allocation5 + $0x258] sm:$0xff]
    %v150 = vld [vmem:[#allocation5 + $0x260] sm:$0xff]
    %v151 = vld [vmem:[#allocation5 + $0x268] sm:$0xff]
    %v152 = vld [vmem:[#allocation5 + $0x270] sm:$0xff]
    %v153 = vld [vmem:[#allocation5 + $0x278] sm:$0xff]
    %v154 = vld [vmem:[#allocation5 + $0x280] sm:$0xff]
    %v155 = vld [vmem:[#allocation5 + $0x288] sm:$0xff]
    %v156 = vld [vmem:[#allocation5 + $0x290] sm:$0xff]
    %v157 = vld [vmem:[#allocation5 + $0x298] sm:$0xff]
    %v158 = vld [vmem:[#allocation5 + $0x2a0] sm:$0xff]
    %v159 = vld [vmem:[#allocation5 + $0x2a8] sm:$0xff]
    %v160 = vld [vmem:[#allocation5 + $0x2b0] sm:$0xff]
    %v161 = vld [vmem:[#allocation5 + $0x2b8] sm:$0xff]
    %v162 = vld [vmem:[#allocation5 + $0x2c0] sm:$0xff]
    %v163 = vld [vmem:[#allocation5 + $0x2c8] sm:$0xff]
    %v164 = vld [vmem:[#allocation5 + $0x2d0] sm:$0xff]
    %v165 = vld [vmem:[#allocation5 + $0x2d8] sm:$0xff]
    %v166 = vld [vmem:[#allocation5 + $0x2e0] sm:$0xff]
    %v167 = vld [vmem:[#allocation5 + $0x2e8] sm:$0xff]
    %v168 = vld [vmem:[#allocation5 + $0x2f0] sm:$0xff]
    %v169 = vld [vmem:[#allocation5 + $0x2f8] sm:$0xff]
    %v170 = vld [vmem:[#allocation5 + $0x300] sm:$0xff]
    %v171 = vld [vmem:[#allocation5 + $0x308] sm:$0xff]
    %v172 = vld [vmem:[#allocation5 + $0x310] sm:$0xff]
    %v173 = vld [vmem:[#allocation5 + $0x318] sm:$0xff]
    %v174 = vld [vmem:[#allocation5 + $0x320] sm:$0xff]
    %v175 = vld [vmem:[#allocation5 + $0x328] sm:$0xff]
    %v176 = vld [vmem:[#allocation5 + $0x330] sm:$0xff]
    %v177 = vld [vmem:[#allocation5 + $0x338] sm:$0xff]
    %v178 = vld [vmem:[#allocation5 + $0x340] sm:$0xff]
    %v179 = vld [vmem:[#allocation5 + $0x348] sm:$0xff]
    %v180 = vld [vmem:[#allocation5 + $0x350] sm:$0xff]
    %v181 = vld [vmem:[#allocation5 + $0x358] sm:$0xff]
    %v182 = vld [vmem:[#allocation5 + $0x360] sm:$0xff]
    %v183 = vld [vmem:[#allocation5 + $0x368] sm:$0xff]
    %v184 = vld [vmem:[#allocation5 + $0x370] sm:$0xff]
    %v185 = vld [vmem:[#allocation5 + $0x378] sm:$0xff]
    %v186 = vld [vmem:[#allocation5 + $0x380] sm:$0xff]
    %v187 = vld [vmem:[#allocation5 + $0x388] sm:$0xff]
    %v188 = vld [vmem:[#allocation5 + $0x390] sm:$0xff]
    %v189 = vld [vmem:[#allocation5 + $0x398] sm:$0xff]
    %v190 = vld [vmem:[#allocation5 + $0x3a0] sm:$0xff]
    %v191 = vld [vmem:[#allocation5 + $0x3a8] sm:$0xff]
    %v192 = vld [vmem:[#allocation5 + $0x3b0] sm:$0xff]
    %v193 = vld [vmem:[#allocation5 + $0x3b8] sm:$0xff]
    %v194 = vld [vmem:[#allocation5 + $0x3c0] sm:$0xff]
    %v195 = vld [vmem:[#allocation5 + $0x3c8] sm:$0xff]
    %v196 = vld [vmem:[#allocation5 + $0x3d0] sm:$0xff]
    %v197 = vld [vmem:[#allocation5 + $0x3d8] sm:$0xff]
    %v198 = vld [vmem:[#allocation5 + $0x3e0] sm:$0xff]
    %v199 = vld [vmem:[#allocation5 + $0x3e8] sm:$0xff]
    %v200 = vld [vmem:[#allocation5 + $0x3f0] sm:$0xff]
    %v201 = vld [vmem:[#allocation5 + $0x3f8] sm:$0xff]
    %v202 = vld [vmem:[%s3] sm:$0xf]
    %v204 = vlaneseq
    %v205 = vshrl.u32 %v204, 7
    %v206 = vsub.s32 0, %v205
    %v207 = vrot.slane %v202, %v206
    %v208 = vlaneseq
    %v209 = vshrl.u32 %v208, 7
    %v210 = vsub.s32 1, %v209
    %v211 = vrot.slane %v202, %v210
    %v212 = vlaneseq
    %v213 = vshrl.u32 %v212, 7
    %v214 = vsub.s32 2, %v213
    %v215 = vrot.slane %v202, %v214
    %v216 = vlaneseq
    %v217 = vshrl.u32 %v216, 7
    %v218 = vsub.s32 3, %v217
    %v219 = vrot.slane %v202, %v218
    %v224 = vand.u32 %v135, 4294901760
    %225 = vmatprep.subr.mxu0 %v224
    %v226 = vand.u32 %v134, 4294901760
    %227 = vmatpush1.msra.mxu0 %v226
    %v228 = vand.u32 %v131, 4294901760
    %229 = vmatprep.subr.mxu0 %v228
    %v230 = vand.u32 %v130, 4294901760
    %231 = vmatpush1.msra.mxu0 %v230
    %v232 = vand.u32 %v127, 4294901760
    %233 = vmatprep.subr.mxu0 %v232
    %v234 = vand.u32 %v126, 4294901760
    %235 = vmatpush1.msra.mxu0 %v234
    %v236 = vand.u32 %v123, 4294901760
    %237 = vmatprep.subr.mxu0 %v236
    %v238 = vand.u32 %v122, 4294901760
    %239 = vmatpush1.msra.mxu0 %v238
    %v240 = vand.u32 %v119, 4294901760
    %241 = vmatprep.subr.mxu0 %v240
    %v242 = vand.u32 %v118, 4294901760
    %243 = vmatpush1.msra.mxu0 %v242
    %v244 = vand.u32 %v115, 4294901760
    %245 = vmatprep.subr.mxu0 %v244
    %v246 = vand.u32 %v114, 4294901760
    %247 = vmatpush1.msra.mxu0 %v246
    %v248 = vand.u32 %v111, 4294901760
    %249 = vmatprep.subr.mxu0 %v248
    %v250 = vand.u32 %v110, 4294901760
    %251 = vmatpush1.msra.mxu0 %v250
    %v252 = vand.u32 %v107, 4294901760
    %253 = vmatprep.subr.mxu0 %v252
    %v254 = vand.u32 %v106, 4294901760
    %255 = vmatpush1.msra.mxu0 %v254
    %v256 = vand.u32 %v103, 4294901760
    %257 = vmatprep.subr.mxu0 %v256
    %v258 = vand.u32 %v102, 4294901760
    %259 = vmatpush1.msra.mxu0 %v258
    %v260 = vand.u32 %v99, 4294901760
    %261 = vmatprep.subr.mxu0 %v260
    %v262 = vand.u32 %v98, 4294901760
    %263 = vmatpush1.msra.mxu0 %v262
    %v264 = vand.u32 %v95, 4294901760
    %265 = vmatprep.subr.mxu0 %v264
    %v266 = vand.u32 %v94, 4294901760
    %267 = vmatpush1.msra.mxu0 %v266
    %v268 = vand.u32 %v91, 4294901760
    %269 = vmatprep.subr.mxu0 %v268
    %v270 = vand.u32 %v90, 4294901760
    %271 = vmatpush1.msra.mxu0 %v270
    %v272 = vand.u32 %v87, 4294901760
    %273 = vmatprep.subr.mxu0 %v272
    %v274 = vand.u32 %v86, 4294901760
    %275 = vmatpush1.msra.mxu0 %v274
    %v276 = vand.u32 %v83, 4294901760
    %277 = vmatprep.subr.mxu0 %v276
    %v278 = vand.u32 %v82, 4294901760
    %279 = vmatpush1.msra.mxu0 %v278
    %v280 = vand.u32 %v79, 4294901760
    %281 = vmatprep.subr.mxu0 %v280
    %v282 = vand.u32 %v78, 4294901760
    %283 = vmatpush1.msra.mxu0 %v282
    %v284 = vand.u32 %v75, 4294901760
    %285 = vmatprep.subr.mxu0 %v284
    %v286 = vand.u32 %v74, 4294901760
    %287 = vmatpush1.msra.mxu0 %v286
    %v288 = vand.u32 %v199, 4294901760
    %289 = vmatprep.subr.mxu0 %v288
    %v290 = vand.u32 %v198, 4294901760
    %291 = vmatpush2.msra.mxu0 %v290
    %v292 = vand.u32 %v195, 4294901760
    %293 = vmatprep.subr.mxu0 %v292
    %v294 = vand.u32 %v194, 4294901760
    %295 = vmatpush2.msra.mxu0 %v294
    %v296 = vand.u32 %v191, 4294901760
    %297 = vmatprep.subr.mxu0 %v296
    %v298 = vand.u32 %v190, 4294901760
    %299 = vmatpush2.msra.mxu0 %v298
    %v300 = vand.u32 %v187, 4294901760
    %301 = vmatprep.subr.mxu0 %v300
    %v302 = vand.u32 %v186, 4294901760
    %303 = vmatpush2.msra.mxu0 %v302
    %v304 = vand.u32 %v183, 4294901760
    %305 = vmatprep.subr.mxu0 %v304
    %v306 = vand.u32 %v182, 4294901760
    %307 = vmatpush2.msra.mxu0 %v306
    %v308 = vand.u32 %v179, 4294901760
    %309 = vmatprep.subr.mxu0 %v308
    %v310 = vand.u32 %v178, 4294901760
    %311 = vmatpush2.msra.mxu0 %v310
    %v312 = vand.u32 %v175, 4294901760
    %313 = vmatprep.subr.mxu0 %v312
    %v314 = vand.u32 %v174, 4294901760
    %315 = vmatpush2.msra.mxu0 %v314
    %v316 = vand.u32 %v171, 4294901760
    %317 = vmatprep.subr.mxu0 %v316
    %v318 = vand.u32 %v170, 4294901760
    %319 = vmatpush2.msra.mxu0 %v318
    %v320 = vand.u32 %v167, 4294901760
    %321 = vmatprep.subr.mxu0 %v320
    %v322 = vand.u32 %v166, 4294901760
    %323 = vmatpush2.msra.mxu0 %v322
    %v324 = vand.u32 %v163, 4294901760
    %325 = vmatprep.subr.mxu0 %v324
    %v326 = vand.u32 %v162, 4294901760
    %327 = vmatpush2.msra.mxu0 %v326
    %v328 = vand.u32 %v159, 4294901760
    %329 = vmatprep.subr.mxu0 %v328
    %v330 = vand.u32 %v158, 4294901760
    %331 = vmatpush2.msra.mxu0 %v330
    %v332 = vand.u32 %v155, 4294901760
    %333 = vmatprep.subr.mxu0 %v332
    %v334 = vand.u32 %v154, 4294901760
    %335 = vmatpush2.msra.mxu0 %v334
    %v336 = vand.u32 %v151, 4294901760
    %337 = vmatprep.subr.mxu0 %v336
    %v338 = vand.u32 %v150, 4294901760
    %339 = vmatpush2.msra.mxu0 %v338
    %v340 = vand.u32 %v147, 4294901760
    %341 = vmatprep.subr.mxu0 %v340
    %v342 = vand.u32 %v146, 4294901760
    %343 = vmatpush2.msra.mxu0 %v342
    %v344 = vand.u32 %v143, 4294901760
    %345 = vmatprep.subr.mxu0 %v344
    %v346 = vand.u32 %v142, 4294901760
    %347 = vmatpush2.msra.mxu0 %v346
    %v348 = vand.u32 %v139, 4294901760
    %349 = vmatprep.subr.mxu0 %v348
    %v350 = vand.u32 %v138, 4294901760
    %351 = vmatpush2.msra.mxu0 %v350
    %v352 = vand.u32 %v73, 4294901760
    %v353 = vsub.f32 %v73, %v352
    %v354 = vand.u32 %v353, 4294901760
    %v355 = vsub.f32 %v353, %v354
    %v356 = vand.u32 %v355, 4294901760
    %357 = vmatprep.mubr.f32.mxu0 %v356
    %v358 = vand.u32 %v72, 4294901760
    %v359 = vsub.f32 %v72, %v358
    %v360 = vand.u32 %v359, 4294901760
    %v361 = vsub.f32 %v359, %v360
    %v362 = vand.u32 %v361, 4294901760
    %363 = vmatmul.mubr.f32.gmra.mxu0 %v362
    %v364 = vpop.f32.mrf.mxu0
    %v365 = vadd.f32 %v207, %v364
    %v366 = vpop.f32.mrf.mxu0
    %v367 = vadd.f32 %v211, %v366
    %368 = vdwg.mxu0
    %v369 = vand.u32 %v135, 4294901760
    %v370 = vsub.f32 %v135, %v369
    %v371 = vand.u32 %v370, 4294901760
    %v372 = vsub.f32 %v370, %v371
    %v373 = vand.u32 %v372, 4294901760
    %374 = vmatprep.subr.mxu0 %v373
    %v375 = vand.u32 %v134, 4294901760
    %v376 = vsub.f32 %v134, %v375
    %v377 = vand.u32 %v376, 4294901760
    %v378 = vsub.f32 %v376, %v377
    %v379 = vand.u32 %v378, 4294901760
    %380 = vmatpush1.msra.mxu0 %v379
    %v381 = vand.u32 %v131, 4294901760
    %v382 = vsub.f32 %v131, %v381
    %v383 = vand.u32 %v382, 4294901760
    %v384 = vsub.f32 %v382, %v383
    %v385 = vand.u32 %v384, 4294901760
    %386 = vmatprep.subr.mxu0 %v385
    %v387 = vand.u32 %v130, 4294901760
    %v388 = vsub.f32 %v130, %v387
    %v389 = vand.u32 %v388, 4294901760
    %v390 = vsub.f32 %v388, %v389
    %v391 = vand.u32 %v390, 4294901760
    %392 = vmatpush1.msra.mxu0 %v391
    %v393 = vand.u32 %v127, 4294901760
    %v394 = vsub.f32 %v127, %v393
    %v395 = vand.u32 %v394, 4294901760
    %v396 = vsub.f32 %v394, %v395
    %v397 = vand.u32 %v396, 4294901760
    %398 = vmatprep.subr.mxu0 %v397
    %v399 = vand.u32 %v126, 4294901760
    %v400 = vsub.f32 %v126, %v399
    %v401 = vand.u32 %v400, 4294901760
    %v402 = vsub.f32 %v400, %v401
    %v403 = vand.u32 %v402, 4294901760
    %404 = vmatpush1.msra.mxu0 %v403
    %v405 = vand.u32 %v123, 4294901760
    %v406 = vsub.f32 %v123, %v405
    %v407 = vand.u32 %v406, 4294901760
    %v408 = vsub.f32 %v406, %v407
    %v409 = vand.u32 %v408, 4294901760
    %410 = vmatprep.subr.mxu0 %v409
    %v411 = vand.u32 %v122, 4294901760
    %v412 = vsub.f32 %v122, %v411
    %v413 = vand.u32 %v412, 4294901760
    %v414 = vsub.f32 %v412, %v413
    %v415 = vand.u32 %v414, 4294901760
    %416 = vmatpush1.msra.mxu0 %v415
    %v417 = vand.u32 %v119, 4294901760
    %v418 = vsub.f32 %v119, %v417
    %v419 = vand.u32 %v418, 4294901760
    %v420 = vsub.f32 %v418, %v419
    %v421 = vand.u32 %v420, 4294901760
    %422 = vmatprep.subr.mxu0 %v421
    %v423 = vand.u32 %v118, 4294901760
    %v424 = vsub.f32 %v118, %v423
    %v425 = vand.u32 %v424, 4294901760
    %v426 = vsub.f32 %v424, %v425
    %v427 = vand.u32 %v426, 4294901760
    %428 = vmatpush1.msra.mxu0 %v427
    %v429 = vand.u32 %v115, 4294901760
    %v430 = vsub.f32 %v115, %v429
    %v431 = vand.u32 %v430, 4294901760
    %v432 = vsub.f32 %v430, %v431
    %v433 = vand.u32 %v432, 4294901760
    %434 = vmatprep.subr.mxu0 %v433
    %v435 = vand.u32 %v114, 4294901760
    %v436 = vsub.f32 %v114, %v435
    %v437 = vand.u32 %v436, 4294901760
    %v438 = vsub.f32 %v436, %v437
    %v439 = vand.u32 %v438, 4294901760
    %440 = vmatpush1.msra.mxu0 %v439
    %v441 = vand.u32 %v111, 4294901760
    %v442 = vsub.f32 %v111, %v441
    %v443 = vand.u32 %v442, 4294901760
    %v444 = vsub.f32 %v442, %v443
    %v445 = vand.u32 %v444, 4294901760
    %446 = vmatprep.subr.mxu0 %v445
    %v447 = vand.u32 %v110, 4294901760
    %v448 = vsub.f32 %v110, %v447
    %v449 = vand.u32 %v448, 4294901760
    %v450 = vsub.f32 %v448, %v449
    %v451 = vand.u32 %v450, 4294901760
    %452 = vmatpush1.msra.mxu0 %v451
    %v453 = vand.u32 %v107, 4294901760
    %v454 = vsub.f32 %v107, %v453
    %v455 = vand.u32 %v454, 4294901760
    %v456 = vsub.f32 %v454, %v455
    %v457 = vand.u32 %v456, 4294901760
    %458 = vmatprep.subr.mxu0 %v457
    %v459 = vand.u32 %v106, 4294901760
    %v460 = vsub.f32 %v106, %v459
    %v461 = vand.u32 %v460, 4294901760
    %v462 = vsub.f32 %v460, %v461
    %v463 = vand.u32 %v462, 4294901760
    %464 = vmatpush1.msra.mxu0 %v463
    %v465 = vand.u32 %v103, 4294901760
    %v466 = vsub.f32 %v103, %v465
    %v467 = vand.u32 %v466, 4294901760
    %v468 = vsub.f32 %v466, %v467
    %v469 = vand.u32 %v468, 4294901760
    %470 = vmatprep.subr.mxu0 %v469
    %v471 = vand.u32 %v102, 4294901760
    %v472 = vsub.f32 %v102, %v471
    %v473 = vand.u32 %v472, 4294901760
    %v474 = vsub.f32 %v472, %v473
    %v475 = vand.u32 %v474, 4294901760
    %476 = vmatpush1.msra.mxu0 %v475
    %v477 = vand.u32 %v99, 4294901760
    %v478 = vsub.f32 %v99, %v477
    %v479 = vand.u32 %v478, 4294901760
    %v480 = vsub.f32 %v478, %v479
    %v481 = vand.u32 %v480, 4294901760
    %482 = vmatprep.subr.mxu0 %v481
    %v483 = vand.u32 %v98, 4294901760
    %v484 = vsub.f32 %v98, %v483
    %v485 = vand.u32 %v484, 4294901760
    %v486 = vsub.f32 %v484, %v485
    %v487 = vand.u32 %v486, 4294901760
    %488 = vmatpush1.msra.mxu0 %v487
    %v489 = vand.u32 %v95, 4294901760
    %v490 = vsub.f32 %v95, %v489
    %v491 = vand.u32 %v490, 4294901760
    %v492 = vsub.f32 %v490, %v491
    %v493 = vand.u32 %v492, 4294901760
    %494 = vmatprep.subr.mxu0 %v493
    %v495 = vand.u32 %v94, 4294901760
    %v496 = vsub.f32 %v94, %v495
    %v497 = vand.u32 %v496, 4294901760
    %v498 = vsub.f32 %v496, %v497
    %v499 = vand.u32 %v498, 4294901760
    %500 = vmatpush1.msra.mxu0 %v499
    %v501 = vand.u32 %v91, 4294901760
    %v502 = vsub.f32 %v91, %v501
    %v503 = vand.u32 %v502, 4294901760
    %v504 = vsub.f32 %v502, %v503
    %v505 = vand.u32 %v504, 4294901760
    %506 = vmatprep.subr.mxu0 %v505
    %v507 = vand.u32 %v90, 4294901760
    %v508 = vsub.f32 %v90, %v507
    %v509 = vand.u32 %v508, 4294901760
    %v510 = vsub.f32 %v508, %v509
    %v511 = vand.u32 %v510, 4294901760
    %512 = vmatpush1.msra.mxu0 %v511
    %v513 = vand.u32 %v87, 4294901760
    %v514 = vsub.f32 %v87, %v513
    %v515 = vand.u32 %v514, 4294901760
    %v516 = vsub.f32 %v514, %v515
    %v517 = vand.u32 %v516, 4294901760
    %518 = vmatprep.subr.mxu0 %v517
    %v519 = vand.u32 %v86, 4294901760
    %v520 = vsub.f32 %v86, %v519
    %v521 = vand.u32 %v520, 4294901760
    %v522 = vsub.f32 %v520, %v521
    %v523 = vand.u32 %v522, 4294901760
    %524 = vmatpush1.msra.mxu0 %v523
    %v525 = vand.u32 %v83, 4294901760
    %v526 = vsub.f32 %v83, %v525
    %v527 = vand.u32 %v526, 4294901760
    %v528 = vsub.f32 %v526, %v527
    %v529 = vand.u32 %v528, 4294901760
    %530 = vmatprep.subr.mxu0 %v529
    %v531 = vand.u32 %v82, 4294901760
    %v532 = vsub.f32 %v82, %v531
    %v533 = vand.u32 %v532, 4294901760
    %v534 = vsub.f32 %v532, %v533
    %v535 = vand.u32 %v534, 4294901760
    %536 = vmatpush1.msra.mxu0 %v535
    %v537 = vand.u32 %v79, 4294901760
    %v538 = vsub.f32 %v79, %v537
    %v539 = vand.u32 %v538, 4294901760
    %v540 = vsub.f32 %v538, %v539
    %v541 = vand.u32 %v540, 4294901760
    %542 = vmatprep.subr.mxu0 %v541
    %v543 = vand.u32 %v78, 4294901760
    %v544 = vsub.f32 %v78, %v543
    %v545 = vand.u32 %v544, 4294901760
    %v546 = vsub.f32 %v544, %v545
    %v547 = vand.u32 %v546, 4294901760
    %548 = vmatpush1.msra.mxu0 %v547
    %v549 = vand.u32 %v75, 4294901760
    %v550 = vsub.f32 %v75, %v549
    %v551 = vand.u32 %v550, 4294901760
    %v552 = vsub.f32 %v550, %v551
    %v553 = vand.u32 %v552, 4294901760
    %554 = vmatprep.subr.mxu0 %v553
    %v555 = vand.u32 %v74, 4294901760
    %v556 = vsub.f32 %v74, %v555
    %v557 = vand.u32 %v556, 4294901760
    %v558 = vsub.f32 %v556, %v557
    %v559 = vand.u32 %v558, 4294901760
    %560 = vmatpush1.msra.mxu0 %v559
    %v561 = vand.u32 %v199, 4294901760
    %v562 = vsub.f32 %v199, %v561
    %v563 = vand.u32 %v562, 4294901760
    %v564 = vsub.f32 %v562, %v563
    %v565 = vand.u32 %v564, 4294901760
    %566 = vmatprep.subr.mxu0 %v565
    %v567 = vand.u32 %v198, 4294901760
    %v568 = vsub.f32 %v198, %v567
    %v569 = vand.u32 %v568, 4294901760
    %v570 = vsub.f32 %v568, %v569
    %v571 = vand.u32 %v570, 4294901760
    %572 = vmatpush2.msra.mxu0 %v571
    %v573 = vand.u32 %v195, 4294901760
    %v574 = vsub.f32 %v195, %v573
    %v575 = vand.u32 %v574, 4294901760
    %v576 = vsub.f32 %v574, %v575
    %v577 = vand.u32 %v576, 4294901760
    %578 = vmatprep.subr.mxu0 %v577
    %v579 = vand.u32 %v194, 4294901760
    %v580 = vsub.f32 %v194, %v579
    %v581 = vand.u32 %v580, 4294901760
    %v582 = vsub.f32 %v580, %v581
    %v583 = vand.u32 %v582, 4294901760
    %584 = vmatpush2.msra.mxu0 %v583
    %v585 = vand.u32 %v191, 4294901760
    %v586 = vsub.f32 %v191, %v585
    %v587 = vand.u32 %v586, 4294901760
    %v588 = vsub.f32 %v586, %v587
    %v589 = vand.u32 %v588, 4294901760
    %590 = vmatprep.subr.mxu0 %v589
    %v591 = vand.u32 %v190, 4294901760
    %v592 = vsub.f32 %v190, %v591
    %v593 = vand.u32 %v592, 4294901760
    %v594 = vsub.f32 %v592, %v593
    %v595 = vand.u32 %v594, 4294901760
    %596 = vmatpush2.msra.mxu0 %v595
    %v597 = vand.u32 %v187, 4294901760
    %v598 = vsub.f32 %v187, %v597
    %v599 = vand.u32 %v598, 4294901760
    %v600 = vsub.f32 %v598, %v599
    %v601 = vand.u32 %v600, 4294901760
    %602 = vmatprep.subr.mxu0 %v601
    %v603 = vand.u32 %v186, 4294901760
    %v604 = vsub.f32 %v186, %v603
    %v605 = vand.u32 %v604, 4294901760
    %v606 = vsub.f32 %v604, %v605
    %v607 = vand.u32 %v606, 4294901760
    %608 = vmatpush2.msra.mxu0 %v607
    %v609 = vand.u32 %v183, 4294901760
    %v610 = vsub.f32 %v183, %v609
    %v611 = vand.u32 %v610, 4294901760
    %v612 = vsub.f32 %v610, %v611
    %v613 = vand.u32 %v612, 4294901760
    %614 = vmatprep.subr.mxu0 %v613
    %v615 = vand.u32 %v182, 4294901760
    %v616 = vsub.f32 %v182, %v615
    %v617 = vand.u32 %v616, 4294901760
    %v618 = vsub.f32 %v616, %v617
    %v619 = vand.u32 %v618, 4294901760
    %620 = vmatpush2.msra.mxu0 %v619
    %v621 = vand.u32 %v179, 4294901760
    %v622 = vsub.f32 %v179, %v621
    %v623 = vand.u32 %v622, 4294901760
    %v624 = vsub.f32 %v622, %v623
    %v625 = vand.u32 %v624, 4294901760
    %626 = vmatprep.subr.mxu0 %v625
    %v627 = vand.u32 %v178, 4294901760
    %v628 = vsub.f32 %v178, %v627
    %v629 = vand.u32 %v628, 4294901760
    %v630 = vsub.f32 %v628, %v629
    %v631 = vand.u32 %v630, 4294901760
    %632 = vmatpush2.msra.mxu0 %v631
    %v633 = vand.u32 %v175, 4294901760
    %v634 = vsub.f32 %v175, %v633
    %v635 = vand.u32 %v634, 4294901760
    %v636 = vsub.f32 %v634, %v635
    %v637 = vand.u32 %v636, 4294901760
    %638 = vmatprep.subr.mxu0 %v637
    %v639 = vand.u32 %v174, 4294901760
    %v640 = vsub.f32 %v174, %v639
    %v641 = vand.u32 %v640, 4294901760
    %v642 = vsub.f32 %v640, %v641
    %v643 = vand.u32 %v642, 4294901760
    %644 = vmatpush2.msra.mxu0 %v643
    %v645 = vand.u32 %v171, 4294901760
    %v646 = vsub.f32 %v171, %v645
    %v647 = vand.u32 %v646, 4294901760
    %v648 = vsub.f32 %v646, %v647
    %v649 = vand.u32 %v648, 4294901760
    %650 = vmatprep.subr.mxu0 %v649
    %v651 = vand.u32 %v170, 4294901760
    %v652 = vsub.f32 %v170, %v651
    %v653 = vand.u32 %v652, 4294901760
    %v654 = vsub.f32 %v652, %v653
    %v655 = vand.u32 %v654, 4294901760
    %656 = vmatpush2.msra.mxu0 %v655
    %v657 = vand.u32 %v167, 4294901760
    %v658 = vsub.f32 %v167, %v657
    %v659 = vand.u32 %v658, 4294901760
    %v660 = vsub.f32 %v658, %v659
    %v661 = vand.u32 %v660, 4294901760
    %662 = vmatprep.subr.mxu0 %v661
    %v663 = vand.u32 %v166, 4294901760
    %v664 = vsub.f32 %v166, %v663
    %v665 = vand.u32 %v664, 4294901760
    %v666 = vsub.f32 %v664, %v665
    %v667 = vand.u32 %v666, 4294901760
    %668 = vmatpush2.msra.mxu0 %v667
    %v669 = vand.u32 %v163, 4294901760
    %v670 = vsub.f32 %v163, %v669
    %v671 = vand.u32 %v670, 4294901760
    %v672 = vsub.f32 %v670, %v671
    %v673 = vand.u32 %v672, 4294901760
    %674 = vmatprep.subr.mxu0 %v673
    %v675 = vand.u32 %v162, 4294901760
    %v676 = vsub.f32 %v162, %v675
    %v677 = vand.u32 %v676, 4294901760
    %v678 = vsub.f32 %v676, %v677
    %v679 = vand.u32 %v678, 4294901760
    %680 = vmatpush2.msra.mxu0 %v679
    %v681 = vand.u32 %v159, 4294901760
    %v682 = vsub.f32 %v159, %v681
    %v683 = vand.u32 %v682, 4294901760
    %v684 = vsub.f32 %v682, %v683
    %v685 = vand.u32 %v684, 4294901760
    %686 = vmatprep.subr.mxu0 %v685
    %v687 = vand.u32 %v158, 4294901760
    %v688 = vsub.f32 %v158, %v687
    %v689 = vand.u32 %v688, 4294901760
    %v690 = vsub.f32 %v688, %v689
    %v691 = vand.u32 %v690, 4294901760
    %692 = vmatpush2.msra.mxu0 %v691
    %v693 = vand.u32 %v155, 4294901760
    %v694 = vsub.f32 %v155, %v693
    %v695 = vand.u32 %v694, 4294901760
    %v696 = vsub.f32 %v694, %v695
    %v697 = vand.u32 %v696, 4294901760
    %698 = vmatprep.subr.mxu0 %v697
    %v699 = vand.u32 %v154, 4294901760
    %v700 = vsub.f32 %v154, %v699
    %v701 = vand.u32 %v700, 4294901760
    %v702 = vsub.f32 %v700, %v701
    %v703 = vand.u32 %v702, 4294901760
    %704 = vmatpush2.msra.mxu0 %v703
    %v705 = vand.u32 %v151, 4294901760
    %v706 = vsub.f32 %v151, %v705
    %v707 = vand.u32 %v706, 4294901760
    %v708 = vsub.f32 %v706, %v707
    %v709 = vand.u32 %v708, 4294901760
    %710 = vmatprep.subr.mxu0 %v709
    %v711 = vand.u32 %v150, 4294901760
    %v712 = vsub.f32 %v150, %v711
    %v713 = vand.u32 %v712, 4294901760
    %v714 = vsub.f32 %v712, %v713
    %v715 = vand.u32 %v714, 4294901760
    %716 = vmatpush2.msra.mxu0 %v715
    %v717 = vand.u32 %v147, 4294901760
    %v718 = vsub.f32 %v147, %v717
    %v719 = vand.u32 %v718, 4294901760
    %v720 = vsub.f32 %v718, %v719
    %v721 = vand.u32 %v720, 4294901760
    %722 = vmatprep.subr.mxu0 %v721
    %v723 = vand.u32 %v146, 4294901760
    %v724 = vsub.f32 %v146, %v723
    %v725 = vand.u32 %v724, 4294901760
    %v726 = vsub.f32 %v724, %v725
    %v727 = vand.u32 %v726, 4294901760
    %728 = vmatpush2.msra.mxu0 %v727
    %v729 = vand.u32 %v143, 4294901760
    %v730 = vsub.f32 %v143, %v729
    %v731 = vand.u32 %v730, 4294901760
    %v732 = vsub.f32 %v730, %v731
    %v733 = vand.u32 %v732, 4294901760
    %734 = vmatprep.subr.mxu0 %v733
    %v735 = vand.u32 %v142, 4294901760
    %v736 = vsub.f32 %v142, %v735
    %v737 = vand.u32 %v736, 4294901760
    %v738 = vsub.f32 %v736, %v737
    %v739 = vand.u32 %v738, 4294901760
    %740 = vmatpush2.msra.mxu0 %v739
    %v741 = vand.u32 %v139, 4294901760
    %v742 = vsub.f32 %v139, %v741
    %v743 = vand.u32 %v742, 4294901760
    %v744 = vsub.f32 %v742, %v743
    %v745 = vand.u32 %v744, 4294901760
    %746 = vmatprep.subr.mxu0 %v745
    %v747 = vand.u32 %v138, 4294901760
    %v748 = vsub.f32 %v138, %v747
    %v749 = vand.u32 %v748, 4294901760
    %v750 = vsub.f32 %v748, %v749
    %v751 = vand.u32 %v750, 4294901760
    %752 = vmatpush2.msra.mxu0 %v751
    %v753 = vand.u32 %v73, 4294901760
    %754 = vmatprep.mubr.f32.mxu0 %v753
    %v755 = vand.u32 %v72, 4294901760
    %756 = vmatmul.mubr.f32.gmra.mxu0 %v755
    %v757 = vpop.f32.mrf.mxu0
    %v758 = vadd.f32 %v365, %v757
    %v759 = vpop.f32.mrf.mxu0
    %v760 = vadd.f32 %v367, %v759
    %761 = vdwg.mxu0
    %v762 = vand.u32 %v135, 4294901760
    %v763 = vsub.f32 %v135, %v762
    %764 = vmatprep.subr.mxu0 %v763
    %v765 = vand.u32 %v134, 4294901760
    %v766 = vsub.f32 %v134, %v765
    %767 = vmatpush1.msra.mxu0 %v766
    %v768 = vand.u32 %v131, 4294901760
    %v769 = vsub.f32 %v131, %v768
    %770 = vmatprep.subr.mxu0 %v769
    %v771 = vand.u32 %v130, 4294901760
    %v772 = vsub.f32 %v130, %v771
    %773 = vmatpush1.msra.mxu0 %v772
    %v774 = vand.u32 %v127, 4294901760
    %v775 = vsub.f32 %v127, %v774
    %776 = vmatprep.subr.mxu0 %v775
    %v777 = vand.u32 %v126, 4294901760
    %v778 = vsub.f32 %v126, %v777
    %779 = vmatpush1.msra.mxu0 %v778
    %v780 = vand.u32 %v123, 4294901760
    %v781 = vsub.f32 %v123, %v780
    %782 = vmatprep.subr.mxu0 %v781
    %v783 = vand.u32 %v122, 4294901760
    %v784 = vsub.f32 %v122, %v783
    %785 = vmatpush1.msra.mxu0 %v784
    %v786 = vand.u32 %v119, 4294901760
    %v787 = vsub.f32 %v119, %v786
    %788 = vmatprep.subr.mxu0 %v787
    %v789 = vand.u32 %v118, 4294901760
    %v790 = vsub.f32 %v118, %v789
    %791 = vmatpush1.msra.mxu0 %v790
    %v792 = vand.u32 %v115, 4294901760
    %v793 = vsub.f32 %v115, %v792
    %794 = vmatprep.subr.mxu0 %v793
    %v795 = vand.u32 %v114, 4294901760
    %v796 = vsub.f32 %v114, %v795
    %797 = vmatpush1.msra.mxu0 %v796
    %v798 = vand.u32 %v111, 4294901760
    %v799 = vsub.f32 %v111, %v798
    %800 = vmatprep.subr.mxu0 %v799
    %v801 = vand.u32 %v110, 4294901760
    %v802 = vsub.f32 %v110, %v801
    %803 = vmatpush1.msra.mxu0 %v802
    %v804 = vand.u32 %v107, 4294901760
    %v805 = vsub.f32 %v107, %v804
    %806 = vmatprep.subr.mxu0 %v805
    %v807 = vand.u32 %v106, 4294901760
    %v808 = vsub.f32 %v106, %v807
    %809 = vmatpush1.msra.mxu0 %v808
    %v810 = vand.u32 %v103, 4294901760
    %v811 = vsub.f32 %v103, %v810
    %812 = vmatprep.subr.mxu0 %v811
    %v813 = vand.u32 %v102, 4294901760
    %v814 = vsub.f32 %v102, %v813
    %815 = vmatpush1.msra.mxu0 %v814
    %v816 = vand.u32 %v99, 4294901760
    %v817 = vsub.f32 %v99, %v816
    %818 = vmatprep.subr.mxu0 %v817
    %v819 = vand.u32 %v98, 4294901760
    %v820 = vsub.f32 %v98, %v819
    %821 = vmatpush1.msra.mxu0 %v820
    %v822 = vand.u32 %v95, 4294901760
    %v823 = vsub.f32 %v95, %v822
    %824 = vmatprep.subr.mxu0 %v823
    %v825 = vand.u32 %v94, 4294901760
    %v826 = vsub.f32 %v94, %v825
    %827 = vmatpush1.msra.mxu0 %v826
    %v828 = vand.u32 %v91, 4294901760
    %v829 = vsub.f32 %v91, %v828
    %830 = vmatprep.subr.mxu0 %v829
    %v831 = vand.u32 %v90, 4294901760
    %v832 = vsub.f32 %v90, %v831
    %833 = vmatpush1.msra.mxu0 %v832
    %v834 = vand.u32 %v87, 4294901760
    %v835 = vsub.f32 %v87, %v834
    %836 = vmatprep.subr.mxu0 %v835
    %v837 = vand.u32 %v86, 4294901760
    %v838 = vsub.f32 %v86, %v837
    %839 = vmatpush1.msra.mxu0 %v838
    %v840 = vand.u32 %v83, 4294901760
    %v841 = vsub.f32 %v83, %v840
    %842 = vmatprep.subr.mxu0 %v841
    %v843 = vand.u32 %v82, 4294901760
    %v844 = vsub.f32 %v82, %v843
    %845 = vmatpush1.msra.mxu0 %v844
    %v846 = vand.u32 %v79, 4294901760
    %v847 = vsub.f32 %v79, %v846
    %848 = vmatprep.subr.mxu0 %v847
    %v849 = vand.u32 %v78, 4294901760
    %v850 = vsub.f32 %v78, %v849
    %851 = vmatpush1.msra.mxu0 %v850
    %v852 = vand.u32 %v75, 4294901760
    %v853 = vsub.f32 %v75, %v852
    %854 = vmatprep.subr.mxu0 %v853
    %v855 = vand.u32 %v74, 4294901760
    %v856 = vsub.f32 %v74, %v855
    %857 = vmatpush1.msra.mxu0 %v856
    %v858 = vand.u32 %v199, 4294901760
    %v859 = vsub.f32 %v199, %v858
    %860 = vmatprep.subr.mxu0 %v859
    %v861 = vand.u32 %v198, 4294901760
    %v862 = vsub.f32 %v198, %v861
    %863 = vmatpush2.msra.mxu0 %v862
    %v864 = vand.u32 %v195, 4294901760
    %v865 = vsub.f32 %v195, %v864
    %866 = vmatprep.subr.mxu0 %v865
    %v867 = vand.u32 %v194, 4294901760
    %v868 = vsub.f32 %v194, %v867
    %869 = vmatpush2.msra.mxu0 %v868
    %v870 = vand.u32 %v191, 4294901760
    %v871 = vsub.f32 %v191, %v870
    %872 = vmatprep.subr.mxu0 %v871
    %v873 = vand.u32 %v190, 4294901760
    %v874 = vsub.f32 %v190, %v873
    %875 = vmatpush2.msra.mxu0 %v874
    %v876 = vand.u32 %v187, 4294901760
    %v877 = vsub.f32 %v187, %v876
    %878 = vmatprep.subr.mxu0 %v877
    %v879 = vand.u32 %v186, 4294901760
    %v880 = vsub.f32 %v186, %v879
    %881 = vmatpush2.msra.mxu0 %v880
    %v882 = vand.u32 %v183, 4294901760
    %v883 = vsub.f32 %v183, %v882
    %884 = vmatprep.subr.mxu0 %v883
    %v885 = vand.u32 %v182, 4294901760
    %v886 = vsub.f32 %v182, %v885
    %887 = vmatpush2.msra.mxu0 %v886
    %v888 = vand.u32 %v179, 4294901760
    %v889 = vsub.f32 %v179, %v888
    %890 = vmatprep.subr.mxu0 %v889
    %v891 = vand.u32 %v178, 4294901760
    %v892 = vsub.f32 %v178, %v891
    %893 = vmatpush2.msra.mxu0 %v892
    %v894 = vand.u32 %v175, 4294901760
    %v895 = vsub.f32 %v175, %v894
    %896 = vmatprep.subr.mxu0 %v895
    %v897 = vand.u32 %v174, 4294901760
    %v898 = vsub.f32 %v174, %v897
    %899 = vmatpush2.msra.mxu0 %v898
    %v900 = vand.u32 %v171, 4294901760
    %v901 = vsub.f32 %v171, %v900
    %902 = vmatprep.subr.mxu0 %v901
    %v903 = vand.u32 %v170, 4294901760
    %v904 = vsub.f32 %v170, %v903
    %905 = vmatpush2.msra.mxu0 %v904
    %v906 = vand.u32 %v167, 4294901760
    %v907 = vsub.f32 %v167, %v906
    %908 = vmatprep.subr.mxu0 %v907
    %v909 = vand.u32 %v166, 4294901760
    %v910 = vsub.f32 %v166, %v909
    %911 = vmatpush2.msra.mxu0 %v910
    %v912 = vand.u32 %v163, 4294901760
    %v913 = vsub.f32 %v163, %v912
    %914 = vmatprep.subr.mxu0 %v913
    %v915 = vand.u32 %v162, 4294901760
    %v916 = vsub.f32 %v162, %v915
    %917 = vmatpush2.msra.mxu0 %v916
    %v918 = vand.u32 %v159, 4294901760
    %v919 = vsub.f32 %v159, %v918
    %920 = vmatprep.subr.mxu0 %v919
    %v921 = vand.u32 %v158, 4294901760
    %v922 = vsub.f32 %v158, %v921
    %923 = vmatpush2.msra.mxu0 %v922
    %v924 = vand.u32 %v155, 4294901760
    %v925 = vsub.f32 %v155, %v924
    %926 = vmatprep.subr.mxu0 %v925
    %v927 = vand.u32 %v154, 4294901760
    %v928 = vsub.f32 %v154, %v927
    %929 = vmatpush2.msra.mxu0 %v928
    %v930 = vand.u32 %v151, 4294901760
    %v931 = vsub.f32 %v151, %v930
    %932 = vmatprep.subr.mxu0 %v931
    %v933 = vand.u32 %v150, 4294901760
    %v934 = vsub.f32 %v150, %v933
    %935 = vmatpush2.msra.mxu0 %v934
    %v936 = vand.u32 %v147, 4294901760
    %v937 = vsub.f32 %v147, %v936
    %938 = vmatprep.subr.mxu0 %v937
    %v939 = vand.u32 %v146, 4294901760
    %v940 = vsub.f32 %v146, %v939
    %941 = vmatpush2.msra.mxu0 %v940
    %v942 = vand.u32 %v143, 4294901760
    %v943 = vsub.f32 %v143, %v942
    %944 = vmatprep.subr.mxu0 %v943
    %v945 = vand.u32 %v142, 4294901760
    %v946 = vsub.f32 %v142, %v945
    %947 = vmatpush2.msra.mxu0 %v946
    %v948 = vand.u32 %v139, 4294901760
    %v949 = vsub.f32 %v139, %v948
    %950 = vmatprep.subr.mxu0 %v949
    %v951 = vand.u32 %v138, 4294901760
    %v952 = vsub.f32 %v138, %v951
    %953 = vmatpush2.msra.mxu0 %v952
    %v954 = vand.u32 %v73, 4294901760
    %v955 = vsub.f32 %v73, %v954
    %956 = vmatprep.mubr.f32.mxu0 %v955
    %v957 = vand.u32 %v72, 4294901760
    %v958 = vsub.f32 %v72, %v957
    %959 = vmatmul.mubr.f32.gmra.mxu0 %v958
    %v960 = vpop.f32.mrf.mxu0
    %v961 = vadd.f32 %v758, %v960
    %v962 = vpop.f32.mrf.mxu0
    %v963 = vadd.f32 %v760, %v962
    %964 = vdwg.mxu0
    %v965 = vand.u32 %v135, 4294901760
    %966 = vmatprep.subr.mxu0 %v965
    %v967 = vand.u32 %v134, 4294901760
    %968 = vmatpush1.msra.mxu0 %v967
    %v969 = vand.u32 %v131, 4294901760
    %970 = vmatprep.subr.mxu0 %v969
    %v971 = vand.u32 %v130, 4294901760
    %972 = vmatpush1.msra.mxu0 %v971
    %v973 = vand.u32 %v127, 4294901760
    %974 = vmatprep.subr.mxu0 %v973
    %v975 = vand.u32 %v126, 4294901760
    %976 = vmatpush1.msra.mxu0 %v975
    %v977 = vand.u32 %v123, 4294901760
    %978 = vmatprep.subr.mxu0 %v977
    %v979 = vand.u32 %v122, 4294901760
    %980 = vmatpush1.msra.mxu0 %v979
    %v981 = vand.u32 %v119, 4294901760
    %982 = vmatprep.subr.mxu0 %v981
    %v983 = vand.u32 %v118, 4294901760
    %984 = vmatpush1.msra.mxu0 %v983
    %v985 = vand.u32 %v115, 4294901760
    %986 = vmatprep.subr.mxu0 %v985
    %v987 = vand.u32 %v114, 4294901760
    %988 = vmatpush1.msra.mxu0 %v987
    %v989 = vand.u32 %v111, 4294901760
    %990 = vmatprep.subr.mxu0 %v989
    %v991 = vand.u32 %v110, 4294901760
    %992 = vmatpush1.msra.mxu0 %v991
    %v993 = vand.u32 %v107, 4294901760
    %994 = vmatprep.subr.mxu0 %v993
    %v995 = vand.u32 %v106, 4294901760
    %996 = vmatpush1.msra.mxu0 %v995
    %v997 = vand.u32 %v103, 4294901760
    %998 = vmatprep.subr.mxu0 %v997
    %v999 = vand.u32 %v102, 4294901760
    %1000 = vmatpush1.msra.mxu0 %v999
    %v1001 = vand.u32 %v99, 4294901760
    %1002 = vmatprep.subr.mxu0 %v1001
    %v1003 = vand.u32 %v98, 4294901760
    %1004 = vmatpush1.msra.mxu0 %v1003
    %v1005 = vand.u32 %v95, 4294901760
    %1006 = vmatprep.subr.mxu0 %v1005
    %v1007 = vand.u32 %v94, 4294901760
    %1008 = vmatpush1.msra.mxu0 %v1007
    %v1009 = vand.u32 %v91, 4294901760
    %1010 = vmatprep.subr.mxu0 %v1009
    %v1011 = vand.u32 %v90, 4294901760
    %1012 = vmatpush1.msra.mxu0 %v1011
    %v1013 = vand.u32 %v87, 4294901760
    %1014 = vmatprep.subr.mxu0 %v1013
    %v1015 = vand.u32 %v86, 4294901760
    %1016 = vmatpush1.msra.mxu0 %v1015
    %v1017 = vand.u32 %v83, 4294901760
    %1018 = vmatprep.subr.mxu0 %v1017
    %v1019 = vand.u32 %v82, 4294901760
    %1020 = vmatpush1.msra.mxu0 %v1019
    %v1021 = vand.u32 %v79, 4294901760
    %1022 = vmatprep.subr.mxu0 %v1021
    %v1023 = vand.u32 %v78, 4294901760
    %1024 = vmatpush1.msra.mxu0 %v1023
    %v1025 = vand.u32 %v75, 4294901760
    %1026 = vmatprep.subr.mxu0 %v1025
    %v1027 = vand.u32 %v74, 4294901760
    %1028 = vmatpush1.msra.mxu0 %v1027
    %v1029 = vand.u32 %v199, 4294901760
    %1030 = vmatprep.subr.mxu0 %v1029
    %v1031 = vand.u32 %v198, 4294901760
    %1032 = vmatpush2.msra.mxu0 %v1031
    %v1033 = vand.u32 %v195, 4294901760
    %1034 = vmatprep.subr.mxu0 %v1033
    %v1035 = vand.u32 %v194, 4294901760
    %1036 = vmatpush2.msra.mxu0 %v1035
    %v1037 = vand.u32 %v191, 4294901760
    %1038 = vmatprep.subr.mxu0 %v1037
    %v1039 = vand.u32 %v190, 4294901760
    %1040 = vmatpush2.msra.mxu0 %v1039
    %v1041 = vand.u32 %v187, 4294901760
    %1042 = vmatprep.subr.mxu0 %v1041
    %v1043 = vand.u32 %v186, 4294901760
    %1044 = vmatpush2.msra.mxu0 %v1043
    %v1045 = vand.u32 %v183, 4294901760
    %1046 = vmatprep.subr.mxu0 %v1045
    %v1047 = vand.u32 %v182, 4294901760
    %1048 = vmatpush2.msra.mxu0 %v1047
    %v1049 = vand.u32 %v179, 4294901760
    %1050 = vmatprep.subr.mxu0 %v1049
    %v1051 = vand.u32 %v178, 4294901760
    %1052 = vmatpush2.msra.mxu0 %v1051
    %v1053 = vand.u32 %v175, 4294901760
    %1054 = vmatprep.subr.mxu0 %v1053
    %v1055 = vand.u32 %v174, 4294901760
    %1056 = vmatpush2.msra.mxu0 %v1055
    %v1057 = vand.u32 %v171, 4294901760
    %1058 = vmatprep.subr.mxu0 %v1057
    %v1059 = vand.u32 %v170, 4294901760
    %1060 = vmatpush2.msra.mxu0 %v1059
    %v1061 = vand.u32 %v167, 4294901760
    %1062 = vmatprep.subr.mxu0 %v1061
    %v1063 = vand.u32 %v166, 4294901760
    %1064 = vmatpush2.msra.mxu0 %v1063
    %v1065 = vand.u32 %v163, 4294901760
    %1066 = vmatprep.subr.mxu0 %v1065
    %v1067 = vand.u32 %v162, 4294901760
    %1068 = vmatpush2.msra.mxu0 %v1067
    %v1069 = vand.u32 %v159, 4294901760
    %1070 = vmatprep.subr.mxu0 %v1069
    %v1071 = vand.u32 %v158, 4294901760
    %1072 = vmatpush2.msra.mxu0 %v1071
    %v1073 = vand.u32 %v155, 4294901760
    %1074 = vmatprep.subr.mxu0 %v1073
    %v1075 = vand.u32 %v154, 4294901760
    %1076 = vmatpush2.msra.mxu0 %v1075
    %v1077 = vand.u32 %v151, 4294901760
    %1078 = vmatprep.subr.mxu0 %v1077
    %v1079 = vand.u32 %v150, 4294901760
    %1080 = vmatpush2.msra.mxu0 %v1079
    %v1081 = vand.u32 %v147, 4294901760
    %1082 = vmatprep.subr.mxu0 %v1081
    %v1083 = vand.u32 %v146, 4294901760
    %1084 = vmatpush2.msra.mxu0 %v1083
    %v1085 = vand.u32 %v143, 4294901760
    %1086 = vmatprep.subr.mxu0 %v1085
    %v1087 = vand.u32 %v142, 4294901760
    %1088 = vmatpush2.msra.mxu0 %v1087
    %v1089 = vand.u32 %v139, 4294901760
    %1090 = vmatprep.subr.mxu0 %v1089
    %v1091 = vand.u32 %v138, 4294901760
    %1092 = vmatpush2.msra.mxu0 %v1091
    %v1093 = vand.u32 %v73, 4294901760
    %v1094 = vsub.f32 %v73, %v1093
    %v1095 = vand.u32 %v1094, 4294901760
    %1096 = vmatprep.mubr.f32.mxu0 %v1095
    %v1097 = vand.u32 %v72, 4294901760
    %v1098 = vsub.f32 %v72, %v1097
    %v1099 = vand.u32 %v1098, 4294901760
    %1100 = vmatmul.mubr.f32.gmra.mxu0 %v1099
    %v1101 = vpop.f32.mrf.mxu0
    %v1102 = vadd.f32 %v961, %v1101
    %v1103 = vpop.f32.mrf.mxu0
    %v1104 = vadd.f32 %v963, %v1103
    %1105 = vdwg.mxu0
    %v1106 = vand.u32 %v135, 4294901760
    %v1107 = vsub.f32 %v135, %v1106
    %v1108 = vand.u32 %v1107, 4294901760
    %1109 = vmatprep.subr.mxu0 %v1108
    %v1110 = vand.u32 %v134, 4294901760
    %v1111 = vsub.f32 %v134, %v1110
    %v1112 = vand.u32 %v1111, 4294901760
    %1113 = vmatpush1.msra.mxu0 %v1112
    %v1114 = vand.u32 %v131, 4294901760
    %v1115 = vsub.f32 %v131, %v1114
    %v1116 = vand.u32 %v1115, 4294901760
    %1117 = vmatprep.subr.mxu0 %v1116
    %v1118 = vand.u32 %v130, 4294901760
    %v1119 = vsub.f32 %v130, %v1118
    %v1120 = vand.u32 %v1119, 4294901760
    %1121 = vmatpush1.msra.mxu0 %v1120
    %v1122 = vand.u32 %v127, 4294901760
    %v1123 = vsub.f32 %v127, %v1122
    %v1124 = vand.u32 %v1123, 4294901760
    %1125 = vmatprep.subr.mxu0 %v1124
    %v1126 = vand.u32 %v126, 4294901760
    %v1127 = vsub.f32 %v126, %v1126
    %v1128 = vand.u32 %v1127, 4294901760
    %1129 = vmatpush1.msra.mxu0 %v1128
    %v1130 = vand.u32 %v123, 4294901760
    %v1131 = vsub.f32 %v123, %v1130
    %v1132 = vand.u32 %v1131, 4294901760
    %1133 = vmatprep.subr.mxu0 %v1132
    %v1134 = vand.u32 %v122, 4294901760
    %v1135 = vsub.f32 %v122, %v1134
    %v1136 = vand.u32 %v1135, 4294901760
    %1137 = vmatpush1.msra.mxu0 %v1136
    %v1138 = vand.u32 %v119, 4294901760
    %v1139 = vsub.f32 %v119, %v1138
    %v1140 = vand.u32 %v1139, 4294901760
    %1141 = vmatprep.subr.mxu0 %v1140
    %v1142 = vand.u32 %v118, 4294901760
    %v1143 = vsub.f32 %v118, %v1142
    %v1144 = vand.u32 %v1143, 4294901760
    %1145 = vmatpush1.msra.mxu0 %v1144
    %v1146 = vand.u32 %v115, 4294901760
    %v1147 = vsub.f32 %v115, %v1146
    %v1148 = vand.u32 %v1147, 4294901760
    %1149 = vmatprep.subr.mxu0 %v1148
    %v1150 = vand.u32 %v114, 4294901760
    %v1151 = vsub.f32 %v114, %v1150
    %v1152 = vand.u32 %v1151, 4294901760
    %1153 = vmatpush1.msra.mxu0 %v1152
    %v1154 = vand.u32 %v111, 4294901760
    %v1155 = vsub.f32 %v111, %v1154
    %v1156 = vand.u32 %v1155, 4294901760
    %1157 = vmatprep.subr.mxu0 %v1156
    %v1158 = vand.u32 %v110, 4294901760
    %v1159 = vsub.f32 %v110, %v1158
    %v1160 = vand.u32 %v1159, 4294901760
    %1161 = vmatpush1.msra.mxu0 %v1160
    %v1162 = vand.u32 %v107, 4294901760
    %v1163 = vsub.f32 %v107, %v1162
    %v1164 = vand.u32 %v1163, 4294901760
    %1165 = vmatprep.subr.mxu0 %v1164
    %v1166 = vand.u32 %v106, 4294901760
    %v1167 = vsub.f32 %v106, %v1166
    %v1168 = vand.u32 %v1167, 4294901760
    %1169 = vmatpush1.msra.mxu0 %v1168
    %v1170 = vand.u32 %v103, 4294901760
    %v1171 = vsub.f32 %v103, %v1170
    %v1172 = vand.u32 %v1171, 4294901760
    %1173 = vmatprep.subr.mxu0 %v1172
    %v1174 = vand.u32 %v102, 4294901760
    %v1175 = vsub.f32 %v102, %v1174
    %v1176 = vand.u32 %v1175, 4294901760
    %1177 = vmatpush1.msra.mxu0 %v1176
    %v1178 = vand.u32 %v99, 4294901760
    %v1179 = vsub.f32 %v99, %v1178
    %v1180 = vand.u32 %v1179, 4294901760
    %1181 = vmatprep.subr.mxu0 %v1180
    %v1182 = vand.u32 %v98, 4294901760
    %v1183 = vsub.f32 %v98, %v1182
    %v1184 = vand.u32 %v1183, 4294901760
    %1185 = vmatpush1.msra.mxu0 %v1184
    %v1186 = vand.u32 %v95, 4294901760
    %v1187 = vsub.f32 %v95, %v1186
    %v1188 = vand.u32 %v1187, 4294901760
    %1189 = vmatprep.subr.mxu0 %v1188
    %v1190 = vand.u32 %v94, 4294901760
    %v1191 = vsub.f32 %v94, %v1190
    %v1192 = vand.u32 %v1191, 4294901760
    %1193 = vmatpush1.msra.mxu0 %v1192
    %v1194 = vand.u32 %v91, 4294901760
    %v1195 = vsub.f32 %v91, %v1194
    %v1196 = vand.u32 %v1195, 4294901760
    %1197 = vmatprep.subr.mxu0 %v1196
    %v1198 = vand.u32 %v90, 4294901760
    %v1199 = vsub.f32 %v90, %v1198
    %v1200 = vand.u32 %v1199, 4294901760
    %1201 = vmatpush1.msra.mxu0 %v1200
    %v1202 = vand.u32 %v87, 4294901760
    %v1203 = vsub.f32 %v87, %v1202
    %v1204 = vand.u32 %v1203, 4294901760
    %1205 = vmatprep.subr.mxu0 %v1204
    %v1206 = vand.u32 %v86, 4294901760
    %v1207 = vsub.f32 %v86, %v1206
    %v1208 = vand.u32 %v1207, 4294901760
    %1209 = vmatpush1.msra.mxu0 %v1208
    %v1210 = vand.u32 %v83, 4294901760
    %v1211 = vsub.f32 %v83, %v1210
    %v1212 = vand.u32 %v1211, 4294901760
    %1213 = vmatprep.subr.mxu0 %v1212
    %v1214 = vand.u32 %v82, 4294901760
    %v1215 = vsub.f32 %v82, %v1214
    %v1216 = vand.u32 %v1215, 4294901760
    %1217 = vmatpush1.msra.mxu0 %v1216
    %v1218 = vand.u32 %v79, 4294901760
    %v1219 = vsub.f32 %v79, %v1218
    %v1220 = vand.u32 %v1219, 4294901760
    %1221 = vmatprep.subr.mxu0 %v1220
    %v1222 = vand.u32 %v78, 4294901760
    %v1223 = vsub.f32 %v78, %v1222
    %v1224 = vand.u32 %v1223, 4294901760
    %1225 = vmatpush1.msra.mxu0 %v1224
    %v1226 = vand.u32 %v75, 4294901760
    %v1227 = vsub.f32 %v75, %v1226
    %v1228 = vand.u32 %v1227, 4294901760
    %1229 = vmatprep.subr.mxu0 %v1228
    %v1230 = vand.u32 %v74, 4294901760
    %v1231 = vsub.f32 %v74, %v1230
    %v1232 = vand.u32 %v1231, 4294901760
    %1233 = vmatpush1.msra.mxu0 %v1232
    %v1234 = vand.u32 %v199, 4294901760
    %v1235 = vsub.f32 %v199, %v1234
    %v1236 = vand.u32 %v1235, 4294901760
    %1237 = vmatprep.subr.mxu0 %v1236
    %v1238 = vand.u32 %v198, 4294901760
    %v1239 = vsub.f32 %v198, %v1238
    %v1240 = vand.u32 %v1239, 4294901760
    %1241 = vmatpush2.msra.mxu0 %v1240
    %v1242 = vand.u32 %v195, 4294901760
    %v1243 = vsub.f32 %v195, %v1242
    %v1244 = vand.u32 %v1243, 4294901760
    %1245 = vmatprep.subr.mxu0 %v1244
    %v1246 = vand.u32 %v194, 4294901760
    %v1247 = vsub.f32 %v194, %v1246
    %v1248 = vand.u32 %v1247, 4294901760
    %1249 = vmatpush2.msra.mxu0 %v1248
    %v1250 = vand.u32 %v191, 4294901760
    %v1251 = vsub.f32 %v191, %v1250
    %v1252 = vand.u32 %v1251, 4294901760
    %1253 = vmatprep.subr.mxu0 %v1252
    %v1254 = vand.u32 %v190, 4294901760
    %v1255 = vsub.f32 %v190, %v1254
    %v1256 = vand.u32 %v1255, 4294901760
    %1257 = vmatpush2.msra.mxu0 %v1256
    %v1258 = vand.u32 %v187, 4294901760
    %v1259 = vsub.f32 %v187, %v1258
    %v1260 = vand.u32 %v1259, 4294901760
    %1261 = vmatprep.subr.mxu0 %v1260
    %v1262 = vand.u32 %v186, 4294901760
    %v1263 = vsub.f32 %v186, %v1262
    %v1264 = vand.u32 %v1263, 4294901760
    %1265 = vmatpush2.msra.mxu0 %v1264
    %v1266 = vand.u32 %v183, 4294901760
    %v1267 = vsub.f32 %v183, %v1266
    %v1268 = vand.u32 %v1267, 4294901760
    %1269 = vmatprep.subr.mxu0 %v1268
    %v1270 = vand.u32 %v182, 4294901760
    %v1271 = vsub.f32 %v182, %v1270
    %v1272 = vand.u32 %v1271, 4294901760
    %1273 = vmatpush2.msra.mxu0 %v1272
    %v1274 = vand.u32 %v179, 4294901760
    %v1275 = vsub.f32 %v179, %v1274
    %v1276 = vand.u32 %v1275, 4294901760
    %1277 = vmatprep.subr.mxu0 %v1276
    %v1278 = vand.u32 %v178, 4294901760
    %v1279 = vsub.f32 %v178, %v1278
    %v1280 = vand.u32 %v1279, 4294901760
    %1281 = vmatpush2.msra.mxu0 %v1280
    %v1282 = vand.u32 %v175, 4294901760
    %v1283 = vsub.f32 %v175, %v1282
    %v1284 = vand.u32 %v1283, 4294901760
    %1285 = vmatprep.subr.mxu0 %v1284
    %v1286 = vand.u32 %v174, 4294901760
    %v1287 = vsub.f32 %v174, %v1286
    %v1288 = vand.u32 %v1287, 4294901760
    %1289 = vmatpush2.msra.mxu0 %v1288
    %v1290 = vand.u32 %v171, 4294901760
    %v1291 = vsub.f32 %v171, %v1290
    %v1292 = vand.u32 %v1291, 4294901760
    %1293 = vmatprep.subr.mxu0 %v1292
    %v1294 = vand.u32 %v170, 4294901760
    %v1295 = vsub.f32 %v170, %v1294
    %v1296 = vand.u32 %v1295, 4294901760
    %1297 = vmatpush2.msra.mxu0 %v1296
    %v1298 = vand.u32 %v167, 4294901760
    %v1299 = vsub.f32 %v167, %v1298
    %v1300 = vand.u32 %v1299, 4294901760
    %1301 = vmatprep.subr.mxu0 %v1300
    %v1302 = vand.u32 %v166, 4294901760
    %v1303 = vsub.f32 %v166, %v1302
    %v1304 = vand.u32 %v1303, 4294901760
    %1305 = vmatpush2.msra.mxu0 %v1304
    %v1306 = vand.u32 %v163, 4294901760
    %v1307 = vsub.f32 %v163, %v1306
    %v1308 = vand.u32 %v1307, 4294901760
    %1309 = vmatprep.subr.mxu0 %v1308
    %v1310 = vand.u32 %v162, 4294901760
    %v1311 = vsub.f32 %v162, %v1310
    %v1312 = vand.u32 %v1311, 4294901760
    %1313 = vmatpush2.msra.mxu0 %v1312
    %v1314 = vand.u32 %v159, 4294901760
    %v1315 = vsub.f32 %v159, %v1314
    %v1316 = vand.u32 %v1315, 4294901760
    %1317 = vmatprep.subr.mxu0 %v1316
    %v1318 = vand.u32 %v158, 4294901760
    %v1319 = vsub.f32 %v158, %v1318
    %v1320 = vand.u32 %v1319, 4294901760
    %1321 = vmatpush2.msra.mxu0 %v1320
    %v1322 = vand.u32 %v155, 4294901760
    %v1323 = vsub.f32 %v155, %v1322
    %v1324 = vand.u32 %v1323, 4294901760
    %1325 = vmatprep.subr.mxu0 %v1324
    %v1326 = vand.u32 %v154, 4294901760
    %v1327 = vsub.f32 %v154, %v1326
    %v1328 = vand.u32 %v1327, 4294901760
    %1329 = vmatpush2.msra.mxu0 %v1328
    %v1330 = vand.u32 %v151, 4294901760
    %v1331 = vsub.f32 %v151, %v1330
    %v1332 = vand.u32 %v1331, 4294901760
    %1333 = vmatprep.subr.mxu0 %v1332
    %v1334 = vand.u32 %v150, 4294901760
    %v1335 = vsub.f32 %v150, %v1334
    %v1336 = vand.u32 %v1335, 4294901760
    %1337 = vmatpush2.msra.mxu0 %v1336
    %v1338 = vand.u32 %v147, 4294901760
    %v1339 = vsub.f32 %v147, %v1338
    %v1340 = vand.u32 %v1339, 4294901760
    %1341 = vmatprep.subr.mxu0 %v1340
    %v1342 = vand.u32 %v146, 4294901760
    %v1343 = vsub.f32 %v146, %v1342
    %v1344 = vand.u32 %v1343, 4294901760
    %1345 = vmatpush2.msra.mxu0 %v1344
    %v1346 = vand.u32 %v143, 4294901760
    %v1347 = vsub.f32 %v143, %v1346
    %v1348 = vand.u32 %v1347, 4294901760
    %1349 = vmatprep.subr.mxu0 %v1348
    %v1350 = vand.u32 %v142, 4294901760
    %v1351 = vsub.f32 %v142, %v1350
    %v1352 = vand.u32 %v1351, 4294901760
    %1353 = vmatpush2.msra.mxu0 %v1352
    %v1354 = vand.u32 %v139, 4294901760
    %v1355 = vsub.f32 %v139, %v1354
    %v1356 = vand.u32 %v1355, 4294901760
    %1357 = vmatprep.subr.mxu0 %v1356
    %v1358 = vand.u32 %v138, 4294901760
    %v1359 = vsub.f32 %v138, %v1358
    %v1360 = vand.u32 %v1359, 4294901760
    %1361 = vmatpush2.msra.mxu0 %v1360
    %v1362 = vand.u32 %v73, 4294901760
    %1363 = vmatprep.mubr.f32.mxu0 %v1362
    %v1364 = vand.u32 %v72, 4294901760
    %1365 = vmatmul.mubr.f32.gmra.mxu0 %v1364
    %v1366 = vpop.f32.mrf.mxu0
    %v1367 = vadd.f32 %v1102, %v1366
    %v1368 = vpop.f32.mrf.mxu0
    %v1369 = vadd.f32 %v1104, %v1368
    %1370 = vdwg.mxu0
    %v1371 = vand.u32 %v135, 4294901760
    %1372 = vmatprep.subr.mxu0 %v1371
    %v1373 = vand.u32 %v134, 4294901760
    %1374 = vmatpush1.msra.mxu0 %v1373
    %v1375 = vand.u32 %v131, 4294901760
    %1376 = vmatprep.subr.mxu0 %v1375
    %v1377 = vand.u32 %v130, 4294901760
    %1378 = vmatpush1.msra.mxu0 %v1377
    %v1379 = vand.u32 %v127, 4294901760
    %1380 = vmatprep.subr.mxu0 %v1379
    %v1381 = vand.u32 %v126, 4294901760
    %1382 = vmatpush1.msra.mxu0 %v1381
    %v1383 = vand.u32 %v123, 4294901760
    %1384 = vmatprep.subr.mxu0 %v1383
    %v1385 = vand.u32 %v122, 4294901760
    %1386 = vmatpush1.msra.mxu0 %v1385
    %v1387 = vand.u32 %v119, 4294901760
    %1388 = vmatprep.subr.mxu0 %v1387
    %v1389 = vand.u32 %v118, 4294901760
    %1390 = vmatpush1.msra.mxu0 %v1389
    %v1391 = vand.u32 %v115, 4294901760
    %1392 = vmatprep.subr.mxu0 %v1391
    %v1393 = vand.u32 %v114, 4294901760
    %1394 = vmatpush1.msra.mxu0 %v1393
    %v1395 = vand.u32 %v111, 4294901760
    %1396 = vmatprep.subr.mxu0 %v1395
    %v1397 = vand.u32 %v110, 4294901760
    %1398 = vmatpush1.msra.mxu0 %v1397
    %v1399 = vand.u32 %v107, 4294901760
    %1400 = vmatprep.subr.mxu0 %v1399
    %v1401 = vand.u32 %v106, 4294901760
    %1402 = vmatpush1.msra.mxu0 %v1401
    %v1403 = vand.u32 %v103, 4294901760
    %1404 = vmatprep.subr.mxu0 %v1403
    %v1405 = vand.u32 %v102, 4294901760
    %1406 = vmatpush1.msra.mxu0 %v1405
    %v1407 = vand.u32 %v99, 4294901760
    %1408 = vmatprep.subr.mxu0 %v1407
    %v1409 = vand.u32 %v98, 4294901760
    %1410 = vmatpush1.msra.mxu0 %v1409
    %v1411 = vand.u32 %v95, 4294901760
    %1412 = vmatprep.subr.mxu0 %v1411
    %v1413 = vand.u32 %v94, 4294901760
    %1414 = vmatpush1.msra.mxu0 %v1413
    %v1415 = vand.u32 %v91, 4294901760
    %1416 = vmatprep.subr.mxu0 %v1415
    %v1417 = vand.u32 %v90, 4294901760
    %1418 = vmatpush1.msra.mxu0 %v1417
    %v1419 = vand.u32 %v87, 4294901760
    %1420 = vmatprep.subr.mxu0 %v1419
    %v1421 = vand.u32 %v86, 4294901760
    %1422 = vmatpush1.msra.mxu0 %v1421
    %v1423 = vand.u32 %v83, 4294901760
    %1424 = vmatprep.subr.mxu0 %v1423
    %v1425 = vand.u32 %v82, 4294901760
    %1426 = vmatpush1.msra.mxu0 %v1425
    %v1427 = vand.u32 %v79, 4294901760
    %1428 = vmatprep.subr.mxu0 %v1427
    %v1429 = vand.u32 %v78, 4294901760
    %1430 = vmatpush1.msra.mxu0 %v1429
    %v1431 = vand.u32 %v75, 4294901760
    %1432 = vmatprep.subr.mxu0 %v1431
    %v1433 = vand.u32 %v74, 4294901760
    %1434 = vmatpush1.msra.mxu0 %v1433
    %v1435 = vand.u32 %v199, 4294901760
    %1436 = vmatprep.subr.mxu0 %v1435
    %v1437 = vand.u32 %v198, 4294901760
    %1438 = vmatpush2.msra.mxu0 %v1437
    %v1439 = vand.u32 %v195, 4294901760
    %1440 = vmatprep.subr.mxu0 %v1439
    %v1441 = vand.u32 %v194, 4294901760
    %1442 = vmatpush2.msra.mxu0 %v1441
    %v1443 = vand.u32 %v191, 4294901760
    %1444 = vmatprep.subr.mxu0 %v1443
    %v1445 = vand.u32 %v190, 4294901760
    %1446 = vmatpush2.msra.mxu0 %v1445
    %v1447 = vand.u32 %v187, 4294901760
    %1448 = vmatprep.subr.mxu0 %v1447
    %v1449 = vand.u32 %v186, 4294901760
    %1450 = vmatpush2.msra.mxu0 %v1449
    %v1451 = vand.u32 %v183, 4294901760
    %1452 = vmatprep.subr.mxu0 %v1451
    %v1453 = vand.u32 %v182, 4294901760
    %1454 = vmatpush2.msra.mxu0 %v1453
    %v1455 = vand.u32 %v179, 4294901760
    %1456 = vmatprep.subr.mxu0 %v1455
    %v1457 = vand.u32 %v178, 4294901760
    %1458 = vmatpush2.msra.mxu0 %v1457
    %v1459 = vand.u32 %v175, 4294901760
    %1460 = vmatprep.subr.mxu0 %v1459
    %v1461 = vand.u32 %v174, 4294901760
    %1462 = vmatpush2.msra.mxu0 %v1461
    %v1463 = vand.u32 %v171, 4294901760
    %1464 = vmatprep.subr.mxu0 %v1463
    %v1465 = vand.u32 %v170, 4294901760
    %1466 = vmatpush2.msra.mxu0 %v1465
    %v1467 = vand.u32 %v167, 4294901760
    %1468 = vmatprep.subr.mxu0 %v1467
    %v1469 = vand.u32 %v166, 4294901760
    %1470 = vmatpush2.msra.mxu0 %v1469
    %v1471 = vand.u32 %v163, 4294901760
    %1472 = vmatprep.subr.mxu0 %v1471
    %v1473 = vand.u32 %v162, 4294901760
    %1474 = vmatpush2.msra.mxu0 %v1473
    %v1475 = vand.u32 %v159, 4294901760
    %1476 = vmatprep.subr.mxu0 %v1475
    %v1477 = vand.u32 %v158, 4294901760
    %1478 = vmatpush2.msra.mxu0 %v1477
    %v1479 = vand.u32 %v155, 4294901760
    %1480 = vmatprep.subr.mxu0 %v1479
    %v1481 = vand.u32 %v154, 4294901760
    %1482 = vmatpush2.msra.mxu0 %v1481
    %v1483 = vand.u32 %v151, 4294901760
    %1484 = vmatprep.subr.mxu0 %v1483
    %v1485 = vand.u32 %v150, 4294901760
    %1486 = vmatpush2.msra.mxu0 %v1485
    %v1487 = vand.u32 %v147, 4294901760
    %1488 = vmatprep.subr.mxu0 %v1487
    %v1489 = vand.u32 %v146, 4294901760
    %1490 = vmatpush2.msra.mxu0 %v1489
    %v1491 = vand.u32 %v143, 4294901760
    %1492 = vmatprep.subr.mxu0 %v1491
    %v1493 = vand.u32 %v142, 4294901760
    %1494 = vmatpush2.msra.mxu0 %v1493
    %v1495 = vand.u32 %v139, 4294901760
    %1496 = vmatprep.subr.mxu0 %v1495
    %v1497 = vand.u32 %v138, 4294901760
    %1498 = vmatpush2.msra.mxu0 %v1497
    %v1499 = vand.u32 %v73, 4294901760
    %1500 = vmatprep.mubr.f32.mxu0 %v1499
    %v1501 = vand.u32 %v72, 4294901760
    %1502 = vmatmul.mubr.f32.gmra.mxu0 %v1501
    %v1503 = vpop.f32.mrf.mxu0
    %v1504 = vadd.f32 %v1367, %v1503
    %v1505 = vpop.f32.mrf.mxu0
    %v1506 = vadd.f32 %v1369, %v1505
    %1507 = vdwg.mxu0
    %v1508 = vand.u32 %v137, 4294901760
    %1509 = vmatprep.subr.mxu0 %v1508
    %v1510 = vand.u32 %v136, 4294901760
    %1511 = vmatpush1.msra.mxu0 %v1510
    %v1512 = vand.u32 %v133, 4294901760
    %1513 = vmatprep.subr.mxu0 %v1512
    %v1514 = vand.u32 %v132, 4294901760
    %1515 = vmatpush1.msra.mxu0 %v1514
    %v1516 = vand.u32 %v129, 4294901760
    %1517 = vmatprep.subr.mxu0 %v1516
    %v1518 = vand.u32 %v128, 4294901760
    %1519 = vmatpush1.msra.mxu0 %v1518
    %v1520 = vand.u32 %v125, 4294901760
    %1521 = vmatprep.subr.mxu0 %v1520
    %v1522 = vand.u32 %v124, 4294901760
    %1523 = vmatpush1.msra.mxu0 %v1522
    %v1524 = vand.u32 %v121, 4294901760
    %1525 = vmatprep.subr.mxu0 %v1524
    %v1526 = vand.u32 %v120, 4294901760
    %1527 = vmatpush1.msra.mxu0 %v1526
    %v1528 = vand.u32 %v117, 4294901760
    %1529 = vmatprep.subr.mxu0 %v1528
    %v1530 = vand.u32 %v116, 4294901760
    %1531 = vmatpush1.msra.mxu0 %v1530
    %v1532 = vand.u32 %v113, 4294901760
    %1533 = vmatprep.subr.mxu0 %v1532
    %v1534 = vand.u32 %v112, 4294901760
    %1535 = vmatpush1.msra.mxu0 %v1534
    %v1536 = vand.u32 %v109, 4294901760
    %1537 = vmatprep.subr.mxu0 %v1536
    %v1538 = vand.u32 %v108, 4294901760
    %1539 = vmatpush1.msra.mxu0 %v1538
    %v1540 = vand.u32 %v105, 4294901760
    %1541 = vmatprep.subr.mxu0 %v1540
    %v1542 = vand.u32 %v104, 4294901760
    %1543 = vmatpush1.msra.mxu0 %v1542
    %v1544 = vand.u32 %v101, 4294901760
    %1545 = vmatprep.subr.mxu0 %v1544
    %v1546 = vand.u32 %v100, 4294901760
    %1547 = vmatpush1.msra.mxu0 %v1546
    %v1548 = vand.u32 %v97, 4294901760
    %1549 = vmatprep.subr.mxu0 %v1548
    %v1550 = vand.u32 %v96, 4294901760
    %1551 = vmatpush1.msra.mxu0 %v1550
    %v1552 = vand.u32 %v93, 4294901760
    %1553 = vmatprep.subr.mxu0 %v1552
    %v1554 = vand.u32 %v92, 4294901760
    %1555 = vmatpush1.msra.mxu0 %v1554
    %v1556 = vand.u32 %v89, 4294901760
    %1557 = vmatprep.subr.mxu0 %v1556
    %v1558 = vand.u32 %v88, 4294901760
    %1559 = vmatpush1.msra.mxu0 %v1558
    %v1560 = vand.u32 %v85, 4294901760
    %1561 = vmatprep.subr.mxu0 %v1560
    %v1562 = vand.u32 %v84, 4294901760
    %1563 = vmatpush1.msra.mxu0 %v1562
    %v1564 = vand.u32 %v81, 4294901760
    %1565 = vmatprep.subr.mxu0 %v1564
    %v1566 = vand.u32 %v80, 4294901760
    %1567 = vmatpush1.msra.mxu0 %v1566
    %v1568 = vand.u32 %v77, 4294901760
    %1569 = vmatprep.subr.mxu0 %v1568
    %v1570 = vand.u32 %v76, 4294901760
    %1571 = vmatpush1.msra.mxu0 %v1570
    %v1572 = vand.u32 %v201, 4294901760
    %1573 = vmatprep.subr.mxu0 %v1572
    %v1574 = vand.u32 %v200, 4294901760
    %1575 = vmatpush2.msra.mxu0 %v1574
    %v1576 = vand.u32 %v197, 4294901760
    %1577 = vmatprep.subr.mxu0 %v1576
    %v1578 = vand.u32 %v196, 4294901760
    %1579 = vmatpush2.msra.mxu0 %v1578
    %v1580 = vand.u32 %v193, 4294901760
    %1581 = vmatprep.subr.mxu0 %v1580
    %v1582 = vand.u32 %v192, 4294901760
    %1583 = vmatpush2.msra.mxu0 %v1582
    %v1584 = vand.u32 %v189, 4294901760
    %1585 = vmatprep.subr.mxu0 %v1584
    %v1586 = vand.u32 %v188, 4294901760
    %1587 = vmatpush2.msra.mxu0 %v1586
    %v1588 = vand.u32 %v185, 4294901760
    %1589 = vmatprep.subr.mxu0 %v1588
    %v1590 = vand.u32 %v184, 4294901760
    %1591 = vmatpush2.msra.mxu0 %v1590
    %v1592 = vand.u32 %v181, 4294901760
    %1593 = vmatprep.subr.mxu0 %v1592
    %v1594 = vand.u32 %v180, 4294901760
    %1595 = vmatpush2.msra.mxu0 %v1594
    %v1596 = vand.u32 %v177, 4294901760
    %1597 = vmatprep.subr.mxu0 %v1596
    %v1598 = vand.u32 %v176, 4294901760
    %1599 = vmatpush2.msra.mxu0 %v1598
    %v1600 = vand.u32 %v173, 4294901760
    %1601 = vmatprep.subr.mxu0 %v1600
    %v1602 = vand.u32 %v172, 4294901760
    %1603 = vmatpush2.msra.mxu0 %v1602
    %v1604 = vand.u32 %v169, 4294901760
    %1605 = vmatprep.subr.mxu0 %v1604
    %v1606 = vand.u32 %v168, 4294901760
    %1607 = vmatpush2.msra.mxu0 %v1606
    %v1608 = vand.u32 %v165, 4294901760
    %1609 = vmatprep.subr.mxu0 %v1608
    %v1610 = vand.u32 %v164, 4294901760
    %1611 = vmatpush2.msra.mxu0 %v1610
    %v1612 = vand.u32 %v161, 4294901760
    %1613 = vmatprep.subr.mxu0 %v1612
    %v1614 = vand.u32 %v160, 4294901760
    %1615 = vmatpush2.msra.mxu0 %v1614
    %v1616 = vand.u32 %v157, 4294901760
    %1617 = vmatprep.subr.mxu0 %v1616
    %v1618 = vand.u32 %v156, 4294901760
    %1619 = vmatpush2.msra.mxu0 %v1618
    %v1620 = vand.u32 %v153, 4294901760
    %1621 = vmatprep.subr.mxu0 %v1620
    %v1622 = vand.u32 %v152, 4294901760
    %1623 = vmatpush2.msra.mxu0 %v1622
    %v1624 = vand.u32 %v149, 4294901760
    %1625 = vmatprep.subr.mxu0 %v1624
    %v1626 = vand.u32 %v148, 4294901760
    %1627 = vmatpush2.msra.mxu0 %v1626
    %v1628 = vand.u32 %v145, 4294901760
    %1629 = vmatprep.subr.mxu0 %v1628
    %v1630 = vand.u32 %v144, 4294901760
    %1631 = vmatpush2.msra.mxu0 %v1630
    %v1632 = vand.u32 %v141, 4294901760
    %1633 = vmatprep.subr.mxu0 %v1632
    %v1634 = vand.u32 %v140, 4294901760
    %1635 = vmatpush2.msra.mxu0 %v1634
    %v1636 = vand.u32 %v73, 4294901760
    %v1637 = vsub.f32 %v73, %v1636
    %v1638 = vand.u32 %v1637, 4294901760
    %v1639 = vsub.f32 %v1637, %v1638
    %v1640 = vand.u32 %v1639, 4294901760
    %1641 = vmatprep.mubr.f32.mxu0 %v1640
    %v1642 = vand.u32 %v72, 4294901760
    %v1643 = vsub.f32 %v72, %v1642
    %v1644 = vand.u32 %v1643, 4294901760
    %v1645 = vsub.f32 %v1643, %v1644
    %v1646 = vand.u32 %v1645, 4294901760
    %1647 = vmatmul.mubr.f32.gmra.mxu0 %v1646
    %v1648 = vpop.f32.mrf.mxu0
    %v1649 = vadd.f32 %v215, %v1648
    %v1650 = vpop.f32.mrf.mxu0
    %v1651 = vadd.f32 %v219, %v1650
    %1652 = vdwg.mxu0
    %v1653 = vand.u32 %v137, 4294901760
    %v1654 = vsub.f32 %v137, %v1653
    %v1655 = vand.u32 %v1654, 4294901760
    %v1656 = vsub.f32 %v1654, %v1655
    %v1657 = vand.u32 %v1656, 4294901760
    %1658 = vmatprep.subr.mxu0 %v1657
    %v1659 = vand.u32 %v136, 4294901760
    %v1660 = vsub.f32 %v136, %v1659
    %v1661 = vand.u32 %v1660, 4294901760
    %v1662 = vsub.f32 %v1660, %v1661
    %v1663 = vand.u32 %v1662, 4294901760
    %1664 = vmatpush1.msra.mxu0 %v1663
    %v1665 = vand.u32 %v133, 4294901760
    %v1666 = vsub.f32 %v133, %v1665
    %v1667 = vand.u32 %v1666, 4294901760
    %v1668 = vsub.f32 %v1666, %v1667
    %v1669 = vand.u32 %v1668, 4294901760
    %1670 = vmatprep.subr.mxu0 %v1669
    %v1671 = vand.u32 %v132, 4294901760
    %v1672 = vsub.f32 %v132, %v1671
    %v1673 = vand.u32 %v1672, 4294901760
    %v1674 = vsub.f32 %v1672, %v1673
    %v1675 = vand.u32 %v1674, 4294901760
    %1676 = vmatpush1.msra.mxu0 %v1675
    %v1677 = vand.u32 %v129, 4294901760
    %v1678 = vsub.f32 %v129, %v1677
    %v1679 = vand.u32 %v1678, 4294901760
    %v1680 = vsub.f32 %v1678, %v1679
    %v1681 = vand.u32 %v1680, 4294901760
    %1682 = vmatprep.subr.mxu0 %v1681
    %v1683 = vand.u32 %v128, 4294901760
    %v1684 = vsub.f32 %v128, %v1683
    %v1685 = vand.u32 %v1684, 4294901760
    %v1686 = vsub.f32 %v1684, %v1685
    %v1687 = vand.u32 %v1686, 4294901760
    %1688 = vmatpush1.msra.mxu0 %v1687
    %v1689 = vand.u32 %v125, 4294901760
    %v1690 = vsub.f32 %v125, %v1689
    %v1691 = vand.u32 %v1690, 4294901760
    %v1692 = vsub.f32 %v1690, %v1691
    %v1693 = vand.u32 %v1692, 4294901760
    %1694 = vmatprep.subr.mxu0 %v1693
    %v1695 = vand.u32 %v124, 4294901760
    %v1696 = vsub.f32 %v124, %v1695
    %v1697 = vand.u32 %v1696, 4294901760
    %v1698 = vsub.f32 %v1696, %v1697
    %v1699 = vand.u32 %v1698, 4294901760
    %1700 = vmatpush1.msra.mxu0 %v1699
    %v1701 = vand.u32 %v121, 4294901760
    %v1702 = vsub.f32 %v121, %v1701
    %v1703 = vand.u32 %v1702, 4294901760
    %v1704 = vsub.f32 %v1702, %v1703
    %v1705 = vand.u32 %v1704, 4294901760
    %1706 = vmatprep.subr.mxu0 %v1705
    %v1707 = vand.u32 %v120, 4294901760
    %v1708 = vsub.f32 %v120, %v1707
    %v1709 = vand.u32 %v1708, 4294901760
    %v1710 = vsub.f32 %v1708, %v1709
    %v1711 = vand.u32 %v1710, 4294901760
    %1712 = vmatpush1.msra.mxu0 %v1711
    %v1713 = vand.u32 %v117, 4294901760
    %v1714 = vsub.f32 %v117, %v1713
    %v1715 = vand.u32 %v1714, 4294901760
    %v1716 = vsub.f32 %v1714, %v1715
    %v1717 = vand.u32 %v1716, 4294901760
    %1718 = vmatprep.subr.mxu0 %v1717
    %v1719 = vand.u32 %v116, 4294901760
    %v1720 = vsub.f32 %v116, %v1719
    %v1721 = vand.u32 %v1720, 4294901760
    %v1722 = vsub.f32 %v1720, %v1721
    %v1723 = vand.u32 %v1722, 4294901760
    %1724 = vmatpush1.msra.mxu0 %v1723
    %v1725 = vand.u32 %v113, 4294901760
    %v1726 = vsub.f32 %v113, %v1725
    %v1727 = vand.u32 %v1726, 4294901760
    %v1728 = vsub.f32 %v1726, %v1727
    %v1729 = vand.u32 %v1728, 4294901760
    %1730 = vmatprep.subr.mxu0 %v1729
    %v1731 = vand.u32 %v112, 4294901760
    %v1732 = vsub.f32 %v112, %v1731
    %v1733 = vand.u32 %v1732, 4294901760
    %v1734 = vsub.f32 %v1732, %v1733
    %v1735 = vand.u32 %v1734, 4294901760
    %1736 = vmatpush1.msra.mxu0 %v1735
    %v1737 = vand.u32 %v109, 4294901760
    %v1738 = vsub.f32 %v109, %v1737
    %v1739 = vand.u32 %v1738, 4294901760
    %v1740 = vsub.f32 %v1738, %v1739
    %v1741 = vand.u32 %v1740, 4294901760
    %1742 = vmatprep.subr.mxu0 %v1741
    %v1743 = vand.u32 %v108, 4294901760
    %v1744 = vsub.f32 %v108, %v1743
    %v1745 = vand.u32 %v1744, 4294901760
    %v1746 = vsub.f32 %v1744, %v1745
    %v1747 = vand.u32 %v1746, 4294901760
    %1748 = vmatpush1.msra.mxu0 %v1747
    %v1749 = vand.u32 %v105, 4294901760
    %v1750 = vsub.f32 %v105, %v1749
    %v1751 = vand.u32 %v1750, 4294901760
    %v1752 = vsub.f32 %v1750, %v1751
    %v1753 = vand.u32 %v1752, 4294901760
    %1754 = vmatprep.subr.mxu0 %v1753
    %v1755 = vand.u32 %v104, 4294901760
    %v1756 = vsub.f32 %v104, %v1755
    %v1757 = vand.u32 %v1756, 4294901760
    %v1758 = vsub.f32 %v1756, %v1757
    %v1759 = vand.u32 %v1758, 4294901760
    %1760 = vmatpush1.msra.mxu0 %v1759
    %v1761 = vand.u32 %v101, 4294901760
    %v1762 = vsub.f32 %v101, %v1761
    %v1763 = vand.u32 %v1762, 4294901760
    %v1764 = vsub.f32 %v1762, %v1763
    %v1765 = vand.u32 %v1764, 4294901760
    %1766 = vmatprep.subr.mxu0 %v1765
    %v1767 = vand.u32 %v100, 4294901760
    %v1768 = vsub.f32 %v100, %v1767
    %v1769 = vand.u32 %v1768, 4294901760
    %v1770 = vsub.f32 %v1768, %v1769
    %v1771 = vand.u32 %v1770, 4294901760
    %1772 = vmatpush1.msra.mxu0 %v1771
    %v1773 = vand.u32 %v97, 4294901760
    %v1774 = vsub.f32 %v97, %v1773
    %v1775 = vand.u32 %v1774, 4294901760
    %v1776 = vsub.f32 %v1774, %v1775
    %v1777 = vand.u32 %v1776, 4294901760
    %1778 = vmatprep.subr.mxu0 %v1777
    %v1779 = vand.u32 %v96, 4294901760
    %v1780 = vsub.f32 %v96, %v1779
    %v1781 = vand.u32 %v1780, 4294901760
    %v1782 = vsub.f32 %v1780, %v1781
    %v1783 = vand.u32 %v1782, 4294901760
    %1784 = vmatpush1.msra.mxu0 %v1783
    %v1785 = vand.u32 %v93, 4294901760
    %v1786 = vsub.f32 %v93, %v1785
    %v1787 = vand.u32 %v1786, 4294901760
    %v1788 = vsub.f32 %v1786, %v1787
    %v1789 = vand.u32 %v1788, 4294901760
    %1790 = vmatprep.subr.mxu0 %v1789
    %v1791 = vand.u32 %v92, 4294901760
    %v1792 = vsub.f32 %v92, %v1791
    %v1793 = vand.u32 %v1792, 4294901760
    %v1794 = vsub.f32 %v1792, %v1793
    %v1795 = vand.u32 %v1794, 4294901760
    %1796 = vmatpush1.msra.mxu0 %v1795
    %v1797 = vand.u32 %v89, 4294901760
    %v1798 = vsub.f32 %v89, %v1797
    %v1799 = vand.u32 %v1798, 4294901760
    %v1800 = vsub.f32 %v1798, %v1799
    %v1801 = vand.u32 %v1800, 4294901760
    %1802 = vmatprep.subr.mxu0 %v1801
    %v1803 = vand.u32 %v88, 4294901760
    %v1804 = vsub.f32 %v88, %v1803
    %v1805 = vand.u32 %v1804, 4294901760
    %v1806 = vsub.f32 %v1804, %v1805
    %v1807 = vand.u32 %v1806, 4294901760
    %1808 = vmatpush1.msra.mxu0 %v1807
    %v1809 = vand.u32 %v85, 4294901760
    %v1810 = vsub.f32 %v85, %v1809
    %v1811 = vand.u32 %v1810, 4294901760
    %v1812 = vsub.f32 %v1810, %v1811
    %v1813 = vand.u32 %v1812, 4294901760
    %1814 = vmatprep.subr.mxu0 %v1813
    %v1815 = vand.u32 %v84, 4294901760
    %v1816 = vsub.f32 %v84, %v1815
    %v1817 = vand.u32 %v1816, 4294901760
    %v1818 = vsub.f32 %v1816, %v1817
    %v1819 = vand.u32 %v1818, 4294901760
    %1820 = vmatpush1.msra.mxu0 %v1819
    %v1821 = vand.u32 %v81, 4294901760
    %v1822 = vsub.f32 %v81, %v1821
    %v1823 = vand.u32 %v1822, 4294901760
    %v1824 = vsub.f32 %v1822, %v1823
    %v1825 = vand.u32 %v1824, 4294901760
    %1826 = vmatprep.subr.mxu0 %v1825
    %v1827 = vand.u32 %v80, 4294901760
    %v1828 = vsub.f32 %v80, %v1827
    %v1829 = vand.u32 %v1828, 4294901760
    %v1830 = vsub.f32 %v1828, %v1829
    %v1831 = vand.u32 %v1830, 4294901760
    %1832 = vmatpush1.msra.mxu0 %v1831
    %v1833 = vand.u32 %v77, 4294901760
    %v1834 = vsub.f32 %v77, %v1833
    %v1835 = vand.u32 %v1834, 4294901760
    %v1836 = vsub.f32 %v1834, %v1835
    %v1837 = vand.u32 %v1836, 4294901760
    %1838 = vmatprep.subr.mxu0 %v1837
    %v1839 = vand.u32 %v76, 4294901760
    %v1840 = vsub.f32 %v76, %v1839
    %v1841 = vand.u32 %v1840, 4294901760
    %v1842 = vsub.f32 %v1840, %v1841
    %v1843 = vand.u32 %v1842, 4294901760
    %1844 = vmatpush1.msra.mxu0 %v1843
    %v1845 = vand.u32 %v201, 4294901760
    %v1846 = vsub.f32 %v201, %v1845
    %v1847 = vand.u32 %v1846, 4294901760
    %v1848 = vsub.f32 %v1846, %v1847
    %v1849 = vand.u32 %v1848, 4294901760
    %1850 = vmatprep.subr.mxu0 %v1849
    %v1851 = vand.u32 %v200, 4294901760
    %v1852 = vsub.f32 %v200, %v1851
    %v1853 = vand.u32 %v1852, 4294901760
    %v1854 = vsub.f32 %v1852, %v1853
    %v1855 = vand.u32 %v1854, 4294901760
    %1856 = vmatpush2.msra.mxu0 %v1855
    %v1857 = vand.u32 %v197, 4294901760
    %v1858 = vsub.f32 %v197, %v1857
    %v1859 = vand.u32 %v1858, 4294901760
    %v1860 = vsub.f32 %v1858, %v1859
    %v1861 = vand.u32 %v1860, 4294901760
    %1862 = vmatprep.subr.mxu0 %v1861
    %v1863 = vand.u32 %v196, 4294901760
    %v1864 = vsub.f32 %v196, %v1863
    %v1865 = vand.u32 %v1864, 4294901760
    %v1866 = vsub.f32 %v1864, %v1865
    %v1867 = vand.u32 %v1866, 4294901760
    %1868 = vmatpush2.msra.mxu0 %v1867
    %v1869 = vand.u32 %v193, 4294901760
    %v1870 = vsub.f32 %v193, %v1869
    %v1871 = vand.u32 %v1870, 4294901760
    %v1872 = vsub.f32 %v1870, %v1871
    %v1873 = vand.u32 %v1872, 4294901760
    %1874 = vmatprep.subr.mxu0 %v1873
    %v1875 = vand.u32 %v192, 4294901760
    %v1876 = vsub.f32 %v192, %v1875
    %v1877 = vand.u32 %v1876, 4294901760
    %v1878 = vsub.f32 %v1876, %v1877
    %v1879 = vand.u32 %v1878, 4294901760
    %1880 = vmatpush2.msra.mxu0 %v1879
    %v1881 = vand.u32 %v189, 4294901760
    %v1882 = vsub.f32 %v189, %v1881
    %v1883 = vand.u32 %v1882, 4294901760
    %v1884 = vsub.f32 %v1882, %v1883
    %v1885 = vand.u32 %v1884, 4294901760
    %1886 = vmatprep.subr.mxu0 %v1885
    %v1887 = vand.u32 %v188, 4294901760
    %v1888 = vsub.f32 %v188, %v1887
    %v1889 = vand.u32 %v1888, 4294901760
    %v1890 = vsub.f32 %v1888, %v1889
    %v1891 = vand.u32 %v1890, 4294901760
    %1892 = vmatpush2.msra.mxu0 %v1891
    %v1893 = vand.u32 %v185, 4294901760
    %v1894 = vsub.f32 %v185, %v1893
    %v1895 = vand.u32 %v1894, 4294901760
    %v1896 = vsub.f32 %v1894, %v1895
    %v1897 = vand.u32 %v1896, 4294901760
    %1898 = vmatprep.subr.mxu0 %v1897
    %v1899 = vand.u32 %v184, 4294901760
    %v1900 = vsub.f32 %v184, %v1899
    %v1901 = vand.u32 %v1900, 4294901760
    %v1902 = vsub.f32 %v1900, %v1901
    %v1903 = vand.u32 %v1902, 4294901760
    %1904 = vmatpush2.msra.mxu0 %v1903
    %v1905 = vand.u32 %v181, 4294901760
    %v1906 = vsub.f32 %v181, %v1905
    %v1907 = vand.u32 %v1906, 4294901760
    %v1908 = vsub.f32 %v1906, %v1907
    %v1909 = vand.u32 %v1908, 4294901760
    %1910 = vmatprep.subr.mxu0 %v1909
    %v1911 = vand.u32 %v180, 4294901760
    %v1912 = vsub.f32 %v180, %v1911
    %v1913 = vand.u32 %v1912, 4294901760
    %v1914 = vsub.f32 %v1912, %v1913
    %v1915 = vand.u32 %v1914, 4294901760
    %1916 = vmatpush2.msra.mxu0 %v1915
    %v1917 = vand.u32 %v177, 4294901760
    %v1918 = vsub.f32 %v177, %v1917
    %v1919 = vand.u32 %v1918, 4294901760
    %v1920 = vsub.f32 %v1918, %v1919
    %v1921 = vand.u32 %v1920, 4294901760
    %1922 = vmatprep.subr.mxu0 %v1921
    %v1923 = vand.u32 %v176, 4294901760
    %v1924 = vsub.f32 %v176, %v1923
    %v1925 = vand.u32 %v1924, 4294901760
    %v1926 = vsub.f32 %v1924, %v1925
    %v1927 = vand.u32 %v1926, 4294901760
    %1928 = vmatpush2.msra.mxu0 %v1927
    %v1929 = vand.u32 %v173, 4294901760
    %v1930 = vsub.f32 %v173, %v1929
    %v1931 = vand.u32 %v1930, 4294901760
    %v1932 = vsub.f32 %v1930, %v1931
    %v1933 = vand.u32 %v1932, 4294901760
    %1934 = vmatprep.subr.mxu0 %v1933
    %v1935 = vand.u32 %v172, 4294901760
    %v1936 = vsub.f32 %v172, %v1935
    %v1937 = vand.u32 %v1936, 4294901760
    %v1938 = vsub.f32 %v1936, %v1937
    %v1939 = vand.u32 %v1938, 4294901760
    %1940 = vmatpush2.msra.mxu0 %v1939
    %v1941 = vand.u32 %v169, 4294901760
    %v1942 = vsub.f32 %v169, %v1941
    %v1943 = vand.u32 %v1942, 4294901760
    %v1944 = vsub.f32 %v1942, %v1943
    %v1945 = vand.u32 %v1944, 4294901760
    %1946 = vmatprep.subr.mxu0 %v1945
    %v1947 = vand.u32 %v168, 4294901760
    %v1948 = vsub.f32 %v168, %v1947
    %v1949 = vand.u32 %v1948, 4294901760
    %v1950 = vsub.f32 %v1948, %v1949
    %v1951 = vand.u32 %v1950, 4294901760
    %1952 = vmatpush2.msra.mxu0 %v1951
    %v1953 = vand.u32 %v165, 4294901760
    %v1954 = vsub.f32 %v165, %v1953
    %v1955 = vand.u32 %v1954, 4294901760
    %v1956 = vsub.f32 %v1954, %v1955
    %v1957 = vand.u32 %v1956, 4294901760
    %1958 = vmatprep.subr.mxu0 %v1957
    %v1959 = vand.u32 %v164, 4294901760
    %v1960 = vsub.f32 %v164, %v1959
    %v1961 = vand.u32 %v1960, 4294901760
    %v1962 = vsub.f32 %v1960, %v1961
    %v1963 = vand.u32 %v1962, 4294901760
    %1964 = vmatpush2.msra.mxu0 %v1963
    %v1965 = vand.u32 %v161, 4294901760
    %v1966 = vsub.f32 %v161, %v1965
    %v1967 = vand.u32 %v1966, 4294901760
    %v1968 = vsub.f32 %v1966, %v1967
    %v1969 = vand.u32 %v1968, 4294901760
    %1970 = vmatprep.subr.mxu0 %v1969
    %v1971 = vand.u32 %v160, 4294901760
    %v1972 = vsub.f32 %v160, %v1971
    %v1973 = vand.u32 %v1972, 4294901760
    %v1974 = vsub.f32 %v1972, %v1973
    %v1975 = vand.u32 %v1974, 4294901760
    %1976 = vmatpush2.msra.mxu0 %v1975
    %v1977 = vand.u32 %v157, 4294901760
    %v1978 = vsub.f32 %v157, %v1977
    %v1979 = vand.u32 %v1978, 4294901760
    %v1980 = vsub.f32 %v1978, %v1979
    %v1981 = vand.u32 %v1980, 4294901760
    %1982 = vmatprep.subr.mxu0 %v1981
    %v1983 = vand.u32 %v156, 4294901760
    %v1984 = vsub.f32 %v156, %v1983
    %v1985 = vand.u32 %v1984, 4294901760
    %v1986 = vsub.f32 %v1984, %v1985
    %v1987 = vand.u32 %v1986, 4294901760
    %1988 = vmatpush2.msra.mxu0 %v1987
    %v1989 = vand.u32 %v153, 4294901760
    %v1990 = vsub.f32 %v153, %v1989
    %v1991 = vand.u32 %v1990, 4294901760
    %v1992 = vsub.f32 %v1990, %v1991
    %v1993 = vand.u32 %v1992, 4294901760
    %1994 = vmatprep.subr.mxu0 %v1993
    %v1995 = vand.u32 %v152, 4294901760
    %v1996 = vsub.f32 %v152, %v1995
    %v1997 = vand.u32 %v1996, 4294901760
    %v1998 = vsub.f32 %v1996, %v1997
    %v1999 = vand.u32 %v1998, 4294901760
    %2000 = vmatpush2.msra.mxu0 %v1999
    %v2001 = vand.u32 %v149, 4294901760
    %v2002 = vsub.f32 %v149, %v2001
    %v2003 = vand.u32 %v2002, 4294901760
    %v2004 = vsub.f32 %v2002, %v2003
    %v2005 = vand.u32 %v2004, 4294901760
    %2006 = vmatprep.subr.mxu0 %v2005
    %v2007 = vand.u32 %v148, 4294901760
    %v2008 = vsub.f32 %v148, %v2007
    %v2009 = vand.u32 %v2008, 4294901760
    %v2010 = vsub.f32 %v2008, %v2009
    %v2011 = vand.u32 %v2010, 4294901760
    %2012 = vmatpush2.msra.mxu0 %v2011
    %v2013 = vand.u32 %v145, 4294901760
    %v2014 = vsub.f32 %v145, %v2013
    %v2015 = vand.u32 %v2014, 4294901760
    %v2016 = vsub.f32 %v2014, %v2015
    %v2017 = vand.u32 %v2016, 4294901760
    %2018 = vmatprep.subr.mxu0 %v2017
    %v2019 = vand.u32 %v144, 4294901760
    %v2020 = vsub.f32 %v144, %v2019
    %v2021 = vand.u32 %v2020, 4294901760
    %v2022 = vsub.f32 %v2020, %v2021
    %v2023 = vand.u32 %v2022, 4294901760
    %2024 = vmatpush2.msra.mxu0 %v2023
    %v2025 = vand.u32 %v141, 4294901760
    %v2026 = vsub.f32 %v141, %v2025
    %v2027 = vand.u32 %v2026, 4294901760
    %v2028 = vsub.f32 %v2026, %v2027
    %v2029 = vand.u32 %v2028, 4294901760
    %2030 = vmatprep.subr.mxu0 %v2029
    %v2031 = vand.u32 %v140, 4294901760
    %v2032 = vsub.f32 %v140, %v2031
    %v2033 = vand.u32 %v2032, 4294901760
    %v2034 = vsub.f32 %v2032, %v2033
    %v2035 = vand.u32 %v2034, 4294901760
    %2036 = vmatpush2.msra.mxu0 %v2035
    %v2037 = vand.u32 %v73, 4294901760
    %2038 = vmatprep.mubr.f32.mxu0 %v2037
    %v2039 = vand.u32 %v72, 4294901760
    %2040 = vmatmul.mubr.f32.gmra.mxu0 %v2039
    %v2041 = vpop.f32.mrf.mxu0
    %v2042 = vadd.f32 %v1649, %v2041
    %v2043 = vpop.f32.mrf.mxu0
    %v2044 = vadd.f32 %v1651, %v2043
    %2045 = vdwg.mxu0
    %v2046 = vand.u32 %v137, 4294901760
    %v2047 = vsub.f32 %v137, %v2046
    %2048 = vmatprep.subr.mxu0 %v2047
    %v2049 = vand.u32 %v136, 4294901760
    %v2050 = vsub.f32 %v136, %v2049
    %2051 = vmatpush1.msra.mxu0 %v2050
    %v2052 = vand.u32 %v133, 4294901760
    %v2053 = vsub.f32 %v133, %v2052
    %2054 = vmatprep.subr.mxu0 %v2053
    %v2055 = vand.u32 %v132, 4294901760
    %v2056 = vsub.f32 %v132, %v2055
    %2057 = vmatpush1.msra.mxu0 %v2056
    %v2058 = vand.u32 %v129, 4294901760
    %v2059 = vsub.f32 %v129, %v2058
    %2060 = vmatprep.subr.mxu0 %v2059
    %v2061 = vand.u32 %v128, 4294901760
    %v2062 = vsub.f32 %v128, %v2061
    %2063 = vmatpush1.msra.mxu0 %v2062
    %v2064 = vand.u32 %v125, 4294901760
    %v2065 = vsub.f32 %v125, %v2064
    %2066 = vmatprep.subr.mxu0 %v2065
    %v2067 = vand.u32 %v124, 4294901760
    %v2068 = vsub.f32 %v124, %v2067
    %2069 = vmatpush1.msra.mxu0 %v2068
    %v2070 = vand.u32 %v121, 4294901760
    %v2071 = vsub.f32 %v121, %v2070
    %2072 = vmatprep.subr.mxu0 %v2071
    %v2073 = vand.u32 %v120, 4294901760
    %v2074 = vsub.f32 %v120, %v2073
    %2075 = vmatpush1.msra.mxu0 %v2074
    %v2076 = vand.u32 %v117, 4294901760
    %v2077 = vsub.f32 %v117, %v2076
    %2078 = vmatprep.subr.mxu0 %v2077
    %v2079 = vand.u32 %v116, 4294901760
    %v2080 = vsub.f32 %v116, %v2079
    %2081 = vmatpush1.msra.mxu0 %v2080
    %v2082 = vand.u32 %v113, 4294901760
    %v2083 = vsub.f32 %v113, %v2082
    %2084 = vmatprep.subr.mxu0 %v2083
    %v2085 = vand.u32 %v112, 4294901760
    %v2086 = vsub.f32 %v112, %v2085
    %2087 = vmatpush1.msra.mxu0 %v2086
    %v2088 = vand.u32 %v109, 4294901760
    %v2089 = vsub.f32 %v109, %v2088
    %2090 = vmatprep.subr.mxu0 %v2089
    %v2091 = vand.u32 %v108, 4294901760
    %v2092 = vsub.f32 %v108, %v2091
    %2093 = vmatpush1.msra.mxu0 %v2092
    %v2094 = vand.u32 %v105, 4294901760
    %v2095 = vsub.f32 %v105, %v2094
    %2096 = vmatprep.subr.mxu0 %v2095
    %v2097 = vand.u32 %v104, 4294901760
    %v2098 = vsub.f32 %v104, %v2097
    %2099 = vmatpush1.msra.mxu0 %v2098
    %v2100 = vand.u32 %v101, 4294901760
    %v2101 = vsub.f32 %v101, %v2100
    %2102 = vmatprep.subr.mxu0 %v2101
    %v2103 = vand.u32 %v100, 4294901760
    %v2104 = vsub.f32 %v100, %v2103
    %2105 = vmatpush1.msra.mxu0 %v2104
    %v2106 = vand.u32 %v97, 4294901760
    %v2107 = vsub.f32 %v97, %v2106
    %2108 = vmatprep.subr.mxu0 %v2107
    %v2109 = vand.u32 %v96, 4294901760
    %v2110 = vsub.f32 %v96, %v2109
    %2111 = vmatpush1.msra.mxu0 %v2110
    %v2112 = vand.u32 %v93, 4294901760
    %v2113 = vsub.f32 %v93, %v2112
    %2114 = vmatprep.subr.mxu0 %v2113
    %v2115 = vand.u32 %v92, 4294901760
    %v2116 = vsub.f32 %v92, %v2115
    %2117 = vmatpush1.msra.mxu0 %v2116
    %v2118 = vand.u32 %v89, 4294901760
    %v2119 = vsub.f32 %v89, %v2118
    %2120 = vmatprep.subr.mxu0 %v2119
    %v2121 = vand.u32 %v88, 4294901760
    %v2122 = vsub.f32 %v88, %v2121
    %2123 = vmatpush1.msra.mxu0 %v2122
    %v2124 = vand.u32 %v85, 4294901760
    %v2125 = vsub.f32 %v85, %v2124
    %2126 = vmatprep.subr.mxu0 %v2125
    %v2127 = vand.u32 %v84, 4294901760
    %v2128 = vsub.f32 %v84, %v2127
    %2129 = vmatpush1.msra.mxu0 %v2128
    %v2130 = vand.u32 %v81, 4294901760
    %v2131 = vsub.f32 %v81, %v2130
    %2132 = vmatprep.subr.mxu0 %v2131
    %v2133 = vand.u32 %v80, 4294901760
    %v2134 = vsub.f32 %v80, %v2133
    %2135 = vmatpush1.msra.mxu0 %v2134
    %v2136 = vand.u32 %v77, 4294901760
    %v2137 = vsub.f32 %v77, %v2136
    %2138 = vmatprep.subr.mxu0 %v2137
    %v2139 = vand.u32 %v76, 4294901760
    %v2140 = vsub.f32 %v76, %v2139
    %2141 = vmatpush1.msra.mxu0 %v2140
    %v2142 = vand.u32 %v201, 4294901760
    %v2143 = vsub.f32 %v201, %v2142
    %2144 = vmatprep.subr.mxu0 %v2143
    %v2145 = vand.u32 %v200, 4294901760
    %v2146 = vsub.f32 %v200, %v2145
    %2147 = vmatpush2.msra.mxu0 %v2146
    %v2148 = vand.u32 %v197, 4294901760
    %v2149 = vsub.f32 %v197, %v2148
    %2150 = vmatprep.subr.mxu0 %v2149
    %v2151 = vand.u32 %v196, 4294901760
    %v2152 = vsub.f32 %v196, %v2151
    %2153 = vmatpush2.msra.mxu0 %v2152
    %v2154 = vand.u32 %v193, 4294901760
    %v2155 = vsub.f32 %v193, %v2154
    %2156 = vmatprep.subr.mxu0 %v2155
    %v2157 = vand.u32 %v192, 4294901760
    %v2158 = vsub.f32 %v192, %v2157
    %2159 = vmatpush2.msra.mxu0 %v2158
    %v2160 = vand.u32 %v189, 4294901760
    %v2161 = vsub.f32 %v189, %v2160
    %2162 = vmatprep.subr.mxu0 %v2161
    %v2163 = vand.u32 %v188, 4294901760
    %v2164 = vsub.f32 %v188, %v2163
    %2165 = vmatpush2.msra.mxu0 %v2164
    %v2166 = vand.u32 %v185, 4294901760
    %v2167 = vsub.f32 %v185, %v2166
    %2168 = vmatprep.subr.mxu0 %v2167
    %v2169 = vand.u32 %v184, 4294901760
    %v2170 = vsub.f32 %v184, %v2169
    %2171 = vmatpush2.msra.mxu0 %v2170
    %v2172 = vand.u32 %v181, 4294901760
    %v2173 = vsub.f32 %v181, %v2172
    %2174 = vmatprep.subr.mxu0 %v2173
    %v2175 = vand.u32 %v180, 4294901760
    %v2176 = vsub.f32 %v180, %v2175
    %2177 = vmatpush2.msra.mxu0 %v2176
    %v2178 = vand.u32 %v177, 4294901760
    %v2179 = vsub.f32 %v177, %v2178
    %2180 = vmatprep.subr.mxu0 %v2179
    %v2181 = vand.u32 %v176, 4294901760
    %v2182 = vsub.f32 %v176, %v2181
    %2183 = vmatpush2.msra.mxu0 %v2182
    %v2184 = vand.u32 %v173, 4294901760
    %v2185 = vsub.f32 %v173, %v2184
    %2186 = vmatprep.subr.mxu0 %v2185
    %v2187 = vand.u32 %v172, 4294901760
    %v2188 = vsub.f32 %v172, %v2187
    %2189 = vmatpush2.msra.mxu0 %v2188
    %v2190 = vand.u32 %v169, 4294901760
    %v2191 = vsub.f32 %v169, %v2190
    %2192 = vmatprep.subr.mxu0 %v2191
    %v2193 = vand.u32 %v168, 4294901760
    %v2194 = vsub.f32 %v168, %v2193
    %2195 = vmatpush2.msra.mxu0 %v2194
    %v2196 = vand.u32 %v165, 4294901760
    %v2197 = vsub.f32 %v165, %v2196
    %2198 = vmatprep.subr.mxu0 %v2197
    %v2199 = vand.u32 %v164, 4294901760
    %v2200 = vsub.f32 %v164, %v2199
    %2201 = vmatpush2.msra.mxu0 %v2200
    %v2202 = vand.u32 %v161, 4294901760
    %v2203 = vsub.f32 %v161, %v2202
    %2204 = vmatprep.subr.mxu0 %v2203
    %v2205 = vand.u32 %v160, 4294901760
    %v2206 = vsub.f32 %v160, %v2205
    %2207 = vmatpush2.msra.mxu0 %v2206
    %v2208 = vand.u32 %v157, 4294901760
    %v2209 = vsub.f32 %v157, %v2208
    %2210 = vmatprep.subr.mxu0 %v2209
    %v2211 = vand.u32 %v156, 4294901760
    %v2212 = vsub.f32 %v156, %v2211
    %2213 = vmatpush2.msra.mxu0 %v2212
    %v2214 = vand.u32 %v153, 4294901760
    %v2215 = vsub.f32 %v153, %v2214
    %2216 = vmatprep.subr.mxu0 %v2215
    %v2217 = vand.u32 %v152, 4294901760
    %v2218 = vsub.f32 %v152, %v2217
    %2219 = vmatpush2.msra.mxu0 %v2218
    %v2220 = vand.u32 %v149, 4294901760
    %v2221 = vsub.f32 %v149, %v2220
    %2222 = vmatprep.subr.mxu0 %v2221
    %v2223 = vand.u32 %v148, 4294901760
    %v2224 = vsub.f32 %v148, %v2223
    %2225 = vmatpush2.msra.mxu0 %v2224
    %v2226 = vand.u32 %v145, 4294901760
    %v2227 = vsub.f32 %v145, %v2226
    %2228 = vmatprep.subr.mxu0 %v2227
    %v2229 = vand.u32 %v144, 4294901760
    %v2230 = vsub.f32 %v144, %v2229
    %2231 = vmatpush2.msra.mxu0 %v2230
    %v2232 = vand.u32 %v141, 4294901760
    %v2233 = vsub.f32 %v141, %v2232
    %2234 = vmatprep.subr.mxu0 %v2233
    %v2235 = vand.u32 %v140, 4294901760
    %v2236 = vsub.f32 %v140, %v2235
    %2237 = vmatpush2.msra.mxu0 %v2236
    %v2238 = vand.u32 %v73, 4294901760
    %v2239 = vsub.f32 %v73, %v2238
    %2240 = vmatprep.mubr.f32.mxu0 %v2239
    %v2241 = vand.u32 %v72, 4294901760
    %v2242 = vsub.f32 %v72, %v2241
    %2243 = vmatmul.mubr.f32.gmra.mxu0 %v2242
    %v2244 = vpop.f32.mrf.mxu0
    %v2245 = vadd.f32 %v2042, %v2244
    %v2246 = vpop.f32.mrf.mxu0
    %v2247 = vadd.f32 %v2044, %v2246
    %2248 = vdwg.mxu0
    %v2249 = vand.u32 %v137, 4294901760
    %2250 = vmatprep.subr.mxu0 %v2249
    %v2251 = vand.u32 %v136, 4294901760
    %2252 = vmatpush1.msra.mxu0 %v2251
    %v2253 = vand.u32 %v133, 4294901760
    %2254 = vmatprep.subr.mxu0 %v2253
    %v2255 = vand.u32 %v132, 4294901760
    %2256 = vmatpush1.msra.mxu0 %v2255
    %v2257 = vand.u32 %v129, 4294901760
    %2258 = vmatprep.subr.mxu0 %v2257
    %v2259 = vand.u32 %v128, 4294901760
    %2260 = vmatpush1.msra.mxu0 %v2259
    %v2261 = vand.u32 %v125, 4294901760
    %2262 = vmatprep.subr.mxu0 %v2261
    %v2263 = vand.u32 %v124, 4294901760
    %2264 = vmatpush1.msra.mxu0 %v2263
    %v2265 = vand.u32 %v121, 4294901760
    %2266 = vmatprep.subr.mxu0 %v2265
    %v2267 = vand.u32 %v120, 4294901760
    %2268 = vmatpush1.msra.mxu0 %v2267
    %v2269 = vand.u32 %v117, 4294901760
    %2270 = vmatprep.subr.mxu0 %v2269
    %v2271 = vand.u32 %v116, 4294901760
    %2272 = vmatpush1.msra.mxu0 %v2271
    %v2273 = vand.u32 %v113, 4294901760
    %2274 = vmatprep.subr.mxu0 %v2273
    %v2275 = vand.u32 %v112, 4294901760
    %2276 = vmatpush1.msra.mxu0 %v2275
    %v2277 = vand.u32 %v109, 4294901760
    %2278 = vmatprep.subr.mxu0 %v2277
    %v2279 = vand.u32 %v108, 4294901760
    %2280 = vmatpush1.msra.mxu0 %v2279
    %v2281 = vand.u32 %v105, 4294901760
    %2282 = vmatprep.subr.mxu0 %v2281
    %v2283 = vand.u32 %v104, 4294901760
    %2284 = vmatpush1.msra.mxu0 %v2283
    %v2285 = vand.u32 %v101, 4294901760
    %2286 = vmatprep.subr.mxu0 %v2285
    %v2287 = vand.u32 %v100, 4294901760
    %2288 = vmatpush1.msra.mxu0 %v2287
    %v2289 = vand.u32 %v97, 4294901760
    %2290 = vmatprep.subr.mxu0 %v2289
    %v2291 = vand.u32 %v96, 4294901760
    %2292 = vmatpush1.msra.mxu0 %v2291
    %v2293 = vand.u32 %v93, 4294901760
    %2294 = vmatprep.subr.mxu0 %v2293
    %v2295 = vand.u32 %v92, 4294901760
    %2296 = vmatpush1.msra.mxu0 %v2295
    %v2297 = vand.u32 %v89, 4294901760
    %2298 = vmatprep.subr.mxu0 %v2297
    %v2299 = vand.u32 %v88, 4294901760
    %2300 = vmatpush1.msra.mxu0 %v2299
    %v2301 = vand.u32 %v85, 4294901760
    %2302 = vmatprep.subr.mxu0 %v2301
    %v2303 = vand.u32 %v84, 4294901760
    %2304 = vmatpush1.msra.mxu0 %v2303
    %v2305 = vand.u32 %v81, 4294901760
    %2306 = vmatprep.subr.mxu0 %v2305
    %v2307 = vand.u32 %v80, 4294901760
    %2308 = vmatpush1.msra.mxu0 %v2307
    %v2309 = vand.u32 %v77, 4294901760
    %2310 = vmatprep.subr.mxu0 %v2309
    %v2311 = vand.u32 %v76, 4294901760
    %2312 = vmatpush1.msra.mxu0 %v2311
    %v2313 = vand.u32 %v201, 4294901760
    %2314 = vmatprep.subr.mxu0 %v2313
    %v2315 = vand.u32 %v200, 4294901760
    %2316 = vmatpush2.msra.mxu0 %v2315
    %v2317 = vand.u32 %v197, 4294901760
    %2318 = vmatprep.subr.mxu0 %v2317
    %v2319 = vand.u32 %v196, 4294901760
    %2320 = vmatpush2.msra.mxu0 %v2319
    %v2321 = vand.u32 %v193, 4294901760
    %2322 = vmatprep.subr.mxu0 %v2321
    %v2323 = vand.u32 %v192, 4294901760
    %2324 = vmatpush2.msra.mxu0 %v2323
    %v2325 = vand.u32 %v189, 4294901760
    %2326 = vmatprep.subr.mxu0 %v2325
    %v2327 = vand.u32 %v188, 4294901760
    %2328 = vmatpush2.msra.mxu0 %v2327
    %v2329 = vand.u32 %v185, 4294901760
    %2330 = vmatprep.subr.mxu0 %v2329
    %v2331 = vand.u32 %v184, 4294901760
    %2332 = vmatpush2.msra.mxu0 %v2331
    %v2333 = vand.u32 %v181, 4294901760
    %2334 = vmatprep.subr.mxu0 %v2333
    %v2335 = vand.u32 %v180, 4294901760
    %2336 = vmatpush2.msra.mxu0 %v2335
    %v2337 = vand.u32 %v177, 4294901760
    %2338 = vmatprep.subr.mxu0 %v2337
    %v2339 = vand.u32 %v176, 4294901760
    %2340 = vmatpush2.msra.mxu0 %v2339
    %v2341 = vand.u32 %v173, 4294901760
    %2342 = vmatprep.subr.mxu0 %v2341
    %v2343 = vand.u32 %v172, 4294901760
    %2344 = vmatpush2.msra.mxu0 %v2343
    %v2345 = vand.u32 %v169, 4294901760
    %2346 = vmatprep.subr.mxu0 %v2345
    %v2347 = vand.u32 %v168, 4294901760
    %2348 = vmatpush2.msra.mxu0 %v2347
    %v2349 = vand.u32 %v165, 4294901760
    %2350 = vmatprep.subr.mxu0 %v2349
    %v2351 = vand.u32 %v164, 4294901760
    %2352 = vmatpush2.msra.mxu0 %v2351
    %v2353 = vand.u32 %v161, 4294901760
    %2354 = vmatprep.subr.mxu0 %v2353
    %v2355 = vand.u32 %v160, 4294901760
    %2356 = vmatpush2.msra.mxu0 %v2355
    %v2357 = vand.u32 %v157, 4294901760
    %2358 = vmatprep.subr.mxu0 %v2357
    %v2359 = vand.u32 %v156, 4294901760
    %2360 = vmatpush2.msra.mxu0 %v2359
    %v2361 = vand.u32 %v153, 4294901760
    %2362 = vmatprep.subr.mxu0 %v2361
    %v2363 = vand.u32 %v152, 4294901760
    %2364 = vmatpush2.msra.mxu0 %v2363
    %v2365 = vand.u32 %v149, 4294901760
    %2366 = vmatprep.subr.mxu0 %v2365
    %v2367 = vand.u32 %v148, 4294901760
    %2368 = vmatpush2.msra.mxu0 %v2367
    %v2369 = vand.u32 %v145, 4294901760
    %2370 = vmatprep.subr.mxu0 %v2369
    %v2371 = vand.u32 %v144, 4294901760
    %2372 = vmatpush2.msra.mxu0 %v2371
    %v2373 = vand.u32 %v141, 4294901760
    %2374 = vmatprep.subr.mxu0 %v2373
    %v2375 = vand.u32 %v140, 4294901760
    %2376 = vmatpush2.msra.mxu0 %v2375
    %v2377 = vand.u32 %v73, 4294901760
    %v2378 = vsub.f32 %v73, %v2377
    %v2379 = vand.u32 %v2378, 4294901760
    %2380 = vmatprep.mubr.f32.mxu0 %v2379
    %v2381 = vand.u32 %v72, 4294901760
    %v2382 = vsub.f32 %v72, %v2381
    %v2383 = vand.u32 %v2382, 4294901760
    %2384 = vmatmul.mubr.f32.gmra.mxu0 %v2383
    %v2385 = vpop.f32.mrf.mxu0
    %v2386 = vadd.f32 %v2245, %v2385
    %v2387 = vpop.f32.mrf.mxu0
    %v2388 = vadd.f32 %v2247, %v2387
    %2389 = vdwg.mxu0
    %v2390 = vand.u32 %v137, 4294901760
    %v2391 = vsub.f32 %v137, %v2390
    %v2392 = vand.u32 %v2391, 4294901760
    %2393 = vmatprep.subr.mxu0 %v2392
    %v2394 = vand.u32 %v136, 4294901760
    %v2395 = vsub.f32 %v136, %v2394
    %v2396 = vand.u32 %v2395, 4294901760
    %2397 = vmatpush1.msra.mxu0 %v2396
    %v2398 = vand.u32 %v133, 4294901760
    %v2399 = vsub.f32 %v133, %v2398
    %v2400 = vand.u32 %v2399, 4294901760
    %2401 = vmatprep.subr.mxu0 %v2400
    %v2402 = vand.u32 %v132, 4294901760
    %v2403 = vsub.f32 %v132, %v2402
    %v2404 = vand.u32 %v2403, 4294901760
    %2405 = vmatpush1.msra.mxu0 %v2404
    %v2406 = vand.u32 %v129, 4294901760
    %v2407 = vsub.f32 %v129, %v2406
    %v2408 = vand.u32 %v2407, 4294901760
    %2409 = vmatprep.subr.mxu0 %v2408
    %v2410 = vand.u32 %v128, 4294901760
    %v2411 = vsub.f32 %v128, %v2410
    %v2412 = vand.u32 %v2411, 4294901760
    %2413 = vmatpush1.msra.mxu0 %v2412
    %v2414 = vand.u32 %v125, 4294901760
    %v2415 = vsub.f32 %v125, %v2414
    %v2416 = vand.u32 %v2415, 4294901760
    %2417 = vmatprep.subr.mxu0 %v2416
    %v2418 = vand.u32 %v124, 4294901760
    %v2419 = vsub.f32 %v124, %v2418
    %v2420 = vand.u32 %v2419, 4294901760
    %2421 = vmatpush1.msra.mxu0 %v2420
    %v2422 = vand.u32 %v121, 4294901760
    %v2423 = vsub.f32 %v121, %v2422
    %v2424 = vand.u32 %v2423, 4294901760
    %2425 = vmatprep.subr.mxu0 %v2424
    %v2426 = vand.u32 %v120, 4294901760
    %v2427 = vsub.f32 %v120, %v2426
    %v2428 = vand.u32 %v2427, 4294901760
    %2429 = vmatpush1.msra.mxu0 %v2428
    %v2430 = vand.u32 %v117, 4294901760
    %v2431 = vsub.f32 %v117, %v2430
    %v2432 = vand.u32 %v2431, 4294901760
    %2433 = vmatprep.subr.mxu0 %v2432
    %v2434 = vand.u32 %v116, 4294901760
    %v2435 = vsub.f32 %v116, %v2434
    %v2436 = vand.u32 %v2435, 4294901760
    %2437 = vmatpush1.msra.mxu0 %v2436
    %v2438 = vand.u32 %v113, 4294901760
    %v2439 = vsub.f32 %v113, %v2438
    %v2440 = vand.u32 %v2439, 4294901760
    %2441 = vmatprep.subr.mxu0 %v2440
    %v2442 = vand.u32 %v112, 4294901760
    %v2443 = vsub.f32 %v112, %v2442
    %v2444 = vand.u32 %v2443, 4294901760
    %2445 = vmatpush1.msra.mxu0 %v2444
    %v2446 = vand.u32 %v109, 4294901760
    %v2447 = vsub.f32 %v109, %v2446
    %v2448 = vand.u32 %v2447, 4294901760
    %2449 = vmatprep.subr.mxu0 %v2448
    %v2450 = vand.u32 %v108, 4294901760
    %v2451 = vsub.f32 %v108, %v2450
    %v2452 = vand.u32 %v2451, 4294901760
    %2453 = vmatpush1.msra.mxu0 %v2452
    %v2454 = vand.u32 %v105, 4294901760
    %v2455 = vsub.f32 %v105, %v2454
    %v2456 = vand.u32 %v2455, 4294901760
    %2457 = vmatprep.subr.mxu0 %v2456
    %v2458 = vand.u32 %v104, 4294901760
    %v2459 = vsub.f32 %v104, %v2458
    %v2460 = vand.u32 %v2459, 4294901760
    %2461 = vmatpush1.msra.mxu0 %v2460
    %v2462 = vand.u32 %v101, 4294901760
    %v2463 = vsub.f32 %v101, %v2462
    %v2464 = vand.u32 %v2463, 4294901760
    %2465 = vmatprep.subr.mxu0 %v2464
    %v2466 = vand.u32 %v100, 4294901760
    %v2467 = vsub.f32 %v100, %v2466
    %v2468 = vand.u32 %v2467, 4294901760
    %2469 = vmatpush1.msra.mxu0 %v2468
    %v2470 = vand.u32 %v97, 4294901760
    %v2471 = vsub.f32 %v97, %v2470
    %v2472 = vand.u32 %v2471, 4294901760
    %2473 = vmatprep.subr.mxu0 %v2472
    %v2474 = vand.u32 %v96, 4294901760
    %v2475 = vsub.f32 %v96, %v2474
    %v2476 = vand.u32 %v2475, 4294901760
    %2477 = vmatpush1.msra.mxu0 %v2476
    %v2478 = vand.u32 %v93, 4294901760
    %v2479 = vsub.f32 %v93, %v2478
    %v2480 = vand.u32 %v2479, 4294901760
    %2481 = vmatprep.subr.mxu0 %v2480
    %v2482 = vand.u32 %v92, 4294901760
    %v2483 = vsub.f32 %v92, %v2482
    %v2484 = vand.u32 %v2483, 4294901760
    %2485 = vmatpush1.msra.mxu0 %v2484
    %v2486 = vand.u32 %v89, 4294901760
    %v2487 = vsub.f32 %v89, %v2486
    %v2488 = vand.u32 %v2487, 4294901760
    %2489 = vmatprep.subr.mxu0 %v2488
    %v2490 = vand.u32 %v88, 4294901760
    %v2491 = vsub.f32 %v88, %v2490
    %v2492 = vand.u32 %v2491, 4294901760
    %2493 = vmatpush1.msra.mxu0 %v2492
    %v2494 = vand.u32 %v85, 4294901760
    %v2495 = vsub.f32 %v85, %v2494
    %v2496 = vand.u32 %v2495, 4294901760
    %2497 = vmatprep.subr.mxu0 %v2496
    %v2498 = vand.u32 %v84, 4294901760
    %v2499 = vsub.f32 %v84, %v2498
    %v2500 = vand.u32 %v2499, 4294901760
    %2501 = vmatpush1.msra.mxu0 %v2500
    %v2502 = vand.u32 %v81, 4294901760
    %v2503 = vsub.f32 %v81, %v2502
    %v2504 = vand.u32 %v2503, 4294901760
    %2505 = vmatprep.subr.mxu0 %v2504
    %v2506 = vand.u32 %v80, 4294901760
    %v2507 = vsub.f32 %v80, %v2506
    %v2508 = vand.u32 %v2507, 4294901760
    %2509 = vmatpush1.msra.mxu0 %v2508
    %v2510 = vand.u32 %v77, 4294901760
    %v2511 = vsub.f32 %v77, %v2510
    %v2512 = vand.u32 %v2511, 4294901760
    %2513 = vmatprep.subr.mxu0 %v2512
    %v2514 = vand.u32 %v76, 4294901760
    %v2515 = vsub.f32 %v76, %v2514
    %v2516 = vand.u32 %v2515, 4294901760
    %2517 = vmatpush1.msra.mxu0 %v2516
    %v2518 = vand.u32 %v201, 4294901760
    %v2519 = vsub.f32 %v201, %v2518
    %v2520 = vand.u32 %v2519, 4294901760
    %2521 = vmatprep.subr.mxu0 %v2520
    %v2522 = vand.u32 %v200, 4294901760
    %v2523 = vsub.f32 %v200, %v2522
    %v2524 = vand.u32 %v2523, 4294901760
    %2525 = vmatpush2.msra.mxu0 %v2524
    %v2526 = vand.u32 %v197, 4294901760
    %v2527 = vsub.f32 %v197, %v2526
    %v2528 = vand.u32 %v2527, 4294901760
    %2529 = vmatprep.subr.mxu0 %v2528
    %v2530 = vand.u32 %v196, 4294901760
    %v2531 = vsub.f32 %v196, %v2530
    %v2532 = vand.u32 %v2531, 4294901760
    %2533 = vmatpush2.msra.mxu0 %v2532
    %v2534 = vand.u32 %v193, 4294901760
    %v2535 = vsub.f32 %v193, %v2534
    %v2536 = vand.u32 %v2535, 4294901760
    %2537 = vmatprep.subr.mxu0 %v2536
    %v2538 = vand.u32 %v192, 4294901760
    %v2539 = vsub.f32 %v192, %v2538
    %v2540 = vand.u32 %v2539, 4294901760
    %2541 = vmatpush2.msra.mxu0 %v2540
    %v2542 = vand.u32 %v189, 4294901760
    %v2543 = vsub.f32 %v189, %v2542
    %v2544 = vand.u32 %v2543, 4294901760
    %2545 = vmatprep.subr.mxu0 %v2544
    %v2546 = vand.u32 %v188, 4294901760
    %v2547 = vsub.f32 %v188, %v2546
    %v2548 = vand.u32 %v2547, 4294901760
    %2549 = vmatpush2.msra.mxu0 %v2548
    %v2550 = vand.u32 %v185, 4294901760
    %v2551 = vsub.f32 %v185, %v2550
    %v2552 = vand.u32 %v2551, 4294901760
    %2553 = vmatprep.subr.mxu0 %v2552
    %v2554 = vand.u32 %v184, 4294901760
    %v2555 = vsub.f32 %v184, %v2554
    %v2556 = vand.u32 %v2555, 4294901760
    %2557 = vmatpush2.msra.mxu0 %v2556
    %v2558 = vand.u32 %v181, 4294901760
    %v2559 = vsub.f32 %v181, %v2558
    %v2560 = vand.u32 %v2559, 4294901760
    %2561 = vmatprep.subr.mxu0 %v2560
    %v2562 = vand.u32 %v180, 4294901760
    %v2563 = vsub.f32 %v180, %v2562
    %v2564 = vand.u32 %v2563, 4294901760
    %2565 = vmatpush2.msra.mxu0 %v2564
    %v2566 = vand.u32 %v177, 4294901760
    %v2567 = vsub.f32 %v177, %v2566
    %v2568 = vand.u32 %v2567, 4294901760
    %2569 = vmatprep.subr.mxu0 %v2568
    %v2570 = vand.u32 %v176, 4294901760
    %v2571 = vsub.f32 %v176, %v2570
    %v2572 = vand.u32 %v2571, 4294901760
    %2573 = vmatpush2.msra.mxu0 %v2572
    %v2574 = vand.u32 %v173, 4294901760
    %v2575 = vsub.f32 %v173, %v2574
    %v2576 = vand.u32 %v2575, 4294901760
    %2577 = vmatprep.subr.mxu0 %v2576
    %v2578 = vand.u32 %v172, 4294901760
    %v2579 = vsub.f32 %v172, %v2578
    %v2580 = vand.u32 %v2579, 4294901760
    %2581 = vmatpush2.msra.mxu0 %v2580
    %v2582 = vand.u32 %v169, 4294901760
    %v2583 = vsub.f32 %v169, %v2582
    %v2584 = vand.u32 %v2583, 4294901760
    %2585 = vmatprep.subr.mxu0 %v2584
    %v2586 = vand.u32 %v168, 4294901760
    %v2587 = vsub.f32 %v168, %v2586
    %v2588 = vand.u32 %v2587, 4294901760
    %2589 = vmatpush2.msra.mxu0 %v2588
    %v2590 = vand.u32 %v165, 4294901760
    %v2591 = vsub.f32 %v165, %v2590
    %v2592 = vand.u32 %v2591, 4294901760
    %2593 = vmatprep.subr.mxu0 %v2592
    %v2594 = vand.u32 %v164, 4294901760
    %v2595 = vsub.f32 %v164, %v2594
    %v2596 = vand.u32 %v2595, 4294901760
    %2597 = vmatpush2.msra.mxu0 %v2596
    %v2598 = vand.u32 %v161, 4294901760
    %v2599 = vsub.f32 %v161, %v2598
    %v2600 = vand.u32 %v2599, 4294901760
    %2601 = vmatprep.subr.mxu0 %v2600
    %v2602 = vand.u32 %v160, 4294901760
    %v2603 = vsub.f32 %v160, %v2602
    %v2604 = vand.u32 %v2603, 4294901760
    %2605 = vmatpush2.msra.mxu0 %v2604
    %v2606 = vand.u32 %v157, 4294901760
    %v2607 = vsub.f32 %v157, %v2606
    %v2608 = vand.u32 %v2607, 4294901760
    %2609 = vmatprep.subr.mxu0 %v2608
    %v2610 = vand.u32 %v156, 4294901760
    %v2611 = vsub.f32 %v156, %v2610
    %v2612 = vand.u32 %v2611, 4294901760
    %2613 = vmatpush2.msra.mxu0 %v2612
    %v2614 = vand.u32 %v153, 4294901760
    %v2615 = vsub.f32 %v153, %v2614
    %v2616 = vand.u32 %v2615, 4294901760
    %2617 = vmatprep.subr.mxu0 %v2616
    %v2618 = vand.u32 %v152, 4294901760
    %v2619 = vsub.f32 %v152, %v2618
    %v2620 = vand.u32 %v2619, 4294901760
    %2621 = vmatpush2.msra.mxu0 %v2620
    %v2622 = vand.u32 %v149, 4294901760
    %v2623 = vsub.f32 %v149, %v2622
    %v2624 = vand.u32 %v2623, 4294901760
    %2625 = vmatprep.subr.mxu0 %v2624
    %v2626 = vand.u32 %v148, 4294901760
    %v2627 = vsub.f32 %v148, %v2626
    %v2628 = vand.u32 %v2627, 4294901760
    %2629 = vmatpush2.msra.mxu0 %v2628
    %v2630 = vand.u32 %v145, 4294901760
    %v2631 = vsub.f32 %v145, %v2630
    %v2632 = vand.u32 %v2631, 4294901760
    %2633 = vmatprep.subr.mxu0 %v2632
    %v2634 = vand.u32 %v144, 4294901760
    %v2635 = vsub.f32 %v144, %v2634
    %v2636 = vand.u32 %v2635, 4294901760
    %2637 = vmatpush2.msra.mxu0 %v2636
    %v2638 = vand.u32 %v141, 4294901760
    %v2639 = vsub.f32 %v141, %v2638
    %v2640 = vand.u32 %v2639, 4294901760
    %2641 = vmatprep.subr.mxu0 %v2640
    %v2642 = vand.u32 %v140, 4294901760
    %v2643 = vsub.f32 %v140, %v2642
    %v2644 = vand.u32 %v2643, 4294901760
    %2645 = vmatpush2.msra.mxu0 %v2644
    %v2646 = vand.u32 %v73, 4294901760
    %2647 = vmatprep.mubr.f32.mxu0 %v2646
    %v2648 = vand.u32 %v72, 4294901760
    %2649 = vmatmul.mubr.f32.gmra.mxu0 %v2648
    %v2650 = vpop.f32.mrf.mxu0
    %v2651 = vadd.f32 %v2386, %v2650
    %v2652 = vpop.f32.mrf.mxu0
    %v2653 = vadd.f32 %v2388, %v2652
    %2654 = vdwg.mxu0
    %v2655 = vand.u32 %v137, 4294901760
    %2656 = vmatprep.subr.mxu0 %v2655
    %v2657 = vand.u32 %v136, 4294901760
    %2658 = vmatpush1.msra.mxu0 %v2657
    %v2659 = vand.u32 %v133, 4294901760
    %2660 = vmatprep.subr.mxu0 %v2659
    %v2661 = vand.u32 %v132, 4294901760
    %2662 = vmatpush1.msra.mxu0 %v2661
    %v2663 = vand.u32 %v129, 4294901760
    %2664 = vmatprep.subr.mxu0 %v2663
    %v2665 = vand.u32 %v128, 4294901760
    %2666 = vmatpush1.msra.mxu0 %v2665
    %v2667 = vand.u32 %v125, 4294901760
    %2668 = vmatprep.subr.mxu0 %v2667
    %v2669 = vand.u32 %v124, 4294901760
    %2670 = vmatpush1.msra.mxu0 %v2669
    %v2671 = vand.u32 %v121, 4294901760
    %2672 = vmatprep.subr.mxu0 %v2671
    %v2673 = vand.u32 %v120, 4294901760
    %2674 = vmatpush1.msra.mxu0 %v2673
    %v2675 = vand.u32 %v117, 4294901760
    %2676 = vmatprep.subr.mxu0 %v2675
    %v2677 = vand.u32 %v116, 4294901760
    %2678 = vmatpush1.msra.mxu0 %v2677
    %v2679 = vand.u32 %v113, 4294901760
    %2680 = vmatprep.subr.mxu0 %v2679
    %v2681 = vand.u32 %v112, 4294901760
    %2682 = vmatpush1.msra.mxu0 %v2681
    %v2683 = vand.u32 %v109, 4294901760
    %2684 = vmatprep.subr.mxu0 %v2683
    %v2685 = vand.u32 %v108, 4294901760
    %2686 = vmatpush1.msra.mxu0 %v2685
    %v2687 = vand.u32 %v105, 4294901760
    %2688 = vmatprep.subr.mxu0 %v2687
    %v2689 = vand.u32 %v104, 4294901760
    %2690 = vmatpush1.msra.mxu0 %v2689
    %v2691 = vand.u32 %v101, 4294901760
    %2692 = vmatprep.subr.mxu0 %v2691
    %v2693 = vand.u32 %v100, 4294901760
    %2694 = vmatpush1.msra.mxu0 %v2693
    %v2695 = vand.u32 %v97, 4294901760
    %2696 = vmatprep.subr.mxu0 %v2695
    %v2697 = vand.u32 %v96, 4294901760
    %2698 = vmatpush1.msra.mxu0 %v2697
    %v2699 = vand.u32 %v93, 4294901760
    %2700 = vmatprep.subr.mxu0 %v2699
    %v2701 = vand.u32 %v92, 4294901760
    %2702 = vmatpush1.msra.mxu0 %v2701
    %v2703 = vand.u32 %v89, 4294901760
    %2704 = vmatprep.subr.mxu0 %v2703
    %v2705 = vand.u32 %v88, 4294901760
    %2706 = vmatpush1.msra.mxu0 %v2705
    %v2707 = vand.u32 %v85, 4294901760
    %2708 = vmatprep.subr.mxu0 %v2707
    %v2709 = vand.u32 %v84, 4294901760
    %2710 = vmatpush1.msra.mxu0 %v2709
    %v2711 = vand.u32 %v81, 4294901760
    %2712 = vmatprep.subr.mxu0 %v2711
    %v2713 = vand.u32 %v80, 4294901760
    %2714 = vmatpush1.msra.mxu0 %v2713
    %v2715 = vand.u32 %v77, 4294901760
    %2716 = vmatprep.subr.mxu0 %v2715
    %v2717 = vand.u32 %v76, 4294901760
    %2718 = vmatpush1.msra.mxu0 %v2717
    %v2719 = vand.u32 %v201, 4294901760
    %2720 = vmatprep.subr.mxu0 %v2719
    %v2721 = vand.u32 %v200, 4294901760
    %2722 = vmatpush2.msra.mxu0 %v2721
    %v2723 = vand.u32 %v197, 4294901760
    %2724 = vmatprep.subr.mxu0 %v2723
    %v2725 = vand.u32 %v196, 4294901760
    %2726 = vmatpush2.msra.mxu0 %v2725
    %v2727 = vand.u32 %v193, 4294901760
    %2728 = vmatprep.subr.mxu0 %v2727
    %v2729 = vand.u32 %v192, 4294901760
    %2730 = vmatpush2.msra.mxu0 %v2729
    %v2731 = vand.u32 %v189, 4294901760
    %2732 = vmatprep.subr.mxu0 %v2731
    %v2733 = vand.u32 %v188, 4294901760
    %2734 = vmatpush2.msra.mxu0 %v2733
    %v2735 = vand.u32 %v185, 4294901760
    %2736 = vmatprep.subr.mxu0 %v2735
    %v2737 = vand.u32 %v184, 4294901760
    %2738 = vmatpush2.msra.mxu0 %v2737
    %v2739 = vand.u32 %v181, 4294901760
    %2740 = vmatprep.subr.mxu0 %v2739
    %v2741 = vand.u32 %v180, 4294901760
    %2742 = vmatpush2.msra.mxu0 %v2741
    %v2743 = vand.u32 %v177, 4294901760
    %2744 = vmatprep.subr.mxu0 %v2743
    %v2745 = vand.u32 %v176, 4294901760
    %2746 = vmatpush2.msra.mxu0 %v2745
    %v2747 = vand.u32 %v173, 4294901760
    %2748 = vmatprep.subr.mxu0 %v2747
    %v2749 = vand.u32 %v172, 4294901760
    %2750 = vmatpush2.msra.mxu0 %v2749
    %v2751 = vand.u32 %v169, 4294901760
    %2752 = vmatprep.subr.mxu0 %v2751
    %v2753 = vand.u32 %v168, 4294901760
    %2754 = vmatpush2.msra.mxu0 %v2753
    %v2755 = vand.u32 %v165, 4294901760
    %2756 = vmatprep.subr.mxu0 %v2755
    %v2757 = vand.u32 %v164, 4294901760
    %2758 = vmatpush2.msra.mxu0 %v2757
    %v2759 = vand.u32 %v161, 4294901760
    %2760 = vmatprep.subr.mxu0 %v2759
    %v2761 = vand.u32 %v160, 4294901760
    %2762 = vmatpush2.msra.mxu0 %v2761
    %v2763 = vand.u32 %v157, 4294901760
    %2764 = vmatprep.subr.mxu0 %v2763
    %v2765 = vand.u32 %v156, 4294901760
    %2766 = vmatpush2.msra.mxu0 %v2765
    %v2767 = vand.u32 %v153, 4294901760
    %2768 = vmatprep.subr.mxu0 %v2767
    %v2769 = vand.u32 %v152, 4294901760
    %2770 = vmatpush2.msra.mxu0 %v2769
    %v2771 = vand.u32 %v149, 4294901760
    %2772 = vmatprep.subr.mxu0 %v2771
    %v2773 = vand.u32 %v148, 4294901760
    %2774 = vmatpush2.msra.mxu0 %v2773
    %v2775 = vand.u32 %v145, 4294901760
    %2776 = vmatprep.subr.mxu0 %v2775
    %v2777 = vand.u32 %v144, 4294901760
    %2778 = vmatpush2.msra.mxu0 %v2777
    %v2779 = vand.u32 %v141, 4294901760
    %2780 = vmatprep.subr.mxu0 %v2779
    %v2781 = vand.u32 %v140, 4294901760
    %2782 = vmatpush2.msra.mxu0 %v2781
    %v2783 = vand.u32 %v73, 4294901760
    %2784 = vmatprep.mubr.f32.mxu0 %v2783
    %v2785 = vand.u32 %v72, 4294901760
    %2786 = vmatmul.mubr.f32.gmra.mxu0 %v2785
    %v2787 = vpop.f32.mrf.mxu0
    %v2788 = vadd.f32 %v2651, %v2787
    %v2789 = vpop.f32.mrf.mxu0
    %v2790 = vadd.f32 %v2653, %v2789
    %2791 = vdwg.mxu0
    %v2792 = vxor.u32 %v1504, 2147483648
    %v2793 = vmul.f32 %v2792, 1.442695
    %v2794 = vpow.pop %v2793
    %v2795 = vadd.f32 %v2794, 1.0
    %v2796 = vrcp.pop %v2795
    %v2797 = vmul.f32 1.0, %v2796
    %v2798 = vxor.u32 %v1506, 2147483648
    %v2799 = vmul.f32 %v2798, 1.442695
    %v2800 = vpow.pop %v2799
    %v2801 = vadd.f32 %v2800, 1.0
    %v2802 = vrcp.pop %v2801
    %v2803 = vmul.f32 1.0, %v2802
    %v2804 = vmul.f32 %v2797, %v2790
    %v2805 = vadd.f32 %v2788, %v2804
    %v2806 = vtanh.pop %v2805
    %v2807 = vsub.f32 1.0, %v2803
    %v2808 = vmul.f32 %v2807, %v2806
    %v2809 = vmul.f32 %v2803, %v73
    %v2810 = vadd.f32 %v2808, %v2809
    %2811 = vst [vmem:[#allocation9] sm:$0x1] %v2810
    %v2812 = vld [vmem:[#allocation7] sm:$0xff]
    %v2813 = vld [vmem:[#allocation7 + $0x8] sm:$0xff]
    %v2814 = vld [vmem:[#allocation7 + $0x10] sm:$0xff]
    %v2815 = vld [vmem:[#allocation7 + $0x18] sm:$0xff]
    %v2816 = vld [vmem:[#allocation7 + $0x20] sm:$0xff]
    %v2817 = vld [vmem:[#allocation7 + $0x28] sm:$0xff]
    %v2818 = vld [vmem:[#allocation7 + $0x30] sm:$0xff]
    %v2819 = vld [vmem:[#allocation7 + $0x38] sm:$0xff]
    %v2820 = vld [vmem:[#allocation7 + $0x40] sm:$0xff]
    %v2821 = vld [vmem:[#allocation7 + $0x48] sm:$0xff]
    %v2822 = vld [vmem:[#allocation7 + $0x50] sm:$0xff]
    %v2823 = vld [vmem:[#allocation7 + $0x58] sm:$0xff]
    %v2824 = vld [vmem:[#allocation7 + $0x60] sm:$0xff]
    %v2825 = vld [vmem:[#allocation7 + $0x68] sm:$0xff]
    %v2826 = vld [vmem:[#allocation7 + $0x70] sm:$0xff]
    %v2827 = vld [vmem:[#allocation7 + $0x78] sm:$0xff]
    %v2828 = vld [vmem:[%s5] sm:$0x1]
    %2829 = vmatprep.subr.mxu0 0.0
    %v2830 = vand.u32 %v2827, 4294901760
    %2831 = vmatpush1.msra.mxu0 %v2830
    %2832 = vmatprep.subr.mxu0 0.0
    %v2833 = vand.u32 %v2826, 4294901760
    %2834 = vmatpush1.msra.mxu0 %v2833
    %2835 = vmatprep.subr.mxu0 0.0
    %v2836 = vand.u32 %v2825, 4294901760
    %2837 = vmatpush1.msra.mxu0 %v2836
    %2838 = vmatprep.subr.mxu0 0.0
    %v2839 = vand.u32 %v2824, 4294901760
    %2840 = vmatpush1.msra.mxu0 %v2839
    %2841 = vmatprep.subr.mxu0 0.0
    %v2842 = vand.u32 %v2823, 4294901760
    %2843 = vmatpush1.msra.mxu0 %v2842
    %2844 = vmatprep.subr.mxu0 0.0
    %v2845 = vand.u32 %v2822, 4294901760
    %2846 = vmatpush1.msra.mxu0 %v2845
    %2847 = vmatprep.subr.mxu0 0.0
    %v2848 = vand.u32 %v2821, 4294901760
    %2849 = vmatpush1.msra.mxu0 %v2848
    %2850 = vmatprep.subr.mxu0 0.0
    %v2851 = vand.u32 %v2820, 4294901760
    %2852 = vmatpush1.msra.mxu0 %v2851
    %2853 = vmatprep.subr.mxu0 0.0
    %v2854 = vand.u32 %v2819, 4294901760
    %2855 = vmatpush1.msra.mxu0 %v2854
    %2856 = vmatprep.subr.mxu0 0.0
    %v2857 = vand.u32 %v2818, 4294901760
    %2858 = vmatpush1.msra.mxu0 %v2857
    %2859 = vmatprep.subr.mxu0 0.0
    %v2860 = vand.u32 %v2817, 4294901760
    %2861 = vmatpush1.msra.mxu0 %v2860
    %2862 = vmatprep.subr.mxu0 0.0
    %v2863 = vand.u32 %v2816, 4294901760
    %2864 = vmatpush1.msra.mxu0 %v2863
    %2865 = vmatprep.subr.mxu0 0.0
    %v2866 = vand.u32 %v2815, 4294901760
    %2867 = vmatpush1.msra.mxu0 %v2866
    %2868 = vmatprep.subr.mxu0 0.0
    %v2869 = vand.u32 %v2814, 4294901760
    %2870 = vmatpush1.msra.mxu0 %v2869
    %2871 = vmatprep.subr.mxu0 0.0
    %v2872 = vand.u32 %v2813, 4294901760
    %2873 = vmatpush1.msra.mxu0 %v2872
    %2874 = vmatprep.subr.mxu0 0.0
    %v2875 = vand.u32 %v2812, 4294901760
    %2876 = vmatpush1.msra.mxu0 %v2875
    %2877 = vmatprep.subr.mxu0 0.0
    %2878 = vmatpush2.msra.mxu0 0.0
    %2879 = vmatprep.subr.mxu0 0.0
    %2880 = vmatpush2.msra.mxu0 0.0
    %2881 = vmatprep.subr.mxu0 0.0
    %2882 = vmatpush2.msra.mxu0 0.0
    %2883 = vmatprep.subr.mxu0 0.0
    %2884 = vmatpush2.msra.mxu0 0.0
    %2885 = vmatprep.subr.mxu0 0.0
    %2886 = vmatpush2.msra.mxu0 0.0
    %2887 = vmatprep.subr.mxu0 0.0
    %2888 = vmatpush2.msra.mxu0 0.0
    %2889 = vmatprep.subr.mxu0 0.0
    %2890 = vmatpush2.msra.mxu0 0.0
    %2891 = vmatprep.subr.mxu0 0.0
    %2892 = vmatpush2.msra.mxu0 0.0
    %2893 = vmatprep.subr.mxu0 0.0
    %2894 = vmatpush2.msra.mxu0 0.0
    %2895 = vmatprep.subr.mxu0 0.0
    %2896 = vmatpush2.msra.mxu0 0.0
    %2897 = vmatprep.subr.mxu0 0.0
    %2898 = vmatpush2.msra.mxu0 0.0
    %2899 = vmatprep.subr.mxu0 0.0
    %2900 = vmatpush2.msra.mxu0 0.0
    %2901 = vmatprep.subr.mxu0 0.0
    %2902 = vmatpush2.msra.mxu0 0.0
    %2903 = vmatprep.subr.mxu0 0.0
    %2904 = vmatpush2.msra.mxu0 0.0
    %2905 = vmatprep.subr.mxu0 0.0
    %2906 = vmatpush2.msra.mxu0 0.0
    %2907 = vmatprep.subr.mxu0 0.0
    %2908 = vmatpush2.msra.mxu0 0.0
    %2909 = vmatprep.mubr.f32.mxu0 0.0
    %v2910 = vand.u32 %v2810, 4294901760
    %v2911 = vsub.f32 %v2810, %v2910
    %v2912 = vand.u32 %v2911, 4294901760
    %v2913 = vsub.f32 %v2911, %v2912
    %v2914 = vand.u32 %v2913, 4294901760
    %2915 = vmatmul.mubr.f32.gmra.mxu0 %v2914
    %v2916 = vpop.f32.mrf.mxu0
    %v2917 = vadd.f32 %v2828, %v2916
    %v2918 = vpop.f32.mrf.mxu0
    %2919 = vdwg.mxu0
    %2920 = vmatprep.subr.mxu0 0.0
    %v2921 = vand.u32 %v2827, 4294901760
    %v2922 = vsub.f32 %v2827, %v2921
    %v2923 = vand.u32 %v2922, 4294901760
    %v2924 = vsub.f32 %v2922, %v2923
    %v2925 = vand.u32 %v2924, 4294901760
    %2926 = vmatpush1.msra.mxu0 %v2925
    %2927 = vmatprep.subr.mxu0 0.0
    %v2928 = vand.u32 %v2826, 4294901760
    %v2929 = vsub.f32 %v2826, %v2928
    %v2930 = vand.u32 %v2929, 4294901760
    %v2931 = vsub.f32 %v2929, %v2930
    %v2932 = vand.u32 %v2931, 4294901760
    %2933 = vmatpush1.msra.mxu0 %v2932
    %2934 = vmatprep.subr.mxu0 0.0
    %v2935 = vand.u32 %v2825, 4294901760
    %v2936 = vsub.f32 %v2825, %v2935
    %v2937 = vand.u32 %v2936, 4294901760
    %v2938 = vsub.f32 %v2936, %v2937
    %v2939 = vand.u32 %v2938, 4294901760
    %2940 = vmatpush1.msra.mxu0 %v2939
    %2941 = vmatprep.subr.mxu0 0.0
    %v2942 = vand.u32 %v2824, 4294901760
    %v2943 = vsub.f32 %v2824, %v2942
    %v2944 = vand.u32 %v2943, 4294901760
    %v2945 = vsub.f32 %v2943, %v2944
    %v2946 = vand.u32 %v2945, 4294901760
    %2947 = vmatpush1.msra.mxu0 %v2946
    %2948 = vmatprep.subr.mxu0 0.0
    %v2949 = vand.u32 %v2823, 4294901760
    %v2950 = vsub.f32 %v2823, %v2949
    %v2951 = vand.u32 %v2950, 4294901760
    %v2952 = vsub.f32 %v2950, %v2951
    %v2953 = vand.u32 %v2952, 4294901760
    %2954 = vmatpush1.msra.mxu0 %v2953
    %2955 = vmatprep.subr.mxu0 0.0
    %v2956 = vand.u32 %v2822, 4294901760
    %v2957 = vsub.f32 %v2822, %v2956
    %v2958 = vand.u32 %v2957, 4294901760
    %v2959 = vsub.f32 %v2957, %v2958
    %v2960 = vand.u32 %v2959, 4294901760
    %2961 = vmatpush1.msra.mxu0 %v2960
    %2962 = vmatprep.subr.mxu0 0.0
    %v2963 = vand.u32 %v2821, 4294901760
    %v2964 = vsub.f32 %v2821, %v2963
    %v2965 = vand.u32 %v2964, 4294901760
    %v2966 = vsub.f32 %v2964, %v2965
    %v2967 = vand.u32 %v2966, 4294901760
    %2968 = vmatpush1.msra.mxu0 %v2967
    %2969 = vmatprep.subr.mxu0 0.0
    %v2970 = vand.u32 %v2820, 4294901760
    %v2971 = vsub.f32 %v2820, %v2970
    %v2972 = vand.u32 %v2971, 4294901760
    %v2973 = vsub.f32 %v2971, %v2972
    %v2974 = vand.u32 %v2973, 4294901760
    %2975 = vmatpush1.msra.mxu0 %v2974
    %2976 = vmatprep.subr.mxu0 0.0
    %v2977 = vand.u32 %v2819, 4294901760
    %v2978 = vsub.f32 %v2819, %v2977
    %v2979 = vand.u32 %v2978, 4294901760
    %v2980 = vsub.f32 %v2978, %v2979
    %v2981 = vand.u32 %v2980, 4294901760
    %2982 = vmatpush1.msra.mxu0 %v2981
    %2983 = vmatprep.subr.mxu0 0.0
    %v2984 = vand.u32 %v2818, 4294901760
    %v2985 = vsub.f32 %v2818, %v2984
    %v2986 = vand.u32 %v2985, 4294901760
    %v2987 = vsub.f32 %v2985, %v2986
    %v2988 = vand.u32 %v2987, 4294901760
    %2989 = vmatpush1.msra.mxu0 %v2988
    %2990 = vmatprep.subr.mxu0 0.0
    %v2991 = vand.u32 %v2817, 4294901760
    %v2992 = vsub.f32 %v2817, %v2991
    %v2993 = vand.u32 %v2992, 4294901760
    %v2994 = vsub.f32 %v2992, %v2993
    %v2995 = vand.u32 %v2994, 4294901760
    %2996 = vmatpush1.msra.mxu0 %v2995
    %2997 = vmatprep.subr.mxu0 0.0
    %v2998 = vand.u32 %v2816, 4294901760
    %v2999 = vsub.f32 %v2816, %v2998
    %v3000 = vand.u32 %v2999, 4294901760
    %v3001 = vsub.f32 %v2999, %v3000
    %v3002 = vand.u32 %v3001, 4294901760
    %3003 = vmatpush1.msra.mxu0 %v3002
    %3004 = vmatprep.subr.mxu0 0.0
    %v3005 = vand.u32 %v2815, 4294901760
    %v3006 = vsub.f32 %v2815, %v3005
    %v3007 = vand.u32 %v3006, 4294901760
    %v3008 = vsub.f32 %v3006, %v3007
    %v3009 = vand.u32 %v3008, 4294901760
    %3010 = vmatpush1.msra.mxu0 %v3009
    %3011 = vmatprep.subr.mxu0 0.0
    %v3012 = vand.u32 %v2814, 4294901760
    %v3013 = vsub.f32 %v2814, %v3012
    %v3014 = vand.u32 %v3013, 4294901760
    %v3015 = vsub.f32 %v3013, %v3014
    %v3016 = vand.u32 %v3015, 4294901760
    %3017 = vmatpush1.msra.mxu0 %v3016
    %3018 = vmatprep.subr.mxu0 0.0
    %v3019 = vand.u32 %v2813, 4294901760
    %v3020 = vsub.f32 %v2813, %v3019
    %v3021 = vand.u32 %v3020, 4294901760
    %v3022 = vsub.f32 %v3020, %v3021
    %v3023 = vand.u32 %v3022, 4294901760
    %3024 = vmatpush1.msra.mxu0 %v3023
    %3025 = vmatprep.subr.mxu0 0.0
    %v3026 = vand.u32 %v2812, 4294901760
    %v3027 = vsub.f32 %v2812, %v3026
    %v3028 = vand.u32 %v3027, 4294901760
    %v3029 = vsub.f32 %v3027, %v3028
    %v3030 = vand.u32 %v3029, 4294901760
    %3031 = vmatpush1.msra.mxu0 %v3030
    %3032 = vmatprep.subr.mxu0 0.0
    %3033 = vmatpush2.msra.mxu0 0.0
    %3034 = vmatprep.subr.mxu0 0.0
    %3035 = vmatpush2.msra.mxu0 0.0
    %3036 = vmatprep.subr.mxu0 0.0
    %3037 = vmatpush2.msra.mxu0 0.0
    %3038 = vmatprep.subr.mxu0 0.0
    %3039 = vmatpush2.msra.mxu0 0.0
    %3040 = vmatprep.subr.mxu0 0.0
    %3041 = vmatpush2.msra.mxu0 0.0
    %3042 = vmatprep.subr.mxu0 0.0
    %3043 = vmatpush2.msra.mxu0 0.0
    %3044 = vmatprep.subr.mxu0 0.0
    %3045 = vmatpush2.msra.mxu0 0.0
    %3046 = vmatprep.subr.mxu0 0.0
    %3047 = vmatpush2.msra.mxu0 0.0
    %3048 = vmatprep.subr.mxu0 0.0
    %3049 = vmatpush2.msra.mxu0 0.0
    %3050 = vmatprep.subr.mxu0 0.0
    %3051 = vmatpush2.msra.mxu0 0.0
    %3052 = vmatprep.subr.mxu0 0.0
    %3053 = vmatpush2.msra.mxu0 0.0
    %3054 = vmatprep.subr.mxu0 0.0
    %3055 = vmatpush2.msra.mxu0 0.0
    %3056 = vmatprep.subr.mxu0 0.0
    %3057 = vmatpush2.msra.mxu0 0.0
    %3058 = vmatprep.subr.mxu0 0.0
    %3059 = vmatpush2.msra.mxu0 0.0
    %3060 = vmatprep.subr.mxu0 0.0
    %3061 = vmatpush2.msra.mxu0 0.0
    %3062 = vmatprep.subr.mxu0 0.0
    %3063 = vmatpush2.msra.mxu0 0.0
    %3064 = vmatprep.mubr.f32.mxu0 0.0
    %v3065 = vand.u32 %v2810, 4294901760
    %3066 = vmatmul.mubr.f32.gmra.mxu0 %v3065
    %v3067 = vpop.f32.mrf.mxu0
    %v3068 = vadd.f32 %v2917, %v3067
    %v3069 = vpop.f32.mrf.mxu0
    %3070 = vdwg.mxu0
    %3071 = vmatprep.subr.mxu0 0.0
    %v3072 = vand.u32 %v2827, 4294901760
    %v3073 = vsub.f32 %v2827, %v3072
    %3074 = vmatpush1.msra.mxu0 %v3073
    %3075 = vmatprep.subr.mxu0 0.0
    %v3076 = vand.u32 %v2826, 4294901760
    %v3077 = vsub.f32 %v2826, %v3076
    %3078 = vmatpush1.msra.mxu0 %v3077
    %3079 = vmatprep.subr.mxu0 0.0
    %v3080 = vand.u32 %v2825, 4294901760
    %v3081 = vsub.f32 %v2825, %v3080
    %3082 = vmatpush1.msra.mxu0 %v3081
    %3083 = vmatprep.subr.mxu0 0.0
    %v3084 = vand.u32 %v2824, 4294901760
    %v3085 = vsub.f32 %v2824, %v3084
    %3086 = vmatpush1.msra.mxu0 %v3085
    %3087 = vmatprep.subr.mxu0 0.0
    %v3088 = vand.u32 %v2823, 4294901760
    %v3089 = vsub.f32 %v2823, %v3088
    %3090 = vmatpush1.msra.mxu0 %v3089
    %3091 = vmatprep.subr.mxu0 0.0
    %v3092 = vand.u32 %v2822, 4294901760
    %v3093 = vsub.f32 %v2822, %v3092
    %3094 = vmatpush1.msra.mxu0 %v3093
    %3095 = vmatprep.subr.mxu0 0.0
    %v3096 = vand.u32 %v2821, 4294901760
    %v3097 = vsub.f32 %v2821, %v3096
    %3098 = vmatpush1.msra.mxu0 %v3097
    %3099 = vmatprep.subr.mxu0 0.0
    %v3100 = vand.u32 %v2820, 4294901760
    %v3101 = vsub.f32 %v2820, %v3100
    %3102 = vmatpush1.msra.mxu0 %v3101
    %3103 = vmatprep.subr.mxu0 0.0
    %v3104 = vand.u32 %v2819, 4294901760
    %v3105 = vsub.f32 %v2819, %v3104
    %3106 = vmatpush1.msra.mxu0 %v3105
    %3107 = vmatprep.subr.mxu0 0.0
    %v3108 = vand.u32 %v2818, 4294901760
    %v3109 = vsub.f32 %v2818, %v3108
    %3110 = vmatpush1.msra.mxu0 %v3109
    %3111 = vmatprep.subr.mxu0 0.0
    %v3112 = vand.u32 %v2817, 4294901760
    %v3113 = vsub.f32 %v2817, %v3112
    %3114 = vmatpush1.msra.mxu0 %v3113
    %3115 = vmatprep.subr.mxu0 0.0
    %v3116 = vand.u32 %v2816, 4294901760
    %v3117 = vsub.f32 %v2816, %v3116
    %3118 = vmatpush1.msra.mxu0 %v3117
    %3119 = vmatprep.subr.mxu0 0.0
    %v3120 = vand.u32 %v2815, 4294901760
    %v3121 = vsub.f32 %v2815, %v3120
    %3122 = vmatpush1.msra.mxu0 %v3121
    %3123 = vmatprep.subr.mxu0 0.0
    %v3124 = vand.u32 %v2814, 4294901760
    %v3125 = vsub.f32 %v2814, %v3124
    %3126 = vmatpush1.msra.mxu0 %v3125
    %3127 = vmatprep.subr.mxu0 0.0
    %v3128 = vand.u32 %v2813, 4294901760
    %v3129 = vsub.f32 %v2813, %v3128
    %3130 = vmatpush1.msra.mxu0 %v3129
    %3131 = vmatprep.subr.mxu0 0.0
    %v3132 = vand.u32 %v2812, 4294901760
    %v3133 = vsub.f32 %v2812, %v3132
    %3134 = vmatpush1.msra.mxu0 %v3133
    %3135 = vmatprep.subr.mxu0 0.0
    %3136 = vmatpush2.msra.mxu0 0.0
    %3137 = vmatprep.subr.mxu0 0.0
    %3138 = vmatpush2.msra.mxu0 0.0
    %3139 = vmatprep.subr.mxu0 0.0
    %3140 = vmatpush2.msra.mxu0 0.0
    %3141 = vmatprep.subr.mxu0 0.0
    %3142 = vmatpush2.msra.mxu0 0.0
    %3143 = vmatprep.subr.mxu0 0.0
    %3144 = vmatpush2.msra.mxu0 0.0
    %3145 = vmatprep.subr.mxu0 0.0
    %3146 = vmatpush2.msra.mxu0 0.0
    %3147 = vmatprep.subr.mxu0 0.0
    %3148 = vmatpush2.msra.mxu0 0.0
    %3149 = vmatprep.subr.mxu0 0.0
    %3150 = vmatpush2.msra.mxu0 0.0
    %3151 = vmatprep.subr.mxu0 0.0
    %3152 = vmatpush2.msra.mxu0 0.0
    %3153 = vmatprep.subr.mxu0 0.0
    %3154 = vmatpush2.msra.mxu0 0.0
    %3155 = vmatprep.subr.mxu0 0.0
    %3156 = vmatpush2.msra.mxu0 0.0
    %3157 = vmatprep.subr.mxu0 0.0
    %3158 = vmatpush2.msra.mxu0 0.0
    %3159 = vmatprep.subr.mxu0 0.0
    %3160 = vmatpush2.msra.mxu0 0.0
    %3161 = vmatprep.subr.mxu0 0.0
    %3162 = vmatpush2.msra.mxu0 0.0
    %3163 = vmatprep.subr.mxu0 0.0
    %3164 = vmatpush2.msra.mxu0 0.0
    %3165 = vmatprep.subr.mxu0 0.0
    %3166 = vmatpush2.msra.mxu0 0.0
    %3167 = vmatprep.mubr.f32.mxu0 0.0
    %v3168 = vand.u32 %v2810, 4294901760
    %v3169 = vsub.f32 %v2810, %v3168
    %3170 = vmatmul.mubr.f32.gmra.mxu0 %v3169
    %v3171 = vpop.f32.mrf.mxu0
    %v3172 = vadd.f32 %v3068, %v3171
    %v3173 = vpop.f32.mrf.mxu0
    %3174 = vdwg.mxu0
    %3175 = vmatprep.subr.mxu0 0.0
    %v3176 = vand.u32 %v2827, 4294901760
    %3177 = vmatpush1.msra.mxu0 %v3176
    %3178 = vmatprep.subr.mxu0 0.0
    %v3179 = vand.u32 %v2826, 4294901760
    %3180 = vmatpush1.msra.mxu0 %v3179
    %3181 = vmatprep.subr.mxu0 0.0
    %v3182 = vand.u32 %v2825, 4294901760
    %3183 = vmatpush1.msra.mxu0 %v3182
    %3184 = vmatprep.subr.mxu0 0.0
    %v3185 = vand.u32 %v2824, 4294901760
    %3186 = vmatpush1.msra.mxu0 %v3185
    %3187 = vmatprep.subr.mxu0 0.0
    %v3188 = vand.u32 %v2823, 4294901760
    %3189 = vmatpush1.msra.mxu0 %v3188
    %3190 = vmatprep.subr.mxu0 0.0
    %v3191 = vand.u32 %v2822, 4294901760
    %3192 = vmatpush1.msra.mxu0 %v3191
    %3193 = vmatprep.subr.mxu0 0.0
    %v3194 = vand.u32 %v2821, 4294901760
    %3195 = vmatpush1.msra.mxu0 %v3194
    %3196 = vmatprep.subr.mxu0 0.0
    %v3197 = vand.u32 %v2820, 4294901760
    %3198 = vmatpush1.msra.mxu0 %v3197
    %3199 = vmatprep.subr.mxu0 0.0
    %v3200 = vand.u32 %v2819, 4294901760
    %3201 = vmatpush1.msra.mxu0 %v3200
    %3202 = vmatprep.subr.mxu0 0.0
    %v3203 = vand.u32 %v2818, 4294901760
    %3204 = vmatpush1.msra.mxu0 %v3203
    %3205 = vmatprep.subr.mxu0 0.0
    %v3206 = vand.u32 %v2817, 4294901760
    %3207 = vmatpush1.msra.mxu0 %v3206
    %3208 = vmatprep.subr.mxu0 0.0
    %v3209 = vand.u32 %v2816, 4294901760
    %3210 = vmatpush1.msra.mxu0 %v3209
    %3211 = vmatprep.subr.mxu0 0.0
    %v3212 = vand.u32 %v2815, 4294901760
    %3213 = vmatpush1.msra.mxu0 %v3212
    %3214 = vmatprep.subr.mxu0 0.0
    %v3215 = vand.u32 %v2814, 4294901760
    %3216 = vmatpush1.msra.mxu0 %v3215
    %3217 = vmatprep.subr.mxu0 0.0
    %v3218 = vand.u32 %v2813, 4294901760
    %3219 = vmatpush1.msra.mxu0 %v3218
    %3220 = vmatprep.subr.mxu0 0.0
    %v3221 = vand.u32 %v2812, 4294901760
    %3222 = vmatpush1.msra.mxu0 %v3221
    %3223 = vmatprep.subr.mxu0 0.0
    %3224 = vmatpush2.msra.mxu0 0.0
    %3225 = vmatprep.subr.mxu0 0.0
    %3226 = vmatpush2.msra.mxu0 0.0
    %3227 = vmatprep.subr.mxu0 0.0
    %3228 = vmatpush2.msra.mxu0 0.0
    %3229 = vmatprep.subr.mxu0 0.0
    %3230 = vmatpush2.msra.mxu0 0.0
    %3231 = vmatprep.subr.mxu0 0.0
    %3232 = vmatpush2.msra.mxu0 0.0
    %3233 = vmatprep.subr.mxu0 0.0
    %3234 = vmatpush2.msra.mxu0 0.0
    %3235 = vmatprep.subr.mxu0 0.0
    %3236 = vmatpush2.msra.mxu0 0.0
    %3237 = vmatprep.subr.mxu0 0.0
    %3238 = vmatpush2.msra.mxu0 0.0
    %3239 = vmatprep.subr.mxu0 0.0
    %3240 = vmatpush2.msra.mxu0 0.0
    %3241 = vmatprep.subr.mxu0 0.0
    %3242 = vmatpush2.msra.mxu0 0.0
    %3243 = vmatprep.subr.mxu0 0.0
    %3244 = vmatpush2.msra.mxu0 0.0
    %3245 = vmatprep.subr.mxu0 0.0
    %3246 = vmatpush2.msra.mxu0 0.0
    %3247 = vmatprep.subr.mxu0 0.0
    %3248 = vmatpush2.msra.mxu0 0.0
    %3249 = vmatprep.subr.mxu0 0.0
    %3250 = vmatpush2.msra.mxu0 0.0
    %3251 = vmatprep.subr.mxu0 0.0
    %3252 = vmatpush2.msra.mxu0 0.0
    %3253 = vmatprep.subr.mxu0 0.0
    %3254 = vmatpush2.msra.mxu0 0.0
    %3255 = vmatprep.mubr.f32.mxu0 0.0
    %v3256 = vand.u32 %v2810, 4294901760
    %v3257 = vsub.f32 %v2810, %v3256
    %v3258 = vand.u32 %v3257, 4294901760
    %3259 = vmatmul.mubr.f32.gmra.mxu0 %v3258
    %v3260 = vpop.f32.mrf.mxu0
    %v3261 = vadd.f32 %v3172, %v3260
    %v3262 = vpop.f32.mrf.mxu0
    %3263 = vdwg.mxu0
    %3264 = vmatprep.subr.mxu0 0.0
    %v3265 = vand.u32 %v2827, 4294901760
    %v3266 = vsub.f32 %v2827, %v3265
    %v3267 = vand.u32 %v3266, 4294901760
    %3268 = vmatpush1.msra.mxu0 %v3267
    %3269 = vmatprep.subr.mxu0 0.0
    %v3270 = vand.u32 %v2826, 4294901760
    %v3271 = vsub.f32 %v2826, %v3270
    %v3272 = vand.u32 %v3271, 4294901760
    %3273 = vmatpush1.msra.mxu0 %v3272
    %3274 = vmatprep.subr.mxu0 0.0
    %v3275 = vand.u32 %v2825, 4294901760
    %v3276 = vsub.f32 %v2825, %v3275
    %v3277 = vand.u32 %v3276, 4294901760
    %3278 = vmatpush1.msra.mxu0 %v3277
    %3279 = vmatprep.subr.mxu0 0.0
    %v3280 = vand.u32 %v2824, 4294901760
    %v3281 = vsub.f32 %v2824, %v3280
    %v3282 = vand.u32 %v3281, 4294901760
    %3283 = vmatpush1.msra.mxu0 %v3282
    %3284 = vmatprep.subr.mxu0 0.0
    %v3285 = vand.u32 %v2823, 4294901760
    %v3286 = vsub.f32 %v2823, %v3285
    %v3287 = vand.u32 %v3286, 4294901760
    %3288 = vmatpush1.msra.mxu0 %v3287
    %3289 = vmatprep.subr.mxu0 0.0
    %v3290 = vand.u32 %v2822, 4294901760
    %v3291 = vsub.f32 %v2822, %v3290
    %v3292 = vand.u32 %v3291, 4294901760
    %3293 = vmatpush1.msra.mxu0 %v3292
    %3294 = vmatprep.subr.mxu0 0.0
    %v3295 = vand.u32 %v2821, 4294901760
    %v3296 = vsub.f32 %v2821, %v3295
    %v3297 = vand.u32 %v3296, 4294901760
    %3298 = vmatpush1.msra.mxu0 %v3297
    %3299 = vmatprep.subr.mxu0 0.0
    %v3300 = vand.u32 %v2820, 4294901760
    %v3301 = vsub.f32 %v2820, %v3300
    %v3302 = vand.u32 %v3301, 4294901760
    %3303 = vmatpush1.msra.mxu0 %v3302
    %3304 = vmatprep.subr.mxu0 0.0
    %v3305 = vand.u32 %v2819, 4294901760
    %v3306 = vsub.f32 %v2819, %v3305
    %v3307 = vand.u32 %v3306, 4294901760
    %3308 = vmatpush1.msra.mxu0 %v3307
    %3309 = vmatprep.subr.mxu0 0.0
    %v3310 = vand.u32 %v2818, 4294901760
    %v3311 = vsub.f32 %v2818, %v3310
    %v3312 = vand.u32 %v3311, 4294901760
    %3313 = vmatpush1.msra.mxu0 %v3312
    %3314 = vmatprep.subr.mxu0 0.0
    %v3315 = vand.u32 %v2817, 4294901760
    %v3316 = vsub.f32 %v2817, %v3315
    %v3317 = vand.u32 %v3316, 4294901760
    %3318 = vmatpush1.msra.mxu0 %v3317
    %3319 = vmatprep.subr.mxu0 0.0
    %v3320 = vand.u32 %v2816, 4294901760
    %v3321 = vsub.f32 %v2816, %v3320
    %v3322 = vand.u32 %v3321, 4294901760
    %3323 = vmatpush1.msra.mxu0 %v3322
    %3324 = vmatprep.subr.mxu0 0.0
    %v3325 = vand.u32 %v2815, 4294901760
    %v3326 = vsub.f32 %v2815, %v3325
    %v3327 = vand.u32 %v3326, 4294901760
    %3328 = vmatpush1.msra.mxu0 %v3327
    %3329 = vmatprep.subr.mxu0 0.0
    %v3330 = vand.u32 %v2814, 4294901760
    %v3331 = vsub.f32 %v2814, %v3330
    %v3332 = vand.u32 %v3331, 4294901760
    %3333 = vmatpush1.msra.mxu0 %v3332
    %3334 = vmatprep.subr.mxu0 0.0
    %v3335 = vand.u32 %v2813, 4294901760
    %v3336 = vsub.f32 %v2813, %v3335
    %v3337 = vand.u32 %v3336, 4294901760
    %3338 = vmatpush1.msra.mxu0 %v3337
    %3339 = vmatprep.subr.mxu0 0.0
    %v3340 = vand.u32 %v2812, 4294901760
    %v3341 = vsub.f32 %v2812, %v3340
    %v3342 = vand.u32 %v3341, 4294901760
    %3343 = vmatpush1.msra.mxu0 %v3342
    %3344 = vmatprep.subr.mxu0 0.0
    %3345 = vmatpush2.msra.mxu0 0.0
    %3346 = vmatprep.subr.mxu0 0.0
    %3347 = vmatpush2.msra.mxu0 0.0
    %3348 = vmatprep.subr.mxu0 0.0
    %3349 = vmatpush2.msra.mxu0 0.0
    %3350 = vmatprep.subr.mxu0 0.0
    %3351 = vmatpush2.msra.mxu0 0.0
    %3352 = vmatprep.subr.mxu0 0.0
    %3353 = vmatpush2.msra.mxu0 0.0
    %3354 = vmatprep.subr.mxu0 0.0
    %3355 = vmatpush2.msra.mxu0 0.0
    %3356 = vmatprep.subr.mxu0 0.0
    %3357 = vmatpush2.msra.mxu0 0.0
    %3358 = vmatprep.subr.mxu0 0.0
    %3359 = vmatpush2.msra.mxu0 0.0
    %3360 = vmatprep.subr.mxu0 0.0
    %3361 = vmatpush2.msra.mxu0 0.0
    %3362 = vmatprep.subr.mxu0 0.0
    %3363 = vmatpush2.msra.mxu0 0.0
    %3364 = vmatprep.subr.mxu0 0.0
    %3365 = vmatpush2.msra.mxu0 0.0
    %3366 = vmatprep.subr.mxu0 0.0
    %3367 = vmatpush2.msra.mxu0 0.0
    %3368 = vmatprep.subr.mxu0 0.0
    %3369 = vmatpush2.msra.mxu0 0.0
    %3370 = vmatprep.subr.mxu0 0.0
    %3371 = vmatpush2.msra.mxu0 0.0
    %3372 = vmatprep.subr.mxu0 0.0
    %3373 = vmatpush2.msra.mxu0 0.0
    %3374 = vmatprep.subr.mxu0 0.0
    %3375 = vmatpush2.msra.mxu0 0.0
    %3376 = vmatprep.mubr.f32.mxu0 0.0
    %v3377 = vand.u32 %v2810, 4294901760
    %3378 = vmatmul.mubr.f32.gmra.mxu0 %v3377
    %v3379 = vpop.f32.mrf.mxu0
    %v3380 = vadd.f32 %v3261, %v3379
    %v3381 = vpop.f32.mrf.mxu0
    %3382 = vdwg.mxu0
    %3383 = vmatprep.subr.mxu0 0.0
    %v3384 = vand.u32 %v2827, 4294901760
    %3385 = vmatpush1.msra.mxu0 %v3384
    %3386 = vmatprep.subr.mxu0 0.0
    %v3387 = vand.u32 %v2826, 4294901760
    %3388 = vmatpush1.msra.mxu0 %v3387
    %3389 = vmatprep.subr.mxu0 0.0
    %v3390 = vand.u32 %v2825, 4294901760
    %3391 = vmatpush1.msra.mxu0 %v3390
    %3392 = vmatprep.subr.mxu0 0.0
    %v3393 = vand.u32 %v2824, 4294901760
    %3394 = vmatpush1.msra.mxu0 %v3393
    %3395 = vmatprep.subr.mxu0 0.0
    %v3396 = vand.u32 %v2823, 4294901760
    %3397 = vmatpush1.msra.mxu0 %v3396
    %3398 = vmatprep.subr.mxu0 0.0
    %v3399 = vand.u32 %v2822, 4294901760
    %3400 = vmatpush1.msra.mxu0 %v3399
    %3401 = vmatprep.subr.mxu0 0.0
    %v3402 = vand.u32 %v2821, 4294901760
    %3403 = vmatpush1.msra.mxu0 %v3402
    %3404 = vmatprep.subr.mxu0 0.0
    %v3405 = vand.u32 %v2820, 4294901760
    %3406 = vmatpush1.msra.mxu0 %v3405
    %3407 = vmatprep.subr.mxu0 0.0
    %v3408 = vand.u32 %v2819, 4294901760
    %3409 = vmatpush1.msra.mxu0 %v3408
    %3410 = vmatprep.subr.mxu0 0.0
    %v3411 = vand.u32 %v2818, 4294901760
    %3412 = vmatpush1.msra.mxu0 %v3411
    %3413 = vmatprep.subr.mxu0 0.0
    %v3414 = vand.u32 %v2817, 4294901760
    %3415 = vmatpush1.msra.mxu0 %v3414
    %3416 = vmatprep.subr.mxu0 0.0
    %v3417 = vand.u32 %v2816, 4294901760
    %3418 = vmatpush1.msra.mxu0 %v3417
    %3419 = vmatprep.subr.mxu0 0.0
    %v3420 = vand.u32 %v2815, 4294901760
    %3421 = vmatpush1.msra.mxu0 %v3420
    %3422 = vmatprep.subr.mxu0 0.0
    %v3423 = vand.u32 %v2814, 4294901760
    %3424 = vmatpush1.msra.mxu0 %v3423
    %3425 = vmatprep.subr.mxu0 0.0
    %v3426 = vand.u32 %v2813, 4294901760
    %3427 = vmatpush1.msra.mxu0 %v3426
    %3428 = vmatprep.subr.mxu0 0.0
    %v3429 = vand.u32 %v2812, 4294901760
    %3430 = vmatpush1.msra.mxu0 %v3429
    %3431 = vmatprep.subr.mxu0 0.0
    %3432 = vmatpush2.msra.mxu0 0.0
    %3433 = vmatprep.subr.mxu0 0.0
    %3434 = vmatpush2.msra.mxu0 0.0
    %3435 = vmatprep.subr.mxu0 0.0
    %3436 = vmatpush2.msra.mxu0 0.0
    %3437 = vmatprep.subr.mxu0 0.0
    %3438 = vmatpush2.msra.mxu0 0.0
    %3439 = vmatprep.subr.mxu0 0.0
    %3440 = vmatpush2.msra.mxu0 0.0
    %3441 = vmatprep.subr.mxu0 0.0
    %3442 = vmatpush2.msra.mxu0 0.0
    %3443 = vmatprep.subr.mxu0 0.0
    %3444 = vmatpush2.msra.mxu0 0.0
    %3445 = vmatprep.subr.mxu0 0.0
    %3446 = vmatpush2.msra.mxu0 0.0
    %3447 = vmatprep.subr.mxu0 0.0
    %3448 = vmatpush2.msra.mxu0 0.0
    %3449 = vmatprep.subr.mxu0 0.0
    %3450 = vmatpush2.msra.mxu0 0.0
    %3451 = vmatprep.subr.mxu0 0.0
    %3452 = vmatpush2.msra.mxu0 0.0
    %3453 = vmatprep.subr.mxu0 0.0
    %3454 = vmatpush2.msra.mxu0 0.0
    %3455 = vmatprep.subr.mxu0 0.0
    %3456 = vmatpush2.msra.mxu0 0.0
    %3457 = vmatprep.subr.mxu0 0.0
    %3458 = vmatpush2.msra.mxu0 0.0
    %3459 = vmatprep.subr.mxu0 0.0
    %3460 = vmatpush2.msra.mxu0 0.0
    %3461 = vmatprep.subr.mxu0 0.0
    %3462 = vmatpush2.msra.mxu0 0.0
    %3463 = vmatprep.mubr.f32.mxu0 0.0
    %v3464 = vand.u32 %v2810, 4294901760
    %3465 = vmatmul.mubr.f32.gmra.mxu0 %v3464
    %v3466 = vpop.f32.mrf.mxu0
    %v3467 = vadd.f32 %v3380, %v3466
    %v3468 = vpop.f32.mrf.mxu0
    %3469 = vdwg.mxu0
    %3470 = vst [vmem:[#allocation8] sm:$0x1] %v3467
    // Predicated region
    $region42: #{tpu_custom_call.1} parent=1 // pred_check
      _
    $region43: #{tpu_custom_call.1} parent=1 // pred_check_branch
      %3472 = sbr.rel (0) target = $region45
    $region44: #{tpu_custom_call.1} parent=1 // pred_region
      %s3474 = ssub.s32 16, 16
      %3475 = vsyncadd [#allocation4], %s3474
      %s3477 = sshll.u32 [#allocation8], 4
      %s3478 = int_to_ptr.vmem [resolvable:$true] %s3477
      %3480 = dma.vmem_to_hbm [thread:$0]  %s3478, 16, %s6, [#allocation4]
    $region45: #{tpu_custom_call.1} parent=1 // pred_fallthru
      _
    // Predicated region
    $region46: #{tpu_custom_call.1} parent=1 // pred_check
      _
    $region47: #{tpu_custom_call.1} parent=1 // pred_check_branch
      %3482 = sbr.rel (0) target = $region49
    $region48: #{tpu_custom_call.1} parent=1 // pred_region
      %s3484 = ssub.s32 16, 16
      %3485 = vsyncadd [#allocation10], %s3484
      %s3487 = sshll.u32 [#allocation9], 4
      %s3488 = int_to_ptr.vmem [resolvable:$true] %s3487
      %3490 = dma.vmem_to_hbm [thread:$0]  %s3488, 16, %s7, [#allocation10]
    $region49: #{tpu_custom_call.1} parent=1 // pred_fallthru
      _
    // Predicated region
    $region50: #{tpu_custom_call.1} parent=1 // pred_check
      _
    $region51: #{tpu_custom_call.1} parent=1 // pred_check_branch
      %3492 = sbr.rel (0) target = $region53
    $region52: #{tpu_custom_call.1} parent=1 // pred_region
      %3493 = dma.done [#allocation4], 16
    $region53: #{tpu_custom_call.1} parent=1 // pred_fallthru
      _
    // Predicated region
    $region54: #{tpu_custom_call.1} parent=1 // pred_check
      _
    $region55: #{tpu_custom_call.1} parent=1 // pred_check_branch
      %3495 = sbr.rel (0) target = $region57
    $region56: #{tpu_custom_call.1} parent=1 // pred_region
      %3496 = dma.done [#allocation10], 16
    $region57: #{tpu_custom_call.1} parent=1 // pred_fallthru
      _
    %3497 = vsyncpa [#allocation3], 1
    %3498 = vsyncpa [#allocation6], 1
    %3499 = vsyncpa [#allocation4], 1
    %3500 = vsyncpa [#allocation10], 1

</llo_original>
